<compile_context>
chip_gen: v5e
topology: v5e:2x2
jax: 0.10.0
libtpu: 0.0.40
codegen_flags: <defaults>
</compile_context>

<pallas_src>
import numpy as np
import jax
import jax.numpy as jnp
from jax import lax
from jax.experimental import pallas as pl
from jax.experimental.pallas import tpu as pltpu

# ---- Module constants (match the PyTorch DAN_ACT defaults) ------------------
EMBEDDING_SIZE = 300       # true embedding dim
LAYER1_UNITS = 100         # first Linear width
NUM_CLASSES = 4            # act_class_num

# ---- Lane-aligned padded sizes used inside the kernel ------------------------
E_PAD = 384                # 3 * 128
H1_PAD = 128
C_PAD = 128
# Zero-padded embedding lanes contribute sigmoid(0)=0.5 each to the att sum.
PAD_SIGMOID_SUM = 0.5 * (E_PAD - EMBEDDING_SIZE)

# ---- Small test shapes -------------------------------------------------------
VOCAB = 1000
BATCH = 16
SEQ = 16
B_BLK = 8                  # samples per grid step (keep multiple of 8 sublanes)


def dan_act_kernel(ids_ref,                        # SMEM (B, T) int32 (prefetch)
                   emb_hbm,                        # HBM  (VOCAB, E_PAD) f32
                   w1_ref, b1_ref, w2_ref, b2_ref, # VMEM, resident (const idx map)
                   out_ref, rewards_ref,           # VMEM output blocks
                   embuf, sem, dense_acc):         # scratch
    Bblk = dense_acc.shape[0]
    T = embuf.shape[1]
    i = pl.program_id(0)
    base = i * Bblk

    # ---- Gather-DMA helpers (double-buffered per sample) ---------------------
    def fetch(sample, slot):
        # Pull the T embedding rows for `sample` into embuf[slot] (T row DMAs).
        for t in range(T):
            tok = ids_ref[sample, t]
            pltpu.make_async_copy(emb_hbm.at[tok], embuf.at[slot, t],
                                  sem.at[slot, t]).start()

    def wait(slot):
        for t in range(T):
            pltpu.make_async_copy(emb_hbm.at[0], embuf.at[slot, t],
                                  sem.at[slot, t]).wait()

    fetch(base, 0)   # prime the pipeline (first sample of this block)

    inv_T = 1.0 / T
    inv_E = 1.0 / EMBEDDING_SIZE

    # ---- Per-sample compute: live set is only (T, E_PAD) ---------------------
    @pl.loop(0, Bblk)
    def _(b):
        slot = b % 2
        wait(slot)

        @pl.when(b + 1 < Bblk)
        def _():
            fetch(base + b + 1, 1 - slot)        # prefetch next sample

        emb = embuf[slot]                         # (T, E_PAD) f32
        att = jax.nn.sigmoid(emb)                 # EUP sigmoid

        # rewards[t] = mean_e sigmoid(emb[t, :E]); closed-form correction for
        # the zero-padded lanes (sigmoid(0) = 0.5) instead of iota+where.
        rewards_ref[b, :] = (jnp.sum(att, axis=-1) - PAD_SIGMOID_SUM) * inv_E

        # dense[b] = mean_t emb*att; padded lanes are exactly 0 in emb.
        dense_acc[b, :] = jnp.sum(emb * att, axis=0) * inv_T

    # ---- MLP head for the whole block (dropout == identity in eval mode) -----
    dense = dense_acc[...]                                              # (Bblk, E_PAD)
    h1 = jnp.dot(dense, w1_ref[...],
                 preferred_element_type=jnp.float32) + b1_ref[...]      # (Bblk, H1_PAD)
    logits = jnp.dot(h1, w2_ref[...],
                     preferred_element_type=jnp.float32) + b2_ref[...]  # (Bblk, C_PAD)

    # Softmax over the 4 real classes only (padded class lanes -> -inf).
    cls = lax.broadcasted_iota(jnp.int32, logits.shape, 1)
    logits = jnp.where(cls < NUM_CLASSES, logits, -1e30)
    m = jnp.max(logits, axis=-1, keepdims=True)
    e = jnp.exp(logits - m)
    out_ref[...] = e / jnp.sum(e, axis=-1, keepdims=True)


def prepare_kernel_params(params):
    """One-time layout prep: pad the embedding table, pre-transpose and
    zero-pad the Linear weights/biases so the kernel sees lane-aligned slabs.
    Done once at init, NOT per forward call."""
    emb_p = jnp.zeros((params["emb"].shape[0], E_PAD), jnp.float32)
    emb_p = emb_p.at[:, :EMBEDDING_SIZE].set(params["emb"])

    w1_p = jnp.zeros((E_PAD, H1_PAD), jnp.float32)
    w1_p = w1_p.at[:EMBEDDING_SIZE, :LAYER1_UNITS].set(params["w1"].T)
    b1_p = jnp.zeros((1, H1_PAD), jnp.float32)
    b1_p = b1_p.at[0, :LAYER1_UNITS].set(params["b1"])

    w2_p = jnp.zeros((H1_PAD, C_PAD), jnp.float32)
    w2_p = w2_p.at[:LAYER1_UNITS, :NUM_CLASSES].set(params["w2"].T)
    b2_p = jnp.zeros((1, C_PAD), jnp.float32)
    b2_p = b2_p.at[0, :NUM_CLASSES].set(params["b2"])

    return {"emb": emb_p, "w1": w1_p, "b1": b1_p, "w2": w2_p, "b2": b2_p}


def dan_act_forward(x_batch, kparams, *, b_blk=B_BLK):
    """Mirrors DAN_ACT.forward (eval mode); returns (out (B,4), rewards (B,T))."""
    B, T = x_batch.shape
    assert B % b_blk == 0, "batch must be a multiple of the block size"
    grid = (B // b_blk,)

    def const_spec(shape):
        # Weights: same block every step -> DMA'd once, stay resident in VMEM.
        return pl.BlockSpec(shape, lambda i, ids: (0, 0))

    out_p, rewards = pl.pallas_call(
        dan_act_kernel,
        out_shape=(jax.ShapeDtypeStruct((B, C_PAD), jnp.float32),
                   jax.ShapeDtypeStruct((B, T), jnp.float32)),
        grid_spec=pltpu.PrefetchScalarGridSpec(
            num_scalar_prefetch=1,                     # token ids -> SMEM
            grid=grid,
            in_specs=[
                pl.BlockSpec(memory_space=pl.ANY),     # embedding table in HBM
                const_spec((E_PAD, H1_PAD)),           # w1
                const_spec((1, H1_PAD)),               # b1
                const_spec((H1_PAD, C_PAD)),           # w2
                const_spec((1, C_PAD)),                # b2
            ],
            out_specs=(pl.BlockSpec((b_blk, C_PAD), lambda i, ids: (i, 0)),
                       pl.BlockSpec((b_blk, T), lambda i, ids: (i, 0))),
            scratch_shapes=[
                pltpu.VMEM((2, T, E_PAD), jnp.float32),     # gather double buffer
                pltpu.SemaphoreType.DMA((2, T)),            # one sem per row DMA
                pltpu.VMEM((b_blk, E_PAD), jnp.float32),    # dense accumulator
            ]),
        compiler_params=pltpu.CompilerParams(
            dimension_semantics=("parallel",),      # v7x: shard blocks over 2 TCs
            vmem_limit_bytes=32 * 1024 * 1024),     # explicit, safe on v5e/v6e/v7x
    )(x_batch.astype(jnp.int32), kparams["emb"], kparams["w1"], kparams["b1"],
      kparams["w2"], kparams["b2"])

    return out_p[:, :NUM_CLASSES], rewards


def dan_act_reference(x_batch, params):
    """Pure-JAX reference of the PyTorch forward (eval mode) for checking."""
    embed = jnp.take(params["emb"], x_batch, axis=0)       # (B, T, E)
    attention = jax.nn.sigmoid(embed)
    rewards = jnp.mean(attention, axis=-1)                 # (B, T)
    dense = jnp.mean(embed * attention, axis=1)            # (B, E)
    h = dense @ params["w1"].T + params["b1"]
    h = h @ params["w2"].T + params["b2"]
    out = jax.nn.softmax(h, axis=1)
    return out, rewards


def init_params(key):
    ks = jax.random.split(key, 5)
    k1 = 1.0 / np.sqrt(EMBEDDING_SIZE)
    k2 = 1.0 / np.sqrt(LAYER1_UNITS)
    return {
        "emb": jax.random.normal(ks[0], (VOCAB, EMBEDDING_SIZE), jnp.float32) * 0.1,
        # PyTorch Linear layout: weight (out, in), bias (out,)
        "w1": jax.random.uniform(ks[1], (LAYER1_UNITS, EMBEDDING_SIZE),
                                 jnp.float32, -k1, k1),
        "b1": jax.random.uniform(ks[2], (LAYER1_UNITS,), jnp.float32, -k1, k1),
        "w2": jax.random.uniform(ks[3], (NUM_CLASSES, LAYER1_UNITS),
                                 jnp.float32, -k2, k2),
        "b2": jax.random.uniform(ks[4], (NUM_CLASSES,), jnp.float32, -k2, k2),
    }


if __name__ == "__main__":
    key = jax.random.PRNGKey(0)
    kp, kx = jax.random.split(key)
    params = init_params(kp)
    kparams = prepare_kernel_params(params)   # one-time layout prep

    x_batch = jax.random.randint(kx, (BATCH, SEQ), 0, VOCAB, dtype=jnp.int32)

    out, rewards = dan_act_forward(x_batch, kparams)
    out = jax.block_until_ready(out)
    rewards = jax.block_until_ready(rewards)

    out_ref, rewards_ref = dan_act_reference(x_batch, params)
    np.testing.assert_allclose(np.asarray(out), np.asarray(out_ref),
                               atol=1e-5, rtol=1e-5)
    np.testing.assert_allclose(np.asarray(rewards), np.asarray(rewards_ref),
                               atol=1e-5, rtol=1e-5)

    print("KERNEL_OK")
</pallas_src>

<mosaic_0001>
module attributes {stable_mosaic.version = 11 : i64} {
  func.func @dan_act_kernel(%arg0: i32, %arg1: memref<16x16xi32, #tpu.memory_space<smem>>, %arg2: memref<1000x384xf32, #tpu.memory_space<any>>, %arg3: memref<384x128xf32, #tpu.memory_space<vmem>>, %arg4: memref<1x128xf32, #tpu.memory_space<vmem>>, %arg5: memref<128x128xf32, #tpu.memory_space<vmem>>, %arg6: memref<1x128xf32, #tpu.memory_space<vmem>>, %arg7: memref<8x128xf32, #tpu.memory_space<vmem>>, %arg8: memref<8x16xf32, #tpu.memory_space<vmem>>, %arg9: memref<2x16x384xf32, #tpu.memory_space<vmem>>, %arg10: memref<2x16x!tpu.dma_semaphore, #tpu.memory_space<semaphore_mem>>, %arg11: memref<8x384xf32, #tpu.memory_space<vmem>>) attributes {dimension_semantics = [#tpu.dimension_semantics<parallel>], iteration_bounds = array<i64: 2>, scalar_prefetch = 1 : i64, scratch_operands = 3 : i64, tpu.core_type = #tpu.core_type<tc>, window_params = [{}, {pipeline_mode = #tpu.pipeline_mode<synchronous>, transform_indices = @transform_1, window_bounds = array<i64: 384, 128>}, {pipeline_mode = #tpu.pipeline_mode<synchronous>, transform_indices = @transform_2, window_bounds = array<i64: 1, 128>}, {pipeline_mode = #tpu.pipeline_mode<synchronous>, transform_indices = @transform_3, window_bounds = array<i64: 128, 128>}, {pipeline_mode = #tpu.pipeline_mode<synchronous>, transform_indices = @transform_4, window_bounds = array<i64: 1, 128>}, {transform_indices = @transform_5, window_bounds = array<i64: 8, 128>}, {transform_indices = @transform_6, window_bounds = array<i64: 8, 16>}]} {
    %c8_i32 = arith.constant 8 : i32
    %0 = arith.muli %arg0, %c8_i32 : i32
    %1 = arith.index_cast %0 : i32 to index
    %c0 = arith.constant 0 : index
    %2 = memref.load %arg1[%1, %c0] : memref<16x16xi32, #tpu.memory_space<smem>>
    %c0_i32 = arith.constant 0 : i32
    %c0_i32_0 = arith.constant 0 : i32
    %c0_i32_1 = arith.constant 0 : i32
    %c0_i32_2 = arith.constant 0 : i32
    %c0_i32_3 = arith.constant 0 : i32
    %3 = tpu.memref_slice %arg2[%2, %c0_i32_3] : memref<1000x384xf32, #tpu.memory_space<any>> -> memref<1x384xf32, #tpu.memory_space<any>>
    %4 = tpu.memref_squeeze %3 : memref<1x384xf32, #tpu.memory_space<any>> -> memref<384xf32, #tpu.memory_space<any>>
    %c0_i32_4 = arith.constant 0 : i32
    %5 = tpu.memref_slice %arg9[%c0_i32, %c0_i32_0, %c0_i32_4] : memref<2x16x384xf32, #tpu.memory_space<vmem>> -> memref<1x1x384xf32, #tpu.memory_space<vmem>>
    %6 = tpu.memref_squeeze %5 : memref<1x1x384xf32, #tpu.memory_space<vmem>> -> memref<384xf32, #tpu.memory_space<vmem>>
    %7 = tpu.memref_slice %arg10[%c0_i32_1, %c0_i32_2] : memref<2x16x!tpu.dma_semaphore, #tpu.memory_space<semaphore_mem>> -> memref<1x1x!tpu.dma_semaphore, #tpu.memory_space<semaphore_mem>>
    %8 = tpu.memref_squeeze %7 : memref<1x1x!tpu.dma_semaphore, #tpu.memory_space<semaphore_mem>> -> memref<!tpu.dma_semaphore, #tpu.memory_space<semaphore_mem>>
    tpu.enqueue_dma source(%4 : memref<384xf32, #tpu.memory_space<any>>) target(%6 : memref<384xf32, #tpu.memory_space<vmem>>) target_semaphore(%8 : memref<!tpu.dma_semaphore, #tpu.memory_space<semaphore_mem>>)
    %9 = arith.index_cast %0 : i32 to index
    %c1 = arith.constant 1 : index
    %10 = memref.load %arg1[%9, %c1] : memref<16x16xi32, #tpu.memory_space<smem>>
    %c0_i32_5 = arith.constant 0 : i32
    %c1_i32 = arith.constant 1 : i32
    %c0_i32_6 = arith.constant 0 : i32
    %c1_i32_7 = arith.constant 1 : i32
    %c0_i32_8 = arith.constant 0 : i32
    %11 = tpu.memref_slice %arg2[%10, %c0_i32_8] : memref<1000x384xf32, #tpu.memory_space<any>> -> memref<1x384xf32, #tpu.memory_space<any>>
    %12 = tpu.memref_squeeze %11 : memref<1x384xf32, #tpu.memory_space<any>> -> memref<384xf32, #tpu.memory_space<any>>
    %c0_i32_9 = arith.constant 0 : i32
    %13 = tpu.memref_slice %arg9[%c0_i32_5, %c1_i32, %c0_i32_9] : memref<2x16x384xf32, #tpu.memory_space<vmem>> -> memref<1x1x384xf32, #tpu.memory_space<vmem>>
    %14 = tpu.memref_squeeze %13 : memref<1x1x384xf32, #tpu.memory_space<vmem>> -> memref<384xf32, #tpu.memory_space<vmem>>
    %15 = tpu.memref_slice %arg10[%c0_i32_6, %c1_i32_7] : memref<2x16x!tpu.dma_semaphore, #tpu.memory_space<semaphore_mem>> -> memref<1x1x!tpu.dma_semaphore, #tpu.memory_space<semaphore_mem>>
    %16 = tpu.memref_squeeze %15 : memref<1x1x!tpu.dma_semaphore, #tpu.memory_space<semaphore_mem>> -> memref<!tpu.dma_semaphore, #tpu.memory_space<semaphore_mem>>
    tpu.enqueue_dma source(%12 : memref<384xf32, #tpu.memory_space<any>>) target(%14 : memref<384xf32, #tpu.memory_space<vmem>>) target_semaphore(%16 : memref<!tpu.dma_semaphore, #tpu.memory_space<semaphore_mem>>)
    %17 = arith.index_cast %0 : i32 to index
    %c2 = arith.constant 2 : index
    %18 = memref.load %arg1[%17, %c2] : memref<16x16xi32, #tpu.memory_space<smem>>
    %c0_i32_10 = arith.constant 0 : i32
    %c2_i32 = arith.constant 2 : i32
    %c0_i32_11 = arith.constant 0 : i32
    %c2_i32_12 = arith.constant 2 : i32
    %c0_i32_13 = arith.constant 0 : i32
    %19 = tpu.memref_slice %arg2[%18, %c0_i32_13] : memref<1000x384xf32, #tpu.memory_space<any>> -> memref<1x384xf32, #tpu.memory_space<any>>
    %20 = tpu.memref_squeeze %19 : memref<1x384xf32, #tpu.memory_space<any>> -> memref<384xf32, #tpu.memory_space<any>>
    %c0_i32_14 = arith.constant 0 : i32
    %21 = tpu.memref_slice %arg9[%c0_i32_10, %c2_i32, %c0_i32_14] : memref<2x16x384xf32, #tpu.memory_space<vmem>> -> memref<1x1x384xf32, #tpu.memory_space<vmem>>
    %22 = tpu.memref_squeeze %21 : memref<1x1x384xf32, #tpu.memory_space<vmem>> -> memref<384xf32, #tpu.memory_space<vmem>>
    %23 = tpu.memref_slice %arg10[%c0_i32_11, %c2_i32_12] : memref<2x16x!tpu.dma_semaphore, #tpu.memory_space<semaphore_mem>> -> memref<1x1x!tpu.dma_semaphore, #tpu.memory_space<semaphore_mem>>
    %24 = tpu.memref_squeeze %23 : memref<1x1x!tpu.dma_semaphore, #tpu.memory_space<semaphore_mem>> -> memref<!tpu.dma_semaphore, #tpu.memory_space<semaphore_mem>>
    tpu.enqueue_dma source(%20 : memref<384xf32, #tpu.memory_space<any>>) target(%22 : memref<384xf32, #tpu.memory_space<vmem>>) target_semaphore(%24 : memref<!tpu.dma_semaphore, #tpu.memory_space<semaphore_mem>>)
    %25 = arith.index_cast %0 : i32 to index
    %c3 = arith.constant 3 : index
    %26 = memref.load %arg1[%25, %c3] : memref<16x16xi32, #tpu.memory_space<smem>>
    %c0_i32_15 = arith.constant 0 : i32
    %c3_i32 = arith.constant 3 : i32
    %c0_i32_16 = arith.constant 0 : i32
    %c3_i32_17 = arith.constant 3 : i32
    %c0_i32_18 = arith.constant 0 : i32
    %27 = tpu.memref_slice %arg2[%26, %c0_i32_18] : memref<1000x384xf32, #tpu.memory_space<any>> -> memref<1x384xf32, #tpu.memory_space<any>>
    %28 = tpu.memref_squeeze %27 : memref<1x384xf32, #tpu.memory_space<any>> -> memref<384xf32, #tpu.memory_space<any>>
    %c0_i32_19 = arith.constant 0 : i32
    %29 = tpu.memref_slice %arg9[%c0_i32_15, %c3_i32, %c0_i32_19] : memref<2x16x384xf32, #tpu.memory_space<vmem>> -> memref<1x1x384xf32, #tpu.memory_space<vmem>>
    %30 = tpu.memref_squeeze %29 : memref<1x1x384xf32, #tpu.memory_space<vmem>> -> memref<384xf32, #tpu.memory_space<vmem>>
    %31 = tpu.memref_slice %arg10[%c0_i32_16, %c3_i32_17] : memref<2x16x!tpu.dma_semaphore, #tpu.memory_space<semaphore_mem>> -> memref<1x1x!tpu.dma_semaphore, #tpu.memory_space<semaphore_mem>>
    %32 = tpu.memref_squeeze %31 : memref<1x1x!tpu.dma_semaphore, #tpu.memory_space<semaphore_mem>> -> memref<!tpu.dma_semaphore, #tpu.memory_space<semaphore_mem>>
    tpu.enqueue_dma source(%28 : memref<384xf32, #tpu.memory_space<any>>) target(%30 : memref<384xf32, #tpu.memory_space<vmem>>) target_semaphore(%32 : memref<!tpu.dma_semaphore, #tpu.memory_space<semaphore_mem>>)
    %33 = arith.index_cast %0 : i32 to index
    %c4 = arith.constant 4 : index
    %34 = memref.load %arg1[%33, %c4] : memref<16x16xi32, #tpu.memory_space<smem>>
    %c0_i32_20 = arith.constant 0 : i32
    %c4_i32 = arith.constant 4 : i32
    %c0_i32_21 = arith.constant 0 : i32
    %c4_i32_22 = arith.constant 4 : i32
    %c0_i32_23 = arith.constant 0 : i32
    %35 = tpu.memref_slice %arg2[%34, %c0_i32_23] : memref<1000x384xf32, #tpu.memory_space<any>> -> memref<1x384xf32, #tpu.memory_space<any>>
    %36 = tpu.memref_squeeze %35 : memref<1x384xf32, #tpu.memory_space<any>> -> memref<384xf32, #tpu.memory_space<any>>
    %c0_i32_24 = arith.constant 0 : i32
    %37 = tpu.memref_slice %arg9[%c0_i32_20, %c4_i32, %c0_i32_24] : memref<2x16x384xf32, #tpu.memory_space<vmem>> -> memref<1x1x384xf32, #tpu.memory_space<vmem>>
    %38 = tpu.memref_squeeze %37 : memref<1x1x384xf32, #tpu.memory_space<vmem>> -> memref<384xf32, #tpu.memory_space<vmem>>
    %39 = tpu.memref_slice %arg10[%c0_i32_21, %c4_i32_22] : memref<2x16x!tpu.dma_semaphore, #tpu.memory_space<semaphore_mem>> -> memref<1x1x!tpu.dma_semaphore, #tpu.memory_space<semaphore_mem>>
    %40 = tpu.memref_squeeze %39 : memref<1x1x!tpu.dma_semaphore, #tpu.memory_space<semaphore_mem>> -> memref<!tpu.dma_semaphore, #tpu.memory_space<semaphore_mem>>
    tpu.enqueue_dma source(%36 : memref<384xf32, #tpu.memory_space<any>>) target(%38 : memref<384xf32, #tpu.memory_space<vmem>>) target_semaphore(%40 : memref<!tpu.dma_semaphore, #tpu.memory_space<semaphore_mem>>)
    %41 = arith.index_cast %0 : i32 to index
    %c5 = arith.constant 5 : index
    %42 = memref.load %arg1[%41, %c5] : memref<16x16xi32, #tpu.memory_space<smem>>
    %c0_i32_25 = arith.constant 0 : i32
    %c5_i32 = arith.constant 5 : i32
    %c0_i32_26 = arith.constant 0 : i32
    %c5_i32_27 = arith.constant 5 : i32
    %c0_i32_28 = arith.constant 0 : i32
    %43 = tpu.memref_slice %arg2[%42, %c0_i32_28] : memref<1000x384xf32, #tpu.memory_space<any>> -> memref<1x384xf32, #tpu.memory_space<any>>
    %44 = tpu.memref_squeeze %43 : memref<1x384xf32, #tpu.memory_space<any>> -> memref<384xf32, #tpu.memory_space<any>>
    %c0_i32_29 = arith.constant 0 : i32
    %45 = tpu.memref_slice %arg9[%c0_i32_25, %c5_i32, %c0_i32_29] : memref<2x16x384xf32, #tpu.memory_space<vmem>> -> memref<1x1x384xf32, #tpu.memory_space<vmem>>
    %46 = tpu.memref_squeeze %45 : memref<1x1x384xf32, #tpu.memory_space<vmem>> -> memref<384xf32, #tpu.memory_space<vmem>>
    %47 = tpu.memref_slice %arg10[%c0_i32_26, %c5_i32_27] : memref<2x16x!tpu.dma_semaphore, #tpu.memory_space<semaphore_mem>> -> memref<1x1x!tpu.dma_semaphore, #tpu.memory_space<semaphore_mem>>
    %48 = tpu.memref_squeeze %47 : memref<1x1x!tpu.dma_semaphore, #tpu.memory_space<semaphore_mem>> -> memref<!tpu.dma_semaphore, #tpu.memory_space<semaphore_mem>>
    tpu.enqueue_dma source(%44 : memref<384xf32, #tpu.memory_space<any>>) target(%46 : memref<384xf32, #tpu.memory_space<vmem>>) target_semaphore(%48 : memref<!tpu.dma_semaphore, #tpu.memory_space<semaphore_mem>>)
    %49 = arith.index_cast %0 : i32 to index
    %c6 = arith.constant 6 : index
    %50 = memref.load %arg1[%49, %c6] : memref<16x16xi32, #tpu.memory_space<smem>>
    %c0_i32_30 = arith.constant 0 : i32
    %c6_i32 = arith.constant 6 : i32
    %c0_i32_31 = arith.constant 0 : i32
    %c6_i32_32 = arith.constant 6 : i32
    %c0_i32_33 = arith.constant 0 : i32
    %51 = tpu.memref_slice %arg2[%50, %c0_i32_33] : memref<1000x384xf32, #tpu.memory_space<any>> -> memref<1x384xf32, #tpu.memory_space<any>>
    %52 = tpu.memref_squeeze %51 : memref<1x384xf32, #tpu.memory_space<any>> -> memref<384xf32, #tpu.memory_space<any>>
    %c0_i32_34 = arith.constant 0 : i32
    %53 = tpu.memref_slice %arg9[%c0_i32_30, %c6_i32, %c0_i32_34] : memref<2x16x384xf32, #tpu.memory_space<vmem>> -> memref<1x1x384xf32, #tpu.memory_space<vmem>>
    %54 = tpu.memref_squeeze %53 : memref<1x1x384xf32, #tpu.memory_space<vmem>> -> memref<384xf32, #tpu.memory_space<vmem>>
    %55 = tpu.memref_slice %arg10[%c0_i32_31, %c6_i32_32] : memref<2x16x!tpu.dma_semaphore, #tpu.memory_space<semaphore_mem>> -> memref<1x1x!tpu.dma_semaphore, #tpu.memory_space<semaphore_mem>>
    %56 = tpu.memref_squeeze %55 : memref<1x1x!tpu.dma_semaphore, #tpu.memory_space<semaphore_mem>> -> memref<!tpu.dma_semaphore, #tpu.memory_space<semaphore_mem>>
    tpu.enqueue_dma source(%52 : memref<384xf32, #tpu.memory_space<any>>) target(%54 : memref<384xf32, #tpu.memory_space<vmem>>) target_semaphore(%56 : memref<!tpu.dma_semaphore, #tpu.memory_space<semaphore_mem>>)
    %57 = arith.index_cast %0 : i32 to index
    %c7 = arith.constant 7 : index
    %58 = memref.load %arg1[%57, %c7] : memref<16x16xi32, #tpu.memory_space<smem>>
    %c0_i32_35 = arith.constant 0 : i32
    %c7_i32 = arith.constant 7 : i32
    %c0_i32_36 = arith.constant 0 : i32
    %c7_i32_37 = arith.constant 7 : i32
    %c0_i32_38 = arith.constant 0 : i32
    %59 = tpu.memref_slice %arg2[%58, %c0_i32_38] : memref<1000x384xf32, #tpu.memory_space<any>> -> memref<1x384xf32, #tpu.memory_space<any>>
    %60 = tpu.memref_squeeze %59 : memref<1x384xf32, #tpu.memory_space<any>> -> memref<384xf32, #tpu.memory_space<any>>
    %c0_i32_39 = arith.constant 0 : i32
    %61 = tpu.memref_slice %arg9[%c0_i32_35, %c7_i32, %c0_i32_39] : memref<2x16x384xf32, #tpu.memory_space<vmem>> -> memref<1x1x384xf32, #tpu.memory_space<vmem>>
    %62 = tpu.memref_squeeze %61 : memref<1x1x384xf32, #tpu.memory_space<vmem>> -> memref<384xf32, #tpu.memory_space<vmem>>
    %63 = tpu.memref_slice %arg10[%c0_i32_36, %c7_i32_37] : memref<2x16x!tpu.dma_semaphore, #tpu.memory_space<semaphore_mem>> -> memref<1x1x!tpu.dma_semaphore, #tpu.memory_space<semaphore_mem>>
    %64 = tpu.memref_squeeze %63 : memref<1x1x!tpu.dma_semaphore, #tpu.memory_space<semaphore_mem>> -> memref<!tpu.dma_semaphore, #tpu.memory_space<semaphore_mem>>
    tpu.enqueue_dma source(%60 : memref<384xf32, #tpu.memory_space<any>>) target(%62 : memref<384xf32, #tpu.memory_space<vmem>>) target_semaphore(%64 : memref<!tpu.dma_semaphore, #tpu.memory_space<semaphore_mem>>)
    %65 = arith.index_cast %0 : i32 to index
    %c8 = arith.constant 8 : index
    %66 = memref.load %arg1[%65, %c8] : memref<16x16xi32, #tpu.memory_space<smem>>
    %c0_i32_40 = arith.constant 0 : i32
    %c8_i32_41 = arith.constant 8 : i32
    %c0_i32_42 = arith.constant 0 : i32
    %c8_i32_43 = arith.constant 8 : i32
    %c0_i32_44 = arith.constant 0 : i32
    %67 = tpu.memref_slice %arg2[%66, %c0_i32_44] : memref<1000x384xf32, #tpu.memory_space<any>> -> memref<1x384xf32, #tpu.memory_space<any>>
    %68 = tpu.memref_squeeze %67 : memref<1x384xf32, #tpu.memory_space<any>> -> memref<384xf32, #tpu.memory_space<any>>
    %c0_i32_45 = arith.constant 0 : i32
    %69 = tpu.memref_slice %arg9[%c0_i32_40, %c8_i32_41, %c0_i32_45] : memref<2x16x384xf32, #tpu.memory_space<vmem>> -> memref<1x1x384xf32, #tpu.memory_space<vmem>>
    %70 = tpu.memref_squeeze %69 : memref<1x1x384xf32, #tpu.memory_space<vmem>> -> memref<384xf32, #tpu.memory_space<vmem>>
    %71 = tpu.memref_slice %arg10[%c0_i32_42, %c8_i32_43] : memref<2x16x!tpu.dma_semaphore, #tpu.memory_space<semaphore_mem>> -> memref<1x1x!tpu.dma_semaphore, #tpu.memory_space<semaphore_mem>>
    %72 = tpu.memref_squeeze %71 : memref<1x1x!tpu.dma_semaphore, #tpu.memory_space<semaphore_mem>> -> memref<!tpu.dma_semaphore, #tpu.memory_space<semaphore_mem>>
    tpu.enqueue_dma source(%68 : memref<384xf32, #tpu.memory_space<any>>) target(%70 : memref<384xf32, #tpu.memory_space<vmem>>) target_semaphore(%72 : memref<!tpu.dma_semaphore, #tpu.memory_space<semaphore_mem>>)
    %73 = arith.index_cast %0 : i32 to index
    %c9 = arith.constant 9 : index
    %74 = memref.load %arg1[%73, %c9] : memref<16x16xi32, #tpu.memory_space<smem>>
    %c0_i32_46 = arith.constant 0 : i32
    %c9_i32 = arith.constant 9 : i32
    %c0_i32_47 = arith.constant 0 : i32
    %c9_i32_48 = arith.constant 9 : i32
    %c0_i32_49 = arith.constant 0 : i32
    %75 = tpu.memref_slice %arg2[%74, %c0_i32_49] : memref<1000x384xf32, #tpu.memory_space<any>> -> memref<1x384xf32, #tpu.memory_space<any>>
    %76 = tpu.memref_squeeze %75 : memref<1x384xf32, #tpu.memory_space<any>> -> memref<384xf32, #tpu.memory_space<any>>
    %c0_i32_50 = arith.constant 0 : i32
    %77 = tpu.memref_slice %arg9[%c0_i32_46, %c9_i32, %c0_i32_50] : memref<2x16x384xf32, #tpu.memory_space<vmem>> -> memref<1x1x384xf32, #tpu.memory_space<vmem>>
    %78 = tpu.memref_squeeze %77 : memref<1x1x384xf32, #tpu.memory_space<vmem>> -> memref<384xf32, #tpu.memory_space<vmem>>
    %79 = tpu.memref_slice %arg10[%c0_i32_47, %c9_i32_48] : memref<2x16x!tpu.dma_semaphore, #tpu.memory_space<semaphore_mem>> -> memref<1x1x!tpu.dma_semaphore, #tpu.memory_space<semaphore_mem>>
    %80 = tpu.memref_squeeze %79 : memref<1x1x!tpu.dma_semaphore, #tpu.memory_space<semaphore_mem>> -> memref<!tpu.dma_semaphore, #tpu.memory_space<semaphore_mem>>
    tpu.enqueue_dma source(%76 : memref<384xf32, #tpu.memory_space<any>>) target(%78 : memref<384xf32, #tpu.memory_space<vmem>>) target_semaphore(%80 : memref<!tpu.dma_semaphore, #tpu.memory_space<semaphore_mem>>)
    %81 = arith.index_cast %0 : i32 to index
    %c10 = arith.constant 10 : index
    %82 = memref.load %arg1[%81, %c10] : memref<16x16xi32, #tpu.memory_space<smem>>
    %c0_i32_51 = arith.constant 0 : i32
    %c10_i32 = arith.constant 10 : i32
    %c0_i32_52 = arith.constant 0 : i32
    %c10_i32_53 = arith.constant 10 : i32
    %c0_i32_54 = arith.constant 0 : i32
    %83 = tpu.memref_slice %arg2[%82, %c0_i32_54] : memref<1000x384xf32, #tpu.memory_space<any>> -> memref<1x384xf32, #tpu.memory_space<any>>
    %84 = tpu.memref_squeeze %83 : memref<1x384xf32, #tpu.memory_space<any>> -> memref<384xf32, #tpu.memory_space<any>>
    %c0_i32_55 = arith.constant 0 : i32
    %85 = tpu.memref_slice %arg9[%c0_i32_51, %c10_i32, %c0_i32_55] : memref<2x16x384xf32, #tpu.memory_space<vmem>> -> memref<1x1x384xf32, #tpu.memory_space<vmem>>
    %86 = tpu.memref_squeeze %85 : memref<1x1x384xf32, #tpu.memory_space<vmem>> -> memref<384xf32, #tpu.memory_space<vmem>>
    %87 = tpu.memref_slice %arg10[%c0_i32_52, %c10_i32_53] : memref<2x16x!tpu.dma_semaphore, #tpu.memory_space<semaphore_mem>> -> memref<1x1x!tpu.dma_semaphore, #tpu.memory_space<semaphore_mem>>
    %88 = tpu.memref_squeeze %87 : memref<1x1x!tpu.dma_semaphore, #tpu.memory_space<semaphore_mem>> -> memref<!tpu.dma_semaphore, #tpu.memory_space<semaphore_mem>>
    tpu.enqueue_dma source(%84 : memref<384xf32, #tpu.memory_space<any>>) target(%86 : memref<384xf32, #tpu.memory_space<vmem>>) target_semaphore(%88 : memref<!tpu.dma_semaphore, #tpu.memory_space<semaphore_mem>>)
    %89 = arith.index_cast %0 : i32 to index
    %c11 = arith.constant 11 : index
    %90 = memref.load %arg1[%89, %c11] : memref<16x16xi32, #tpu.memory_space<smem>>
    %c0_i32_56 = arith.constant 0 : i32
    %c11_i32 = arith.constant 11 : i32
    %c0_i32_57 = arith.constant 0 : i32
    %c11_i32_58 = arith.constant 11 : i32
    %c0_i32_59 = arith.constant 0 : i32
    %91 = tpu.memref_slice %arg2[%90, %c0_i32_59] : memref<1000x384xf32, #tpu.memory_space<any>> -> memref<1x384xf32, #tpu.memory_space<any>>
    %92 = tpu.memref_squeeze %91 : memref<1x384xf32, #tpu.memory_space<any>> -> memref<384xf32, #tpu.memory_space<any>>
    %c0_i32_60 = arith.constant 0 : i32
    %93 = tpu.memref_slice %arg9[%c0_i32_56, %c11_i32, %c0_i32_60] : memref<2x16x384xf32, #tpu.memory_space<vmem>> -> memref<1x1x384xf32, #tpu.memory_space<vmem>>
    %94 = tpu.memref_squeeze %93 : memref<1x1x384xf32, #tpu.memory_space<vmem>> -> memref<384xf32, #tpu.memory_space<vmem>>
    %95 = tpu.memref_slice %arg10[%c0_i32_57, %c11_i32_58] : memref<2x16x!tpu.dma_semaphore, #tpu.memory_space<semaphore_mem>> -> memref<1x1x!tpu.dma_semaphore, #tpu.memory_space<semaphore_mem>>
    %96 = tpu.memref_squeeze %95 : memref<1x1x!tpu.dma_semaphore, #tpu.memory_space<semaphore_mem>> -> memref<!tpu.dma_semaphore, #tpu.memory_space<semaphore_mem>>
    tpu.enqueue_dma source(%92 : memref<384xf32, #tpu.memory_space<any>>) target(%94 : memref<384xf32, #tpu.memory_space<vmem>>) target_semaphore(%96 : memref<!tpu.dma_semaphore, #tpu.memory_space<semaphore_mem>>)
    %97 = arith.index_cast %0 : i32 to index
    %c12 = arith.constant 12 : index
    %98 = memref.load %arg1[%97, %c12] : memref<16x16xi32, #tpu.memory_space<smem>>
    %c0_i32_61 = arith.constant 0 : i32
    %c12_i32 = arith.constant 12 : i32
    %c0_i32_62 = arith.constant 0 : i32
    %c12_i32_63 = arith.constant 12 : i32
    %c0_i32_64 = arith.constant 0 : i32
    %99 = tpu.memref_slice %arg2[%98, %c0_i32_64] : memref<1000x384xf32, #tpu.memory_space<any>> -> memref<1x384xf32, #tpu.memory_space<any>>
    %100 = tpu.memref_squeeze %99 : memref<1x384xf32, #tpu.memory_space<any>> -> memref<384xf32, #tpu.memory_space<any>>
    %c0_i32_65 = arith.constant 0 : i32
    %101 = tpu.memref_slice %arg9[%c0_i32_61, %c12_i32, %c0_i32_65] : memref<2x16x384xf32, #tpu.memory_space<vmem>> -> memref<1x1x384xf32, #tpu.memory_space<vmem>>
    %102 = tpu.memref_squeeze %101 : memref<1x1x384xf32, #tpu.memory_space<vmem>> -> memref<384xf32, #tpu.memory_space<vmem>>
    %103 = tpu.memref_slice %arg10[%c0_i32_62, %c12_i32_63] : memref<2x16x!tpu.dma_semaphore, #tpu.memory_space<semaphore_mem>> -> memref<1x1x!tpu.dma_semaphore, #tpu.memory_space<semaphore_mem>>
    %104 = tpu.memref_squeeze %103 : memref<1x1x!tpu.dma_semaphore, #tpu.memory_space<semaphore_mem>> -> memref<!tpu.dma_semaphore, #tpu.memory_space<semaphore_mem>>
    tpu.enqueue_dma source(%100 : memref<384xf32, #tpu.memory_space<any>>) target(%102 : memref<384xf32, #tpu.memory_space<vmem>>) target_semaphore(%104 : memref<!tpu.dma_semaphore, #tpu.memory_space<semaphore_mem>>)
    %105 = arith.index_cast %0 : i32 to index
    %c13 = arith.constant 13 : index
    %106 = memref.load %arg1[%105, %c13] : memref<16x16xi32, #tpu.memory_space<smem>>
    %c0_i32_66 = arith.constant 0 : i32
    %c13_i32 = arith.constant 13 : i32
    %c0_i32_67 = arith.constant 0 : i32
    %c13_i32_68 = arith.constant 13 : i32
    %c0_i32_69 = arith.constant 0 : i32
    %107 = tpu.memref_slice %arg2[%106, %c0_i32_69] : memref<1000x384xf32, #tpu.memory_space<any>> -> memref<1x384xf32, #tpu.memory_space<any>>
    %108 = tpu.memref_squeeze %107 : memref<1x384xf32, #tpu.memory_space<any>> -> memref<384xf32, #tpu.memory_space<any>>
    %c0_i32_70 = arith.constant 0 : i32
    %109 = tpu.memref_slice %arg9[%c0_i32_66, %c13_i32, %c0_i32_70] : memref<2x16x384xf32, #tpu.memory_space<vmem>> -> memref<1x1x384xf32, #tpu.memory_space<vmem>>
    %110 = tpu.memref_squeeze %109 : memref<1x1x384xf32, #tpu.memory_space<vmem>> -> memref<384xf32, #tpu.memory_space<vmem>>
    %111 = tpu.memref_slice %arg10[%c0_i32_67, %c13_i32_68] : memref<2x16x!tpu.dma_semaphore, #tpu.memory_space<semaphore_mem>> -> memref<1x1x!tpu.dma_semaphore, #tpu.memory_space<semaphore_mem>>
    %112 = tpu.memref_squeeze %111 : memref<1x1x!tpu.dma_semaphore, #tpu.memory_space<semaphore_mem>> -> memref<!tpu.dma_semaphore, #tpu.memory_space<semaphore_mem>>
    tpu.enqueue_dma source(%108 : memref<384xf32, #tpu.memory_space<any>>) target(%110 : memref<384xf32, #tpu.memory_space<vmem>>) target_semaphore(%112 : memref<!tpu.dma_semaphore, #tpu.memory_space<semaphore_mem>>)
    %113 = arith.index_cast %0 : i32 to index
    %c14 = arith.constant 14 : index
    %114 = memref.load %arg1[%113, %c14] : memref<16x16xi32, #tpu.memory_space<smem>>
    %c0_i32_71 = arith.constant 0 : i32
    %c14_i32 = arith.constant 14 : i32
    %c0_i32_72 = arith.constant 0 : i32
    %c14_i32_73 = arith.constant 14 : i32
    %c0_i32_74 = arith.constant 0 : i32
    %115 = tpu.memref_slice %arg2[%114, %c0_i32_74] : memref<1000x384xf32, #tpu.memory_space<any>> -> memref<1x384xf32, #tpu.memory_space<any>>
    %116 = tpu.memref_squeeze %115 : memref<1x384xf32, #tpu.memory_space<any>> -> memref<384xf32, #tpu.memory_space<any>>
    %c0_i32_75 = arith.constant 0 : i32
    %117 = tpu.memref_slice %arg9[%c0_i32_71, %c14_i32, %c0_i32_75] : memref<2x16x384xf32, #tpu.memory_space<vmem>> -> memref<1x1x384xf32, #tpu.memory_space<vmem>>
    %118 = tpu.memref_squeeze %117 : memref<1x1x384xf32, #tpu.memory_space<vmem>> -> memref<384xf32, #tpu.memory_space<vmem>>
    %119 = tpu.memref_slice %arg10[%c0_i32_72, %c14_i32_73] : memref<2x16x!tpu.dma_semaphore, #tpu.memory_space<semaphore_mem>> -> memref<1x1x!tpu.dma_semaphore, #tpu.memory_space<semaphore_mem>>
    %120 = tpu.memref_squeeze %119 : memref<1x1x!tpu.dma_semaphore, #tpu.memory_space<semaphore_mem>> -> memref<!tpu.dma_semaphore, #tpu.memory_space<semaphore_mem>>
    tpu.enqueue_dma source(%116 : memref<384xf32, #tpu.memory_space<any>>) target(%118 : memref<384xf32, #tpu.memory_space<vmem>>) target_semaphore(%120 : memref<!tpu.dma_semaphore, #tpu.memory_space<semaphore_mem>>)
    %121 = arith.index_cast %0 : i32 to index
    %c15 = arith.constant 15 : index
    %122 = memref.load %arg1[%121, %c15] : memref<16x16xi32, #tpu.memory_space<smem>>
    %c0_i32_76 = arith.constant 0 : i32
    %c15_i32 = arith.constant 15 : i32
    %c0_i32_77 = arith.constant 0 : i32
    %c15_i32_78 = arith.constant 15 : i32
    %c0_i32_79 = arith.constant 0 : i32
    %123 = tpu.memref_slice %arg2[%122, %c0_i32_79] : memref<1000x384xf32, #tpu.memory_space<any>> -> memref<1x384xf32, #tpu.memory_space<any>>
    %124 = tpu.memref_squeeze %123 : memref<1x384xf32, #tpu.memory_space<any>> -> memref<384xf32, #tpu.memory_space<any>>
    %c0_i32_80 = arith.constant 0 : i32
    %125 = tpu.memref_slice %arg9[%c0_i32_76, %c15_i32, %c0_i32_80] : memref<2x16x384xf32, #tpu.memory_space<vmem>> -> memref<1x1x384xf32, #tpu.memory_space<vmem>>
    %126 = tpu.memref_squeeze %125 : memref<1x1x384xf32, #tpu.memory_space<vmem>> -> memref<384xf32, #tpu.memory_space<vmem>>
    %127 = tpu.memref_slice %arg10[%c0_i32_77, %c15_i32_78] : memref<2x16x!tpu.dma_semaphore, #tpu.memory_space<semaphore_mem>> -> memref<1x1x!tpu.dma_semaphore, #tpu.memory_space<semaphore_mem>>
    %128 = tpu.memref_squeeze %127 : memref<1x1x!tpu.dma_semaphore, #tpu.memory_space<semaphore_mem>> -> memref<!tpu.dma_semaphore, #tpu.memory_space<semaphore_mem>>
    tpu.enqueue_dma source(%124 : memref<384xf32, #tpu.memory_space<any>>) target(%126 : memref<384xf32, #tpu.memory_space<vmem>>) target_semaphore(%128 : memref<!tpu.dma_semaphore, #tpu.memory_space<semaphore_mem>>)
    %c0_i32_81 = arith.constant 0 : i32
    %c8_i32_82 = arith.constant 8 : i32
    %129 = arith.addi %c0_i32_81, %c8_i32_82 : i32
    %c1_i32_83 = arith.constant 1 : i32
    scf.for %arg12 = %c0_i32_81 to %129 step %c1_i32_83  : i32 {
      %c1_i32_102 = arith.constant 1 : i32
      %156 = arith.muli %arg12, %c1_i32_102 : i32
      %c0_i32_103 = arith.constant 0 : i32
      %157 = arith.addi %c0_i32_103, %156 : i32
      %c2_i32_104 = arith.constant 2 : i32
      %c0_i32_105 = arith.constant 0 : i32
      %158 = arith.cmpi eq, %c2_i32_104, %c0_i32_105 : i32
      %c1_i32_106 = arith.constant 1 : i32
      %159 = arith.select %158, %c1_i32_106, %c2_i32_104 : i32
      %160 = arith.remsi %157, %159 : i32
      %c0_i32_107 = arith.constant 0 : i32
      %161 = arith.cmpi ne, %160, %c0_i32_107 : i32
      %c0_i32_108 = arith.constant 0 : i32
      %162 = arith.cmpi slt, %160, %c0_i32_108 : i32
      %c0_i32_109 = arith.constant 0 : i32
      %163 = arith.cmpi slt, %159, %c0_i32_109 : i32
      %164 = arith.xori %162, %163 : i1
      %165 = arith.andi %164, %161 : i1
      %166 = arith.addi %160, %159 : i32
      %167 = arith.select %165, %166, %160 : i32
      %c0_i32_110 = arith.constant 0 : i32
      %c0_i32_111 = arith.constant 0 : i32
      %c0_i32_112 = arith.constant 0 : i32
      %c0_i32_113 = arith.constant 0 : i32
      %168 = tpu.memref_slice %arg2[%c0_i32_110, %c0_i32_113] : memref<1000x384xf32, #tpu.memory_space<any>> -> memref<1x384xf32, #tpu.memory_space<any>>
      %169 = tpu.memref_squeeze %168 : memref<1x384xf32, #tpu.memory_space<any>> -> memref<384xf32, #tpu.memory_space<any>>
      %c0_i32_114 = arith.constant 0 : i32
      %170 = tpu.memref_slice %arg9[%167, %c0_i32_111, %c0_i32_114] : memref<2x16x384xf32, #tpu.memory_space<vmem>> -> memref<1x1x384xf32, #tpu.memory_space<vmem>>
      %171 = tpu.memref_squeeze %170 : memref<1x1x384xf32, #tpu.memory_space<vmem>> -> memref<384xf32, #tpu.memory_space<vmem>>
      %172 = tpu.memref_slice %arg10[%167, %c0_i32_112] : memref<2x16x!tpu.dma_semaphore, #tpu.memory_space<semaphore_mem>> -> memref<1x1x!tpu.dma_semaphore, #tpu.memory_space<semaphore_mem>>
      %173 = tpu.memref_squeeze %172 : memref<1x1x!tpu.dma_semaphore, #tpu.memory_space<semaphore_mem>> -> memref<!tpu.dma_semaphore, #tpu.memory_space<semaphore_mem>>
      tpu.wait_dma2 semaphore(%173 : memref<!tpu.dma_semaphore, #tpu.memory_space<semaphore_mem>>) src(%169 : memref<384xf32, #tpu.memory_space<any>>) dst(%171 : memref<384xf32, #tpu.memory_space<vmem>>)
      %c0_i32_115 = arith.constant 0 : i32
      %c1_i32_116 = arith.constant 1 : i32
      %c1_i32_117 = arith.constant 1 : i32
      %c0_i32_118 = arith.constant 0 : i32
      %174 = tpu.memref_slice %arg2[%c0_i32_115, %c0_i32_118] : memref<1000x384xf32, #tpu.memory_space<any>> -> memref<1x384xf32, #tpu.memory_space<any>>
      %175 = tpu.memref_squeeze %174 : memref<1x384xf32, #tpu.memory_space<any>> -> memref<384xf32, #tpu.memory_space<any>>
      %c0_i32_119 = arith.constant 0 : i32
      %176 = tpu.memref_slice %arg9[%167, %c1_i32_116, %c0_i32_119] : memref<2x16x384xf32, #tpu.memory_space<vmem>> -> memref<1x1x384xf32, #tpu.memory_space<vmem>>
      %177 = tpu.memref_squeeze %176 : memref<1x1x384xf32, #tpu.memory_space<vmem>> -> memref<384xf32, #tpu.memory_space<vmem>>
      %178 = tpu.memref_slice %arg10[%167, %c1_i32_117] : memref<2x16x!tpu.dma_semaphore, #tpu.memory_space<semaphore_mem>> -> memref<1x1x!tpu.dma_semaphore, #tpu.memory_space<semaphore_mem>>
      %179 = tpu.memref_squeeze %178 : memref<1x1x!tpu.dma_semaphore, #tpu.memory_space<semaphore_mem>> -> memref<!tpu.dma_semaphore, #tpu.memory_space<semaphore_mem>>
      tpu.wait_dma2 semaphore(%179 : memref<!tpu.dma_semaphore, #tpu.memory_space<semaphore_mem>>) src(%175 : memref<384xf32, #tpu.memory_space<any>>) dst(%177 : memref<384xf32, #tpu.memory_space<vmem>>)
      %c0_i32_120 = arith.constant 0 : i32
      %c2_i32_121 = arith.constant 2 : i32
      %c2_i32_122 = arith.constant 2 : i32
      %c0_i32_123 = arith.constant 0 : i32
      %180 = tpu.memref_slice %arg2[%c0_i32_120, %c0_i32_123] : memref<1000x384xf32, #tpu.memory_space<any>> -> memref<1x384xf32, #tpu.memory_space<any>>
      %181 = tpu.memref_squeeze %180 : memref<1x384xf32, #tpu.memory_space<any>> -> memref<384xf32, #tpu.memory_space<any>>
      %c0_i32_124 = arith.constant 0 : i32
      %182 = tpu.memref_slice %arg9[%167, %c2_i32_121, %c0_i32_124] : memref<2x16x384xf32, #tpu.memory_space<vmem>> -> memref<1x1x384xf32, #tpu.memory_space<vmem>>
      %183 = tpu.memref_squeeze %182 : memref<1x1x384xf32, #tpu.memory_space<vmem>> -> memref<384xf32, #tpu.memory_space<vmem>>
      %184 = tpu.memref_slice %arg10[%167, %c2_i32_122] : memref<2x16x!tpu.dma_semaphore, #tpu.memory_space<semaphore_mem>> -> memref<1x1x!tpu.dma_semaphore, #tpu.memory_space<semaphore_mem>>
      %185 = tpu.memref_squeeze %184 : memref<1x1x!tpu.dma_semaphore, #tpu.memory_space<semaphore_mem>> -> memref<!tpu.dma_semaphore, #tpu.memory_space<semaphore_mem>>
      tpu.wait_dma2 semaphore(%185 : memref<!tpu.dma_semaphore, #tpu.memory_space<semaphore_mem>>) src(%181 : memref<384xf32, #tpu.memory_space<any>>) dst(%183 : memref<384xf32, #tpu.memory_space<vmem>>)
      %c0_i32_125 = arith.constant 0 : i32
      %c3_i32_126 = arith.constant 3 : i32
      %c3_i32_127 = arith.constant 3 : i32
      %c0_i32_128 = arith.constant 0 : i32
      %186 = tpu.memref_slice %arg2[%c0_i32_125, %c0_i32_128] : memref<1000x384xf32, #tpu.memory_space<any>> -> memref<1x384xf32, #tpu.memory_space<any>>
      %187 = tpu.memref_squeeze %186 : memref<1x384xf32, #tpu.memory_space<any>> -> memref<384xf32, #tpu.memory_space<any>>
      %c0_i32_129 = arith.constant 0 : i32
      %188 = tpu.memref_slice %arg9[%167, %c3_i32_126, %c0_i32_129] : memref<2x16x384xf32, #tpu.memory_space<vmem>> -> memref<1x1x384xf32, #tpu.memory_space<vmem>>
      %189 = tpu.memref_squeeze %188 : memref<1x1x384xf32, #tpu.memory_space<vmem>> -> memref<384xf32, #tpu.memory_space<vmem>>
      %190 = tpu.memref_slice %arg10[%167, %c3_i32_127] : memref<2x16x!tpu.dma_semaphore, #tpu.memory_space<semaphore_mem>> -> memref<1x1x!tpu.dma_semaphore, #tpu.memory_space<semaphore_mem>>
      %191 = tpu.memref_squeeze %190 : memref<1x1x!tpu.dma_semaphore, #tpu.memory_space<semaphore_mem>> -> memref<!tpu.dma_semaphore, #tpu.memory_space<semaphore_mem>>
      tpu.wait_dma2 semaphore(%191 : memref<!tpu.dma_semaphore, #tpu.memory_space<semaphore_mem>>) src(%187 : memref<384xf32, #tpu.memory_space<any>>) dst(%189 : memref<384xf32, #tpu.memory_space<vmem>>)
      %c0_i32_130 = arith.constant 0 : i32
      %c4_i32_131 = arith.constant 4 : i32
      %c4_i32_132 = arith.constant 4 : i32
      %c0_i32_133 = arith.constant 0 : i32
      %192 = tpu.memref_slice %arg2[%c0_i32_130, %c0_i32_133] : memref<1000x384xf32, #tpu.memory_space<any>> -> memref<1x384xf32, #tpu.memory_space<any>>
      %193 = tpu.memref_squeeze %192 : memref<1x384xf32, #tpu.memory_space<any>> -> memref<384xf32, #tpu.memory_space<any>>
      %c0_i32_134 = arith.constant 0 : i32
      %194 = tpu.memref_slice %arg9[%167, %c4_i32_131, %c0_i32_134] : memref<2x16x384xf32, #tpu.memory_space<vmem>> -> memref<1x1x384xf32, #tpu.memory_space<vmem>>
      %195 = tpu.memref_squeeze %194 : memref<1x1x384xf32, #tpu.memory_space<vmem>> -> memref<384xf32, #tpu.memory_space<vmem>>
      %196 = tpu.memref_slice %arg10[%167, %c4_i32_132] : memref<2x16x!tpu.dma_semaphore, #tpu.memory_space<semaphore_mem>> -> memref<1x1x!tpu.dma_semaphore, #tpu.memory_space<semaphore_mem>>
      %197 = tpu.memref_squeeze %196 : memref<1x1x!tpu.dma_semaphore, #tpu.memory_space<semaphore_mem>> -> memref<!tpu.dma_semaphore, #tpu.memory_space<semaphore_mem>>
      tpu.wait_dma2 semaphore(%197 : memref<!tpu.dma_semaphore, #tpu.memory_space<semaphore_mem>>) src(%193 : memref<384xf32, #tpu.memory_space<any>>) dst(%195 : memref<384xf32, #tpu.memory_space<vmem>>)
      %c0_i32_135 = arith.constant 0 : i32
      %c5_i32_136 = arith.constant 5 : i32
      %c5_i32_137 = arith.constant 5 : i32
      %c0_i32_138 = arith.constant 0 : i32
      %198 = tpu.memref_slice %arg2[%c0_i32_135, %c0_i32_138] : memref<1000x384xf32, #tpu.memory_space<any>> -> memref<1x384xf32, #tpu.memory_space<any>>
      %199 = tpu.memref_squeeze %198 : memref<1x384xf32, #tpu.memory_space<any>> -> memref<384xf32, #tpu.memory_space<any>>
      %c0_i32_139 = arith.constant 0 : i32
      %200 = tpu.memref_slice %arg9[%167, %c5_i32_136, %c0_i32_139] : memref<2x16x384xf32, #tpu.memory_space<vmem>> -> memref<1x1x384xf32, #tpu.memory_space<vmem>>
      %201 = tpu.memref_squeeze %200 : memref<1x1x384xf32, #tpu.memory_space<vmem>> -> memref<384xf32, #tpu.memory_space<vmem>>
      %202 = tpu.memref_slice %arg10[%167, %c5_i32_137] : memref<2x16x!tpu.dma_semaphore, #tpu.memory_space<semaphore_mem>> -> memref<1x1x!tpu.dma_semaphore, #tpu.memory_space<semaphore_mem>>
      %203 = tpu.memref_squeeze %202 : memref<1x1x!tpu.dma_semaphore, #tpu.memory_space<semaphore_mem>> -> memref<!tpu.dma_semaphore, #tpu.memory_space<semaphore_mem>>
      tpu.wait_dma2 semaphore(%203 : memref<!tpu.dma_semaphore, #tpu.memory_space<semaphore_mem>>) src(%199 : memref<384xf32, #tpu.memory_space<any>>) dst(%201 : memref<384xf32, #tpu.memory_space<vmem>>)
      %c0_i32_140 = arith.constant 0 : i32
      %c6_i32_141 = arith.constant 6 : i32
      %c6_i32_142 = arith.constant 6 : i32
      %c0_i32_143 = arith.constant 0 : i32
      %204 = tpu.memref_slice %arg2[%c0_i32_140, %c0_i32_143] : memref<1000x384xf32, #tpu.memory_space<any>> -> memref<1x384xf32, #tpu.memory_space<any>>
      %205 = tpu.memref_squeeze %204 : memref<1x384xf32, #tpu.memory_space<any>> -> memref<384xf32, #tpu.memory_space<any>>
      %c0_i32_144 = arith.constant 0 : i32
      %206 = tpu.memref_slice %arg9[%167, %c6_i32_141, %c0_i32_144] : memref<2x16x384xf32, #tpu.memory_space<vmem>> -> memref<1x1x384xf32, #tpu.memory_space<vmem>>
      %207 = tpu.memref_squeeze %206 : memref<1x1x384xf32, #tpu.memory_space<vmem>> -> memref<384xf32, #tpu.memory_space<vmem>>
      %208 = tpu.memref_slice %arg10[%167, %c6_i32_142] : memref<2x16x!tpu.dma_semaphore, #tpu.memory_space<semaphore_mem>> -> memref<1x1x!tpu.dma_semaphore, #tpu.memory_space<semaphore_mem>>
      %209 = tpu.memref_squeeze %208 : memref<1x1x!tpu.dma_semaphore, #tpu.memory_space<semaphore_mem>> -> memref<!tpu.dma_semaphore, #tpu.memory_space<semaphore_mem>>
      tpu.wait_dma2 semaphore(%209 : memref<!tpu.dma_semaphore, #tpu.memory_space<semaphore_mem>>) src(%205 : memref<384xf32, #tpu.memory_space<any>>) dst(%207 : memref<384xf32, #tpu.memory_space<vmem>>)
      %c0_i32_145 = arith.constant 0 : i32
      %c7_i32_146 = arith.constant 7 : i32
      %c7_i32_147 = arith.constant 7 : i32
      %c0_i32_148 = arith.constant 0 : i32
      %210 = tpu.memref_slice %arg2[%c0_i32_145, %c0_i32_148] : memref<1000x384xf32, #tpu.memory_space<any>> -> memref<1x384xf32, #tpu.memory_space<any>>
      %211 = tpu.memref_squeeze %210 : memref<1x384xf32, #tpu.memory_space<any>> -> memref<384xf32, #tpu.memory_space<any>>
      %c0_i32_149 = arith.constant 0 : i32
      %212 = tpu.memref_slice %arg9[%167, %c7_i32_146, %c0_i32_149] : memref<2x16x384xf32, #tpu.memory_space<vmem>> -> memref<1x1x384xf32, #tpu.memory_space<vmem>>
      %213 = tpu.memref_squeeze %212 : memref<1x1x384xf32, #tpu.memory_space<vmem>> -> memref<384xf32, #tpu.memory_space<vmem>>
      %214 = tpu.memref_slice %arg10[%167, %c7_i32_147] : memref<2x16x!tpu.dma_semaphore, #tpu.memory_space<semaphore_mem>> -> memref<1x1x!tpu.dma_semaphore, #tpu.memory_space<semaphore_mem>>
      %215 = tpu.memref_squeeze %214 : memref<1x1x!tpu.dma_semaphore, #tpu.memory_space<semaphore_mem>> -> memref<!tpu.dma_semaphore, #tpu.memory_space<semaphore_mem>>
      tpu.wait_dma2 semaphore(%215 : memref<!tpu.dma_semaphore, #tpu.memory_space<semaphore_mem>>) src(%211 : memref<384xf32, #tpu.memory_space<any>>) dst(%213 : memref<384xf32, #tpu.memory_space<vmem>>)
      %c0_i32_150 = arith.constant 0 : i32
      %c8_i32_151 = arith.constant 8 : i32
      %c8_i32_152 = arith.constant 8 : i32
      %c0_i32_153 = arith.constant 0 : i32
      %216 = tpu.memref_slice %arg2[%c0_i32_150, %c0_i32_153] : memref<1000x384xf32, #tpu.memory_space<any>> -> memref<1x384xf32, #tpu.memory_space<any>>
      %217 = tpu.memref_squeeze %216 : memref<1x384xf32, #tpu.memory_space<any>> -> memref<384xf32, #tpu.memory_space<any>>
      %c0_i32_154 = arith.constant 0 : i32
      %218 = tpu.memref_slice %arg9[%167, %c8_i32_151, %c0_i32_154] : memref<2x16x384xf32, #tpu.memory_space<vmem>> -> memref<1x1x384xf32, #tpu.memory_space<vmem>>
      %219 = tpu.memref_squeeze %218 : memref<1x1x384xf32, #tpu.memory_space<vmem>> -> memref<384xf32, #tpu.memory_space<vmem>>
      %220 = tpu.memref_slice %arg10[%167, %c8_i32_152] : memref<2x16x!tpu.dma_semaphore, #tpu.memory_space<semaphore_mem>> -> memref<1x1x!tpu.dma_semaphore, #tpu.memory_space<semaphore_mem>>
      %221 = tpu.memref_squeeze %220 : memref<1x1x!tpu.dma_semaphore, #tpu.memory_space<semaphore_mem>> -> memref<!tpu.dma_semaphore, #tpu.memory_space<semaphore_mem>>
      tpu.wait_dma2 semaphore(%221 : memref<!tpu.dma_semaphore, #tpu.memory_space<semaphore_mem>>) src(%217 : memref<384xf32, #tpu.memory_space<any>>) dst(%219 : memref<384xf32, #tpu.memory_space<vmem>>)
      %c0_i32_155 = arith.constant 0 : i32
      %c9_i32_156 = arith.constant 9 : i32
      %c9_i32_157 = arith.constant 9 : i32
      %c0_i32_158 = arith.constant 0 : i32
      %222 = tpu.memref_slice %arg2[%c0_i32_155, %c0_i32_158] : memref<1000x384xf32, #tpu.memory_space<any>> -> memref<1x384xf32, #tpu.memory_space<any>>
      %223 = tpu.memref_squeeze %222 : memref<1x384xf32, #tpu.memory_space<any>> -> memref<384xf32, #tpu.memory_space<any>>
      %c0_i32_159 = arith.constant 0 : i32
      %224 = tpu.memref_slice %arg9[%167, %c9_i32_156, %c0_i32_159] : memref<2x16x384xf32, #tpu.memory_space<vmem>> -> memref<1x1x384xf32, #tpu.memory_space<vmem>>
      %225 = tpu.memref_squeeze %224 : memref<1x1x384xf32, #tpu.memory_space<vmem>> -> memref<384xf32, #tpu.memory_space<vmem>>
      %226 = tpu.memref_slice %arg10[%167, %c9_i32_157] : memref<2x16x!tpu.dma_semaphore, #tpu.memory_space<semaphore_mem>> -> memref<1x1x!tpu.dma_semaphore, #tpu.memory_space<semaphore_mem>>
      %227 = tpu.memref_squeeze %226 : memref<1x1x!tpu.dma_semaphore, #tpu.memory_space<semaphore_mem>> -> memref<!tpu.dma_semaphore, #tpu.memory_space<semaphore_mem>>
      tpu.wait_dma2 semaphore(%227 : memref<!tpu.dma_semaphore, #tpu.memory_space<semaphore_mem>>) src(%223 : memref<384xf32, #tpu.memory_space<any>>) dst(%225 : memref<384xf32, #tpu.memory_space<vmem>>)
      %c0_i32_160 = arith.constant 0 : i32
      %c10_i32_161 = arith.constant 10 : i32
      %c10_i32_162 = arith.constant 10 : i32
      %c0_i32_163 = arith.constant 0 : i32
      %228 = tpu.memref_slice %arg2[%c0_i32_160, %c0_i32_163] : memref<1000x384xf32, #tpu.memory_space<any>> -> memref<1x384xf32, #tpu.memory_space<any>>
      %229 = tpu.memref_squeeze %228 : memref<1x384xf32, #tpu.memory_space<any>> -> memref<384xf32, #tpu.memory_space<any>>
      %c0_i32_164 = arith.constant 0 : i32
      %230 = tpu.memref_slice %arg9[%167, %c10_i32_161, %c0_i32_164] : memref<2x16x384xf32, #tpu.memory_space<vmem>> -> memref<1x1x384xf32, #tpu.memory_space<vmem>>
      %231 = tpu.memref_squeeze %230 : memref<1x1x384xf32, #tpu.memory_space<vmem>> -> memref<384xf32, #tpu.memory_space<vmem>>
      %232 = tpu.memref_slice %arg10[%167, %c10_i32_162] : memref<2x16x!tpu.dma_semaphore, #tpu.memory_space<semaphore_mem>> -> memref<1x1x!tpu.dma_semaphore, #tpu.memory_space<semaphore_mem>>
      %233 = tpu.memref_squeeze %232 : memref<1x1x!tpu.dma_semaphore, #tpu.memory_space<semaphore_mem>> -> memref<!tpu.dma_semaphore, #tpu.memory_space<semaphore_mem>>
      tpu.wait_dma2 semaphore(%233 : memref<!tpu.dma_semaphore, #tpu.memory_space<semaphore_mem>>) src(%229 : memref<384xf32, #tpu.memory_space<any>>) dst(%231 : memref<384xf32, #tpu.memory_space<vmem>>)
      %c0_i32_165 = arith.constant 0 : i32
      %c11_i32_166 = arith.constant 11 : i32
      %c11_i32_167 = arith.constant 11 : i32
      %c0_i32_168 = arith.constant 0 : i32
      %234 = tpu.memref_slice %arg2[%c0_i32_165, %c0_i32_168] : memref<1000x384xf32, #tpu.memory_space<any>> -> memref<1x384xf32, #tpu.memory_space<any>>
      %235 = tpu.memref_squeeze %234 : memref<1x384xf32, #tpu.memory_space<any>> -> memref<384xf32, #tpu.memory_space<any>>
      %c0_i32_169 = arith.constant 0 : i32
      %236 = tpu.memref_slice %arg9[%167, %c11_i32_166, %c0_i32_169] : memref<2x16x384xf32, #tpu.memory_space<vmem>> -> memref<1x1x384xf32, #tpu.memory_space<vmem>>
      %237 = tpu.memref_squeeze %236 : memref<1x1x384xf32, #tpu.memory_space<vmem>> -> memref<384xf32, #tpu.memory_space<vmem>>
      %238 = tpu.memref_slice %arg10[%167, %c11_i32_167] : memref<2x16x!tpu.dma_semaphore, #tpu.memory_space<semaphore_mem>> -> memref<1x1x!tpu.dma_semaphore, #tpu.memory_space<semaphore_mem>>
      %239 = tpu.memref_squeeze %238 : memref<1x1x!tpu.dma_semaphore, #tpu.memory_space<semaphore_mem>> -> memref<!tpu.dma_semaphore, #tpu.memory_space<semaphore_mem>>
      tpu.wait_dma2 semaphore(%239 : memref<!tpu.dma_semaphore, #tpu.memory_space<semaphore_mem>>) src(%235 : memref<384xf32, #tpu.memory_space<any>>) dst(%237 : memref<384xf32, #tpu.memory_space<vmem>>)
      %c0_i32_170 = arith.constant 0 : i32
      %c12_i32_171 = arith.constant 12 : i32
      %c12_i32_172 = arith.constant 12 : i32
      %c0_i32_173 = arith.constant 0 : i32
      %240 = tpu.memref_slice %arg2[%c0_i32_170, %c0_i32_173] : memref<1000x384xf32, #tpu.memory_space<any>> -> memref<1x384xf32, #tpu.memory_space<any>>
      %241 = tpu.memref_squeeze %240 : memref<1x384xf32, #tpu.memory_space<any>> -> memref<384xf32, #tpu.memory_space<any>>
      %c0_i32_174 = arith.constant 0 : i32
      %242 = tpu.memref_slice %arg9[%167, %c12_i32_171, %c0_i32_174] : memref<2x16x384xf32, #tpu.memory_space<vmem>> -> memref<1x1x384xf32, #tpu.memory_space<vmem>>
      %243 = tpu.memref_squeeze %242 : memref<1x1x384xf32, #tpu.memory_space<vmem>> -> memref<384xf32, #tpu.memory_space<vmem>>
      %244 = tpu.memref_slice %arg10[%167, %c12_i32_172] : memref<2x16x!tpu.dma_semaphore, #tpu.memory_space<semaphore_mem>> -> memref<1x1x!tpu.dma_semaphore, #tpu.memory_space<semaphore_mem>>
      %245 = tpu.memref_squeeze %244 : memref<1x1x!tpu.dma_semaphore, #tpu.memory_space<semaphore_mem>> -> memref<!tpu.dma_semaphore, #tpu.memory_space<semaphore_mem>>
      tpu.wait_dma2 semaphore(%245 : memref<!tpu.dma_semaphore, #tpu.memory_space<semaphore_mem>>) src(%241 : memref<384xf32, #tpu.memory_space<any>>) dst(%243 : memref<384xf32, #tpu.memory_space<vmem>>)
      %c0_i32_175 = arith.constant 0 : i32
      %c13_i32_176 = arith.constant 13 : i32
      %c13_i32_177 = arith.constant 13 : i32
      %c0_i32_178 = arith.constant 0 : i32
      %246 = tpu.memref_slice %arg2[%c0_i32_175, %c0_i32_178] : memref<1000x384xf32, #tpu.memory_space<any>> -> memref<1x384xf32, #tpu.memory_space<any>>
      %247 = tpu.memref_squeeze %246 : memref<1x384xf32, #tpu.memory_space<any>> -> memref<384xf32, #tpu.memory_space<any>>
      %c0_i32_179 = arith.constant 0 : i32
      %248 = tpu.memref_slice %arg9[%167, %c13_i32_176, %c0_i32_179] : memref<2x16x384xf32, #tpu.memory_space<vmem>> -> memref<1x1x384xf32, #tpu.memory_space<vmem>>
      %249 = tpu.memref_squeeze %248 : memref<1x1x384xf32, #tpu.memory_space<vmem>> -> memref<384xf32, #tpu.memory_space<vmem>>
      %250 = tpu.memref_slice %arg10[%167, %c13_i32_177] : memref<2x16x!tpu.dma_semaphore, #tpu.memory_space<semaphore_mem>> -> memref<1x1x!tpu.dma_semaphore, #tpu.memory_space<semaphore_mem>>
      %251 = tpu.memref_squeeze %250 : memref<1x1x!tpu.dma_semaphore, #tpu.memory_space<semaphore_mem>> -> memref<!tpu.dma_semaphore, #tpu.memory_space<semaphore_mem>>
      tpu.wait_dma2 semaphore(%251 : memref<!tpu.dma_semaphore, #tpu.memory_space<semaphore_mem>>) src(%247 : memref<384xf32, #tpu.memory_space<any>>) dst(%249 : memref<384xf32, #tpu.memory_space<vmem>>)
      %c0_i32_180 = arith.constant 0 : i32
      %c14_i32_181 = arith.constant 14 : i32
      %c14_i32_182 = arith.constant 14 : i32
      %c0_i32_183 = arith.constant 0 : i32
      %252 = tpu.memref_slice %arg2[%c0_i32_180, %c0_i32_183] : memref<1000x384xf32, #tpu.memory_space<any>> -> memref<1x384xf32, #tpu.memory_space<any>>
      %253 = tpu.memref_squeeze %252 : memref<1x384xf32, #tpu.memory_space<any>> -> memref<384xf32, #tpu.memory_space<any>>
      %c0_i32_184 = arith.constant 0 : i32
      %254 = tpu.memref_slice %arg9[%167, %c14_i32_181, %c0_i32_184] : memref<2x16x384xf32, #tpu.memory_space<vmem>> -> memref<1x1x384xf32, #tpu.memory_space<vmem>>
      %255 = tpu.memref_squeeze %254 : memref<1x1x384xf32, #tpu.memory_space<vmem>> -> memref<384xf32, #tpu.memory_space<vmem>>
      %256 = tpu.memref_slice %arg10[%167, %c14_i32_182] : memref<2x16x!tpu.dma_semaphore, #tpu.memory_space<semaphore_mem>> -> memref<1x1x!tpu.dma_semaphore, #tpu.memory_space<semaphore_mem>>
      %257 = tpu.memref_squeeze %256 : memref<1x1x!tpu.dma_semaphore, #tpu.memory_space<semaphore_mem>> -> memref<!tpu.dma_semaphore, #tpu.memory_space<semaphore_mem>>
      tpu.wait_dma2 semaphore(%257 : memref<!tpu.dma_semaphore, #tpu.memory_space<semaphore_mem>>) src(%253 : memref<384xf32, #tpu.memory_space<any>>) dst(%255 : memref<384xf32, #tpu.memory_space<vmem>>)
      %c0_i32_185 = arith.constant 0 : i32
      %c15_i32_186 = arith.constant 15 : i32
      %c15_i32_187 = arith.constant 15 : i32
      %c0_i32_188 = arith.constant 0 : i32
      %258 = tpu.memref_slice %arg2[%c0_i32_185, %c0_i32_188] : memref<1000x384xf32, #tpu.memory_space<any>> -> memref<1x384xf32, #tpu.memory_space<any>>
      %259 = tpu.memref_squeeze %258 : memref<1x384xf32, #tpu.memory_space<any>> -> memref<384xf32, #tpu.memory_space<any>>
      %c0_i32_189 = arith.constant 0 : i32
      %260 = tpu.memref_slice %arg9[%167, %c15_i32_186, %c0_i32_189] : memref<2x16x384xf32, #tpu.memory_space<vmem>> -> memref<1x1x384xf32, #tpu.memory_space<vmem>>
      %261 = tpu.memref_squeeze %260 : memref<1x1x384xf32, #tpu.memory_space<vmem>> -> memref<384xf32, #tpu.memory_space<vmem>>
      %262 = tpu.memref_slice %arg10[%167, %c15_i32_187] : memref<2x16x!tpu.dma_semaphore, #tpu.memory_space<semaphore_mem>> -> memref<1x1x!tpu.dma_semaphore, #tpu.memory_space<semaphore_mem>>
      %263 = tpu.memref_squeeze %262 : memref<1x1x!tpu.dma_semaphore, #tpu.memory_space<semaphore_mem>> -> memref<!tpu.dma_semaphore, #tpu.memory_space<semaphore_mem>>
      tpu.wait_dma2 semaphore(%263 : memref<!tpu.dma_semaphore, #tpu.memory_space<semaphore_mem>>) src(%259 : memref<384xf32, #tpu.memory_space<any>>) dst(%261 : memref<384xf32, #tpu.memory_space<vmem>>)
      %c1_i32_190 = arith.constant 1 : i32
      %264 = arith.addi %157, %c1_i32_190 : i32
      %c8_i32_191 = arith.constant 8 : i32
      %265 = arith.cmpi slt, %264, %c8_i32_191 : i32
      %266 = arith.extui %265 : i1 to i32
      %c0_i32_192 = arith.constant 0 : i32
      %267 = arith.cmpi ne, %266, %c0_i32_192 : i32
      scf.if %267 {
        %293 = arith.addi %0, %157 : i32
        %c1_i32_203 = arith.constant 1 : i32
        %294 = arith.addi %293, %c1_i32_203 : i32
        %c1_i32_204 = arith.constant 1 : i32
        %295 = arith.subi %c1_i32_204, %167 : i32
        %296 = arith.index_cast %294 : i32 to index
        %c0_205 = arith.constant 0 : index
        %297 = memref.load %arg1[%296, %c0_205] : memref<16x16xi32, #tpu.memory_space<smem>>
        %c0_i32_206 = arith.constant 0 : i32
        %c0_i32_207 = arith.constant 0 : i32
        %c0_i32_208 = arith.constant 0 : i32
        %298 = tpu.memref_slice %arg2[%297, %c0_i32_208] : memref<1000x384xf32, #tpu.memory_space<any>> -> memref<1x384xf32, #tpu.memory_space<any>>
        %299 = tpu.memref_squeeze %298 : memref<1x384xf32, #tpu.memory_space<any>> -> memref<384xf32, #tpu.memory_space<any>>
        %c0_i32_209 = arith.constant 0 : i32
        %300 = tpu.memref_slice %arg9[%295, %c0_i32_206, %c0_i32_209] : memref<2x16x384xf32, #tpu.memory_space<vmem>> -> memref<1x1x384xf32, #tpu.memory_space<vmem>>
        %301 = tpu.memref_squeeze %300 : memref<1x1x384xf32, #tpu.memory_space<vmem>> -> memref<384xf32, #tpu.memory_space<vmem>>
        %302 = tpu.memref_slice %arg10[%295, %c0_i32_207] : memref<2x16x!tpu.dma_semaphore, #tpu.memory_space<semaphore_mem>> -> memref<1x1x!tpu.dma_semaphore, #tpu.memory_space<semaphore_mem>>
        %303 = tpu.memref_squeeze %302 : memref<1x1x!tpu.dma_semaphore, #tpu.memory_space<semaphore_mem>> -> memref<!tpu.dma_semaphore, #tpu.memory_space<semaphore_mem>>
        tpu.enqueue_dma source(%299 : memref<384xf32, #tpu.memory_space<any>>) target(%301 : memref<384xf32, #tpu.memory_space<vmem>>) target_semaphore(%303 : memref<!tpu.dma_semaphore, #tpu.memory_space<semaphore_mem>>)
        %304 = arith.index_cast %294 : i32 to index
        %c1_210 = arith.constant 1 : index
        %305 = memref.load %arg1[%304, %c1_210] : memref<16x16xi32, #tpu.memory_space<smem>>
        %c1_i32_211 = arith.constant 1 : i32
        %c1_i32_212 = arith.constant 1 : i32
        %c0_i32_213 = arith.constant 0 : i32
        %306 = tpu.memref_slice %arg2[%305, %c0_i32_213] : memref<1000x384xf32, #tpu.memory_space<any>> -> memref<1x384xf32, #tpu.memory_space<any>>
        %307 = tpu.memref_squeeze %306 : memref<1x384xf32, #tpu.memory_space<any>> -> memref<384xf32, #tpu.memory_space<any>>
        %c0_i32_214 = arith.constant 0 : i32
        %308 = tpu.memref_slice %arg9[%295, %c1_i32_211, %c0_i32_214] : memref<2x16x384xf32, #tpu.memory_space<vmem>> -> memref<1x1x384xf32, #tpu.memory_space<vmem>>
        %309 = tpu.memref_squeeze %308 : memref<1x1x384xf32, #tpu.memory_space<vmem>> -> memref<384xf32, #tpu.memory_space<vmem>>
        %310 = tpu.memref_slice %arg10[%295, %c1_i32_212] : memref<2x16x!tpu.dma_semaphore, #tpu.memory_space<semaphore_mem>> -> memref<1x1x!tpu.dma_semaphore, #tpu.memory_space<semaphore_mem>>
        %311 = tpu.memref_squeeze %310 : memref<1x1x!tpu.dma_semaphore, #tpu.memory_space<semaphore_mem>> -> memref<!tpu.dma_semaphore, #tpu.memory_space<semaphore_mem>>
        tpu.enqueue_dma source(%307 : memref<384xf32, #tpu.memory_space<any>>) target(%309 : memref<384xf32, #tpu.memory_space<vmem>>) target_semaphore(%311 : memref<!tpu.dma_semaphore, #tpu.memory_space<semaphore_mem>>)
        %312 = arith.index_cast %294 : i32 to index
        %c2_215 = arith.constant 2 : index
        %313 = memref.load %arg1[%312, %c2_215] : memref<16x16xi32, #tpu.memory_space<smem>>
        %c2_i32_216 = arith.constant 2 : i32
        %c2_i32_217 = arith.constant 2 : i32
        %c0_i32_218 = arith.constant 0 : i32
        %314 = tpu.memref_slice %arg2[%313, %c0_i32_218] : memref<1000x384xf32, #tpu.memory_space<any>> -> memref<1x384xf32, #tpu.memory_space<any>>
        %315 = tpu.memref_squeeze %314 : memref<1x384xf32, #tpu.memory_space<any>> -> memref<384xf32, #tpu.memory_space<any>>
        %c0_i32_219 = arith.constant 0 : i32
        %316 = tpu.memref_slice %arg9[%295, %c2_i32_216, %c0_i32_219] : memref<2x16x384xf32, #tpu.memory_space<vmem>> -> memref<1x1x384xf32, #tpu.memory_space<vmem>>
        %317 = tpu.memref_squeeze %316 : memref<1x1x384xf32, #tpu.memory_space<vmem>> -> memref<384xf32, #tpu.memory_space<vmem>>
        %318 = tpu.memref_slice %arg10[%295, %c2_i32_217] : memref<2x16x!tpu.dma_semaphore, #tpu.memory_space<semaphore_mem>> -> memref<1x1x!tpu.dma_semaphore, #tpu.memory_space<semaphore_mem>>
        %319 = tpu.memref_squeeze %318 : memref<1x1x!tpu.dma_semaphore, #tpu.memory_space<semaphore_mem>> -> memref<!tpu.dma_semaphore, #tpu.memory_space<semaphore_mem>>
        tpu.enqueue_dma source(%315 : memref<384xf32, #tpu.memory_space<any>>) target(%317 : memref<384xf32, #tpu.memory_space<vmem>>) target_semaphore(%319 : memref<!tpu.dma_semaphore, #tpu.memory_space<semaphore_mem>>)
        %320 = arith.index_cast %294 : i32 to index
        %c3_220 = arith.constant 3 : index
        %321 = memref.load %arg1[%320, %c3_220] : memref<16x16xi32, #tpu.memory_space<smem>>
        %c3_i32_221 = arith.constant 3 : i32
        %c3_i32_222 = arith.constant 3 : i32
        %c0_i32_223 = arith.constant 0 : i32
        %322 = tpu.memref_slice %arg2[%321, %c0_i32_223] : memref<1000x384xf32, #tpu.memory_space<any>> -> memref<1x384xf32, #tpu.memory_space<any>>
        %323 = tpu.memref_squeeze %322 : memref<1x384xf32, #tpu.memory_space<any>> -> memref<384xf32, #tpu.memory_space<any>>
        %c0_i32_224 = arith.constant 0 : i32
        %324 = tpu.memref_slice %arg9[%295, %c3_i32_221, %c0_i32_224] : memref<2x16x384xf32, #tpu.memory_space<vmem>> -> memref<1x1x384xf32, #tpu.memory_space<vmem>>
        %325 = tpu.memref_squeeze %324 : memref<1x1x384xf32, #tpu.memory_space<vmem>> -> memref<384xf32, #tpu.memory_space<vmem>>
        %326 = tpu.memref_slice %arg10[%295, %c3_i32_222] : memref<2x16x!tpu.dma_semaphore, #tpu.memory_space<semaphore_mem>> -> memref<1x1x!tpu.dma_semaphore, #tpu.memory_space<semaphore_mem>>
        %327 = tpu.memref_squeeze %326 : memref<1x1x!tpu.dma_semaphore, #tpu.memory_space<semaphore_mem>> -> memref<!tpu.dma_semaphore, #tpu.memory_space<semaphore_mem>>
        tpu.enqueue_dma source(%323 : memref<384xf32, #tpu.memory_space<any>>) target(%325 : memref<384xf32, #tpu.memory_space<vmem>>) target_semaphore(%327 : memref<!tpu.dma_semaphore, #tpu.memory_space<semaphore_mem>>)
        %328 = arith.index_cast %294 : i32 to index
        %c4_225 = arith.constant 4 : index
        %329 = memref.load %arg1[%328, %c4_225] : memref<16x16xi32, #tpu.memory_space<smem>>
        %c4_i32_226 = arith.constant 4 : i32
        %c4_i32_227 = arith.constant 4 : i32
        %c0_i32_228 = arith.constant 0 : i32
        %330 = tpu.memref_slice %arg2[%329, %c0_i32_228] : memref<1000x384xf32, #tpu.memory_space<any>> -> memref<1x384xf32, #tpu.memory_space<any>>
        %331 = tpu.memref_squeeze %330 : memref<1x384xf32, #tpu.memory_space<any>> -> memref<384xf32, #tpu.memory_space<any>>
        %c0_i32_229 = arith.constant 0 : i32
        %332 = tpu.memref_slice %arg9[%295, %c4_i32_226, %c0_i32_229] : memref<2x16x384xf32, #tpu.memory_space<vmem>> -> memref<1x1x384xf32, #tpu.memory_space<vmem>>
        %333 = tpu.memref_squeeze %332 : memref<1x1x384xf32, #tpu.memory_space<vmem>> -> memref<384xf32, #tpu.memory_space<vmem>>
        %334 = tpu.memref_slice %arg10[%295, %c4_i32_227] : memref<2x16x!tpu.dma_semaphore, #tpu.memory_space<semaphore_mem>> -> memref<1x1x!tpu.dma_semaphore, #tpu.memory_space<semaphore_mem>>
        %335 = tpu.memref_squeeze %334 : memref<1x1x!tpu.dma_semaphore, #tpu.memory_space<semaphore_mem>> -> memref<!tpu.dma_semaphore, #tpu.memory_space<semaphore_mem>>
        tpu.enqueue_dma source(%331 : memref<384xf32, #tpu.memory_space<any>>) target(%333 : memref<384xf32, #tpu.memory_space<vmem>>) target_semaphore(%335 : memref<!tpu.dma_semaphore, #tpu.memory_space<semaphore_mem>>)
        %336 = arith.index_cast %294 : i32 to index
        %c5_230 = arith.constant 5 : index
        %337 = memref.load %arg1[%336, %c5_230] : memref<16x16xi32, #tpu.memory_space<smem>>
        %c5_i32_231 = arith.constant 5 : i32
        %c5_i32_232 = arith.constant 5 : i32
        %c0_i32_233 = arith.constant 0 : i32
        %338 = tpu.memref_slice %arg2[%337, %c0_i32_233] : memref<1000x384xf32, #tpu.memory_space<any>> -> memref<1x384xf32, #tpu.memory_space<any>>
        %339 = tpu.memref_squeeze %338 : memref<1x384xf32, #tpu.memory_space<any>> -> memref<384xf32, #tpu.memory_space<any>>
        %c0_i32_234 = arith.constant 0 : i32
        %340 = tpu.memref_slice %arg9[%295, %c5_i32_231, %c0_i32_234] : memref<2x16x384xf32, #tpu.memory_space<vmem>> -> memref<1x1x384xf32, #tpu.memory_space<vmem>>
        %341 = tpu.memref_squeeze %340 : memref<1x1x384xf32, #tpu.memory_space<vmem>> -> memref<384xf32, #tpu.memory_space<vmem>>
        %342 = tpu.memref_slice %arg10[%295, %c5_i32_232] : memref<2x16x!tpu.dma_semaphore, #tpu.memory_space<semaphore_mem>> -> memref<1x1x!tpu.dma_semaphore, #tpu.memory_space<semaphore_mem>>
        %343 = tpu.memref_squeeze %342 : memref<1x1x!tpu.dma_semaphore, #tpu.memory_space<semaphore_mem>> -> memref<!tpu.dma_semaphore, #tpu.memory_space<semaphore_mem>>
        tpu.enqueue_dma source(%339 : memref<384xf32, #tpu.memory_space<any>>) target(%341 : memref<384xf32, #tpu.memory_space<vmem>>) target_semaphore(%343 : memref<!tpu.dma_semaphore, #tpu.memory_space<semaphore_mem>>)
        %344 = arith.index_cast %294 : i32 to index
        %c6_235 = arith.constant 6 : index
        %345 = memref.load %arg1[%344, %c6_235] : memref<16x16xi32, #tpu.memory_space<smem>>
        %c6_i32_236 = arith.constant 6 : i32
        %c6_i32_237 = arith.constant 6 : i32
        %c0_i32_238 = arith.constant 0 : i32
        %346 = tpu.memref_slice %arg2[%345, %c0_i32_238] : memref<1000x384xf32, #tpu.memory_space<any>> -> memref<1x384xf32, #tpu.memory_space<any>>
        %347 = tpu.memref_squeeze %346 : memref<1x384xf32, #tpu.memory_space<any>> -> memref<384xf32, #tpu.memory_space<any>>
        %c0_i32_239 = arith.constant 0 : i32
        %348 = tpu.memref_slice %arg9[%295, %c6_i32_236, %c0_i32_239] : memref<2x16x384xf32, #tpu.memory_space<vmem>> -> memref<1x1x384xf32, #tpu.memory_space<vmem>>
        %349 = tpu.memref_squeeze %348 : memref<1x1x384xf32, #tpu.memory_space<vmem>> -> memref<384xf32, #tpu.memory_space<vmem>>
        %350 = tpu.memref_slice %arg10[%295, %c6_i32_237] : memref<2x16x!tpu.dma_semaphore, #tpu.memory_space<semaphore_mem>> -> memref<1x1x!tpu.dma_semaphore, #tpu.memory_space<semaphore_mem>>
        %351 = tpu.memref_squeeze %350 : memref<1x1x!tpu.dma_semaphore, #tpu.memory_space<semaphore_mem>> -> memref<!tpu.dma_semaphore, #tpu.memory_space<semaphore_mem>>
        tpu.enqueue_dma source(%347 : memref<384xf32, #tpu.memory_space<any>>) target(%349 : memref<384xf32, #tpu.memory_space<vmem>>) target_semaphore(%351 : memref<!tpu.dma_semaphore, #tpu.memory_space<semaphore_mem>>)
        %352 = arith.index_cast %294 : i32 to index
        %c7_240 = arith.constant 7 : index
        %353 = memref.load %arg1[%352, %c7_240] : memref<16x16xi32, #tpu.memory_space<smem>>
        %c7_i32_241 = arith.constant 7 : i32
        %c7_i32_242 = arith.constant 7 : i32
        %c0_i32_243 = arith.constant 0 : i32
        %354 = tpu.memref_slice %arg2[%353, %c0_i32_243] : memref<1000x384xf32, #tpu.memory_space<any>> -> memref<1x384xf32, #tpu.memory_space<any>>
        %355 = tpu.memref_squeeze %354 : memref<1x384xf32, #tpu.memory_space<any>> -> memref<384xf32, #tpu.memory_space<any>>
        %c0_i32_244 = arith.constant 0 : i32
        %356 = tpu.memref_slice %arg9[%295, %c7_i32_241, %c0_i32_244] : memref<2x16x384xf32, #tpu.memory_space<vmem>> -> memref<1x1x384xf32, #tpu.memory_space<vmem>>
        %357 = tpu.memref_squeeze %356 : memref<1x1x384xf32, #tpu.memory_space<vmem>> -> memref<384xf32, #tpu.memory_space<vmem>>
        %358 = tpu.memref_slice %arg10[%295, %c7_i32_242] : memref<2x16x!tpu.dma_semaphore, #tpu.memory_space<semaphore_mem>> -> memref<1x1x!tpu.dma_semaphore, #tpu.memory_space<semaphore_mem>>
        %359 = tpu.memref_squeeze %358 : memref<1x1x!tpu.dma_semaphore, #tpu.memory_space<semaphore_mem>> -> memref<!tpu.dma_semaphore, #tpu.memory_space<semaphore_mem>>
        tpu.enqueue_dma source(%355 : memref<384xf32, #tpu.memory_space<any>>) target(%357 : memref<384xf32, #tpu.memory_space<vmem>>) target_semaphore(%359 : memref<!tpu.dma_semaphore, #tpu.memory_space<semaphore_mem>>)
        %360 = arith.index_cast %294 : i32 to index
        %c8_245 = arith.constant 8 : index
        %361 = memref.load %arg1[%360, %c8_245] : memref<16x16xi32, #tpu.memory_space<smem>>
        %c8_i32_246 = arith.constant 8 : i32
        %c8_i32_247 = arith.constant 8 : i32
        %c0_i32_248 = arith.constant 0 : i32
        %362 = tpu.memref_slice %arg2[%361, %c0_i32_248] : memref<1000x384xf32, #tpu.memory_space<any>> -> memref<1x384xf32, #tpu.memory_space<any>>
        %363 = tpu.memref_squeeze %362 : memref<1x384xf32, #tpu.memory_space<any>> -> memref<384xf32, #tpu.memory_space<any>>
        %c0_i32_249 = arith.constant 0 : i32
        %364 = tpu.memref_slice %arg9[%295, %c8_i32_246, %c0_i32_249] : memref<2x16x384xf32, #tpu.memory_space<vmem>> -> memref<1x1x384xf32, #tpu.memory_space<vmem>>
        %365 = tpu.memref_squeeze %364 : memref<1x1x384xf32, #tpu.memory_space<vmem>> -> memref<384xf32, #tpu.memory_space<vmem>>
        %366 = tpu.memref_slice %arg10[%295, %c8_i32_247] : memref<2x16x!tpu.dma_semaphore, #tpu.memory_space<semaphore_mem>> -> memref<1x1x!tpu.dma_semaphore, #tpu.memory_space<semaphore_mem>>
        %367 = tpu.memref_squeeze %366 : memref<1x1x!tpu.dma_semaphore, #tpu.memory_space<semaphore_mem>> -> memref<!tpu.dma_semaphore, #tpu.memory_space<semaphore_mem>>
        tpu.enqueue_dma source(%363 : memref<384xf32, #tpu.memory_space<any>>) target(%365 : memref<384xf32, #tpu.memory_space<vmem>>) target_semaphore(%367 : memref<!tpu.dma_semaphore, #tpu.memory_space<semaphore_mem>>)
        %368 = arith.index_cast %294 : i32 to index
        %c9_250 = arith.constant 9 : index
        %369 = memref.load %arg1[%368, %c9_250] : memref<16x16xi32, #tpu.memory_space<smem>>
        %c9_i32_251 = arith.constant 9 : i32
        %c9_i32_252 = arith.constant 9 : i32
        %c0_i32_253 = arith.constant 0 : i32
        %370 = tpu.memref_slice %arg2[%369, %c0_i32_253] : memref<1000x384xf32, #tpu.memory_space<any>> -> memref<1x384xf32, #tpu.memory_space<any>>
        %371 = tpu.memref_squeeze %370 : memref<1x384xf32, #tpu.memory_space<any>> -> memref<384xf32, #tpu.memory_space<any>>
        %c0_i32_254 = arith.constant 0 : i32
        %372 = tpu.memref_slice %arg9[%295, %c9_i32_251, %c0_i32_254] : memref<2x16x384xf32, #tpu.memory_space<vmem>> -> memref<1x1x384xf32, #tpu.memory_space<vmem>>
        %373 = tpu.memref_squeeze %372 : memref<1x1x384xf32, #tpu.memory_space<vmem>> -> memref<384xf32, #tpu.memory_space<vmem>>
        %374 = tpu.memref_slice %arg10[%295, %c9_i32_252] : memref<2x16x!tpu.dma_semaphore, #tpu.memory_space<semaphore_mem>> -> memref<1x1x!tpu.dma_semaphore, #tpu.memory_space<semaphore_mem>>
        %375 = tpu.memref_squeeze %374 : memref<1x1x!tpu.dma_semaphore, #tpu.memory_space<semaphore_mem>> -> memref<!tpu.dma_semaphore, #tpu.memory_space<semaphore_mem>>
        tpu.enqueue_dma source(%371 : memref<384xf32, #tpu.memory_space<any>>) target(%373 : memref<384xf32, #tpu.memory_space<vmem>>) target_semaphore(%375 : memref<!tpu.dma_semaphore, #tpu.memory_space<semaphore_mem>>)
        %376 = arith.index_cast %294 : i32 to index
        %c10_255 = arith.constant 10 : index
        %377 = memref.load %arg1[%376, %c10_255] : memref<16x16xi32, #tpu.memory_space<smem>>
        %c10_i32_256 = arith.constant 10 : i32
        %c10_i32_257 = arith.constant 10 : i32
        %c0_i32_258 = arith.constant 0 : i32
        %378 = tpu.memref_slice %arg2[%377, %c0_i32_258] : memref<1000x384xf32, #tpu.memory_space<any>> -> memref<1x384xf32, #tpu.memory_space<any>>
        %379 = tpu.memref_squeeze %378 : memref<1x384xf32, #tpu.memory_space<any>> -> memref<384xf32, #tpu.memory_space<any>>
        %c0_i32_259 = arith.constant 0 : i32
        %380 = tpu.memref_slice %arg9[%295, %c10_i32_256, %c0_i32_259] : memref<2x16x384xf32, #tpu.memory_space<vmem>> -> memref<1x1x384xf32, #tpu.memory_space<vmem>>
        %381 = tpu.memref_squeeze %380 : memref<1x1x384xf32, #tpu.memory_space<vmem>> -> memref<384xf32, #tpu.memory_space<vmem>>
        %382 = tpu.memref_slice %arg10[%295, %c10_i32_257] : memref<2x16x!tpu.dma_semaphore, #tpu.memory_space<semaphore_mem>> -> memref<1x1x!tpu.dma_semaphore, #tpu.memory_space<semaphore_mem>>
        %383 = tpu.memref_squeeze %382 : memref<1x1x!tpu.dma_semaphore, #tpu.memory_space<semaphore_mem>> -> memref<!tpu.dma_semaphore, #tpu.memory_space<semaphore_mem>>
        tpu.enqueue_dma source(%379 : memref<384xf32, #tpu.memory_space<any>>) target(%381 : memref<384xf32, #tpu.memory_space<vmem>>) target_semaphore(%383 : memref<!tpu.dma_semaphore, #tpu.memory_space<semaphore_mem>>)
        %384 = arith.index_cast %294 : i32 to index
        %c11_260 = arith.constant 11 : index
        %385 = memref.load %arg1[%384, %c11_260] : memref<16x16xi32, #tpu.memory_space<smem>>
        %c11_i32_261 = arith.constant 11 : i32
        %c11_i32_262 = arith.constant 11 : i32
        %c0_i32_263 = arith.constant 0 : i32
        %386 = tpu.memref_slice %arg2[%385, %c0_i32_263] : memref<1000x384xf32, #tpu.memory_space<any>> -> memref<1x384xf32, #tpu.memory_space<any>>
        %387 = tpu.memref_squeeze %386 : memref<1x384xf32, #tpu.memory_space<any>> -> memref<384xf32, #tpu.memory_space<any>>
        %c0_i32_264 = arith.constant 0 : i32
        %388 = tpu.memref_slice %arg9[%295, %c11_i32_261, %c0_i32_264] : memref<2x16x384xf32, #tpu.memory_space<vmem>> -> memref<1x1x384xf32, #tpu.memory_space<vmem>>
        %389 = tpu.memref_squeeze %388 : memref<1x1x384xf32, #tpu.memory_space<vmem>> -> memref<384xf32, #tpu.memory_space<vmem>>
        %390 = tpu.memref_slice %arg10[%295, %c11_i32_262] : memref<2x16x!tpu.dma_semaphore, #tpu.memory_space<semaphore_mem>> -> memref<1x1x!tpu.dma_semaphore, #tpu.memory_space<semaphore_mem>>
        %391 = tpu.memref_squeeze %390 : memref<1x1x!tpu.dma_semaphore, #tpu.memory_space<semaphore_mem>> -> memref<!tpu.dma_semaphore, #tpu.memory_space<semaphore_mem>>
        tpu.enqueue_dma source(%387 : memref<384xf32, #tpu.memory_space<any>>) target(%389 : memref<384xf32, #tpu.memory_space<vmem>>) target_semaphore(%391 : memref<!tpu.dma_semaphore, #tpu.memory_space<semaphore_mem>>)
        %392 = arith.index_cast %294 : i32 to index
        %c12_265 = arith.constant 12 : index
        %393 = memref.load %arg1[%392, %c12_265] : memref<16x16xi32, #tpu.memory_space<smem>>
        %c12_i32_266 = arith.constant 12 : i32
        %c12_i32_267 = arith.constant 12 : i32
        %c0_i32_268 = arith.constant 0 : i32
        %394 = tpu.memref_slice %arg2[%393, %c0_i32_268] : memref<1000x384xf32, #tpu.memory_space<any>> -> memref<1x384xf32, #tpu.memory_space<any>>
        %395 = tpu.memref_squeeze %394 : memref<1x384xf32, #tpu.memory_space<any>> -> memref<384xf32, #tpu.memory_space<any>>
        %c0_i32_269 = arith.constant 0 : i32
        %396 = tpu.memref_slice %arg9[%295, %c12_i32_266, %c0_i32_269] : memref<2x16x384xf32, #tpu.memory_space<vmem>> -> memref<1x1x384xf32, #tpu.memory_space<vmem>>
        %397 = tpu.memref_squeeze %396 : memref<1x1x384xf32, #tpu.memory_space<vmem>> -> memref<384xf32, #tpu.memory_space<vmem>>
        %398 = tpu.memref_slice %arg10[%295, %c12_i32_267] : memref<2x16x!tpu.dma_semaphore, #tpu.memory_space<semaphore_mem>> -> memref<1x1x!tpu.dma_semaphore, #tpu.memory_space<semaphore_mem>>
        %399 = tpu.memref_squeeze %398 : memref<1x1x!tpu.dma_semaphore, #tpu.memory_space<semaphore_mem>> -> memref<!tpu.dma_semaphore, #tpu.memory_space<semaphore_mem>>
        tpu.enqueue_dma source(%395 : memref<384xf32, #tpu.memory_space<any>>) target(%397 : memref<384xf32, #tpu.memory_space<vmem>>) target_semaphore(%399 : memref<!tpu.dma_semaphore, #tpu.memory_space<semaphore_mem>>)
        %400 = arith.index_cast %294 : i32 to index
        %c13_270 = arith.constant 13 : index
        %401 = memref.load %arg1[%400, %c13_270] : memref<16x16xi32, #tpu.memory_space<smem>>
        %c13_i32_271 = arith.constant 13 : i32
        %c13_i32_272 = arith.constant 13 : i32
        %c0_i32_273 = arith.constant 0 : i32
        %402 = tpu.memref_slice %arg2[%401, %c0_i32_273] : memref<1000x384xf32, #tpu.memory_space<any>> -> memref<1x384xf32, #tpu.memory_space<any>>
        %403 = tpu.memref_squeeze %402 : memref<1x384xf32, #tpu.memory_space<any>> -> memref<384xf32, #tpu.memory_space<any>>
        %c0_i32_274 = arith.constant 0 : i32
        %404 = tpu.memref_slice %arg9[%295, %c13_i32_271, %c0_i32_274] : memref<2x16x384xf32, #tpu.memory_space<vmem>> -> memref<1x1x384xf32, #tpu.memory_space<vmem>>
        %405 = tpu.memref_squeeze %404 : memref<1x1x384xf32, #tpu.memory_space<vmem>> -> memref<384xf32, #tpu.memory_space<vmem>>
        %406 = tpu.memref_slice %arg10[%295, %c13_i32_272] : memref<2x16x!tpu.dma_semaphore, #tpu.memory_space<semaphore_mem>> -> memref<1x1x!tpu.dma_semaphore, #tpu.memory_space<semaphore_mem>>
        %407 = tpu.memref_squeeze %406 : memref<1x1x!tpu.dma_semaphore, #tpu.memory_space<semaphore_mem>> -> memref<!tpu.dma_semaphore, #tpu.memory_space<semaphore_mem>>
        tpu.enqueue_dma source(%403 : memref<384xf32, #tpu.memory_space<any>>) target(%405 : memref<384xf32, #tpu.memory_space<vmem>>) target_semaphore(%407 : memref<!tpu.dma_semaphore, #tpu.memory_space<semaphore_mem>>)
        %408 = arith.index_cast %294 : i32 to index
        %c14_275 = arith.constant 14 : index
        %409 = memref.load %arg1[%408, %c14_275] : memref<16x16xi32, #tpu.memory_space<smem>>
        %c14_i32_276 = arith.constant 14 : i32
        %c14_i32_277 = arith.constant 14 : i32
        %c0_i32_278 = arith.constant 0 : i32
        %410 = tpu.memref_slice %arg2[%409, %c0_i32_278] : memref<1000x384xf32, #tpu.memory_space<any>> -> memref<1x384xf32, #tpu.memory_space<any>>
        %411 = tpu.memref_squeeze %410 : memref<1x384xf32, #tpu.memory_space<any>> -> memref<384xf32, #tpu.memory_space<any>>
        %c0_i32_279 = arith.constant 0 : i32
        %412 = tpu.memref_slice %arg9[%295, %c14_i32_276, %c0_i32_279] : memref<2x16x384xf32, #tpu.memory_space<vmem>> -> memref<1x1x384xf32, #tpu.memory_space<vmem>>
        %413 = tpu.memref_squeeze %412 : memref<1x1x384xf32, #tpu.memory_space<vmem>> -> memref<384xf32, #tpu.memory_space<vmem>>
        %414 = tpu.memref_slice %arg10[%295, %c14_i32_277] : memref<2x16x!tpu.dma_semaphore, #tpu.memory_space<semaphore_mem>> -> memref<1x1x!tpu.dma_semaphore, #tpu.memory_space<semaphore_mem>>
        %415 = tpu.memref_squeeze %414 : memref<1x1x!tpu.dma_semaphore, #tpu.memory_space<semaphore_mem>> -> memref<!tpu.dma_semaphore, #tpu.memory_space<semaphore_mem>>
        tpu.enqueue_dma source(%411 : memref<384xf32, #tpu.memory_space<any>>) target(%413 : memref<384xf32, #tpu.memory_space<vmem>>) target_semaphore(%415 : memref<!tpu.dma_semaphore, #tpu.memory_space<semaphore_mem>>)
        %416 = arith.index_cast %294 : i32 to index
        %c15_280 = arith.constant 15 : index
        %417 = memref.load %arg1[%416, %c15_280] : memref<16x16xi32, #tpu.memory_space<smem>>
        %c15_i32_281 = arith.constant 15 : i32
        %c15_i32_282 = arith.constant 15 : i32
        %c0_i32_283 = arith.constant 0 : i32
        %418 = tpu.memref_slice %arg2[%417, %c0_i32_283] : memref<1000x384xf32, #tpu.memory_space<any>> -> memref<1x384xf32, #tpu.memory_space<any>>
        %419 = tpu.memref_squeeze %418 : memref<1x384xf32, #tpu.memory_space<any>> -> memref<384xf32, #tpu.memory_space<any>>
        %c0_i32_284 = arith.constant 0 : i32
        %420 = tpu.memref_slice %arg9[%295, %c15_i32_281, %c0_i32_284] : memref<2x16x384xf32, #tpu.memory_space<vmem>> -> memref<1x1x384xf32, #tpu.memory_space<vmem>>
        %421 = tpu.memref_squeeze %420 : memref<1x1x384xf32, #tpu.memory_space<vmem>> -> memref<384xf32, #tpu.memory_space<vmem>>
        %422 = tpu.memref_slice %arg10[%295, %c15_i32_282] : memref<2x16x!tpu.dma_semaphore, #tpu.memory_space<semaphore_mem>> -> memref<1x1x!tpu.dma_semaphore, #tpu.memory_space<semaphore_mem>>
        %423 = tpu.memref_squeeze %422 : memref<1x1x!tpu.dma_semaphore, #tpu.memory_space<semaphore_mem>> -> memref<!tpu.dma_semaphore, #tpu.memory_space<semaphore_mem>>
        tpu.enqueue_dma source(%419 : memref<384xf32, #tpu.memory_space<any>>) target(%421 : memref<384xf32, #tpu.memory_space<vmem>>) target_semaphore(%423 : memref<!tpu.dma_semaphore, #tpu.memory_space<semaphore_mem>>)
      } else {
      }
      %268 = arith.index_cast %167 : i32 to index
      %c0_193 = arith.constant 0 : index
      %c0_194 = arith.constant 0 : index
      %269 = vector.load %arg9[%268, %c0_193, %c0_194] : memref<2x16x384xf32, #tpu.memory_space<vmem>>, vector<1x16x384xf32>
      %270 = vector.shape_cast %269 : vector<1x16x384xf32> to vector<16x384xf32>
      %271 = arith.negf %270 : vector<16x384xf32>
      %272 = math.exp %271 : vector<16x384xf32>
      %cst_195 = arith.constant 1.000000e+00 : f32
      %273 = vector.broadcast %cst_195 : f32 to vector<16x384xf32>
      %274 = arith.addf %273, %272 : vector<16x384xf32>
      %275 = arith.divf %273, %274 : vector<16x384xf32>
      %cst_196 = arith.constant dense<0.000000e+00> : vector<16xf32>
      %276 = vector.multi_reduction <add>, %275, %cst_196 [1] : vector<16x384xf32> to vector<16xf32>
      %cst_197 = arith.constant 4.200000e+01 : f32
      %277 = vector.broadcast %cst_197 : f32 to vector<16xf32>
      %278 = arith.subf %276, %277 : vector<16xf32>
      %cst_198 = arith.constant 0.00333333341 : f32
      %279 = vector.broadcast %cst_198 : f32 to vector<16xf32>
      %280 = arith.mulf %278, %279 : vector<16xf32>
      %281 = arith.index_cast %157 : i32 to index
      %c0_199 = arith.constant 0 : index
      %282 = vector.load %arg8[%281, %c0_199] : memref<8x16xf32, #tpu.memory_space<vmem>>, vector<1x16xf32>
      %283 = vector.shape_cast %282 : vector<1x16xf32> to vector<16xf32>
      %284 = vector.shape_cast %280 : vector<16xf32> to vector<1x16xf32>
      tpu.vector_store %arg8[%281, %c0_199], %284 {strides = array<i32>} : memref<8x16xf32, #tpu.memory_space<vmem>>, vector<1x16xf32>,
      %285 = arith.mulf %270, %275 : vector<16x384xf32>
      %cst_200 = arith.constant dense<0.000000e+00> : vector<384xf32>
      %286 = vector.multi_reduction <add>, %285, %cst_200 [0] : vector<16x384xf32> to vector<384xf32>
      %cst_201 = arith.constant 6.250000e-02 : f32
      %287 = vector.broadcast %cst_201 : f32 to vector<384xf32>
      %288 = arith.mulf %286, %287 : vector<384xf32>
      %289 = arith.index_cast %157 : i32 to index
      %c0_202 = arith.constant 0 : index
      %290 = vector.load %arg11[%289, %c0_202] : memref<8x384xf32, #tpu.memory_space<vmem>>, vector<1x384xf32>
      %291 = vector.shape_cast %290 : vector<1x384xf32> to vector<384xf32>
      %292 = vector.shape_cast %288 : vector<384xf32> to vector<1x384xf32>
      tpu.vector_store %arg11[%289, %c0_202], %292 {strides = array<i32>} : memref<8x384xf32, #tpu.memory_space<vmem>>, vector<1x384xf32>,
    }
    %c8_i32_84 = arith.constant 8 : i32
    %c0_85 = arith.constant 0 : index
    %c0_86 = arith.constant 0 : index
    %130 = vector.load %arg11[%c0_85, %c0_86] : memref<8x384xf32, #tpu.memory_space<vmem>>, vector<8x384xf32>
    %c0_87 = arith.constant 0 : index
    %c0_88 = arith.constant 0 : index
    %131 = vector.load %arg3[%c0_87, %c0_88] : memref<384x128xf32, #tpu.memory_space<vmem>>, vector<384x128xf32>
    %cst = arith.constant dense<0.000000e+00> : vector<8x128xf32>
    %132 = tpu.matmul %130, %131, %cst {dimension_numbers = #tpu.dot_dimension_numbers<[1], [0], [0], [1], [0, 0, 1, 1], [], []>} : vector<8x384xf32>, vector<384x128xf32>, vector<8x128xf32> -> vector<8x128xf32>
    %c0_89 = arith.constant 0 : index
    %c0_90 = arith.constant 0 : index
    %133 = vector.load %arg4[%c0_89, %c0_90] : memref<1x128xf32, #tpu.memory_space<vmem>>, vector<1x128xf32>
    %134 = vector.broadcast %133 : vector<1x128xf32> to vector<8x128xf32>
    %135 = arith.addf %132, %134 : vector<8x128xf32>
    %c0_91 = arith.constant 0 : index
    %c0_92 = arith.constant 0 : index
    %136 = vector.load %arg5[%c0_91, %c0_92] : memref<128x128xf32, #tpu.memory_space<vmem>>, vector<128x128xf32>
    %cst_93 = arith.constant dense<0.000000e+00> : vector<8x128xf32>
    %137 = tpu.matmul %135, %136, %cst_93 {dimension_numbers = #tpu.dot_dimension_numbers<[1], [0], [0], [1], [0, 0, 1, 1], [], []>} : vector<8x128xf32>, vector<128x128xf32>, vector<8x128xf32> -> vector<8x128xf32>
    %c0_94 = arith.constant 0 : index
    %c0_95 = arith.constant 0 : index
    %138 = vector.load %arg6[%c0_94, %c0_95] : memref<1x128xf32, #tpu.memory_space<vmem>>, vector<1x128xf32>
    %139 = vector.broadcast %138 : vector<1x128xf32> to vector<8x128xf32>
    %140 = arith.addf %137, %139 : vector<8x128xf32>
    %141 = tpu.iota {dimensions = array<i32: 1>} : vector<8x128xi32>
    %c4_i32_96 = arith.constant 4 : i32
    %142 = vector.broadcast %c4_i32_96 : i32 to vector<8x128xi32>
    %143 = arith.cmpi slt, %141, %142 : vector<8x128xi32>
    %cst_97 = arith.constant -1.000000e+30 : f32
    %144 = vector.broadcast %cst_97 : f32 to vector<8x128xf32>
    %145 = arith.select %143, %140, %144 : vector<8x128xi1>, vector<8x128xf32>
    %cst_98 = arith.constant dense<0xFF800000> : vector<8xf32>
    %146 = vector.multi_reduction <maximumf>, %145, %cst_98 [1] : vector<8x128xf32> to vector<8xf32>
    %147 = vector.shape_cast %146 : vector<8xf32> to vector<8x1xf32>
    %148 = vector.broadcast %147 : vector<8x1xf32> to vector<8x128xf32>
    %149 = arith.subf %145, %148 : vector<8x128xf32>
    %150 = math.exp %149 : vector<8x128xf32>
    %cst_99 = arith.constant dense<0.000000e+00> : vector<8xf32>
    %151 = vector.multi_reduction <add>, %150, %cst_99 [1] : vector<8x128xf32> to vector<8xf32>
    %152 = vector.shape_cast %151 : vector<8xf32> to vector<8x1xf32>
    %153 = vector.broadcast %152 : vector<8x1xf32> to vector<8x128xf32>
    %154 = arith.divf %150, %153 : vector<8x128xf32>
    %c0_100 = arith.constant 0 : index
    %c0_101 = arith.constant 0 : index
    %155 = vector.load %arg7[%c0_100, %c0_101] : memref<8x128xf32, #tpu.memory_space<vmem>>, vector<8x128xf32>
    tpu.vector_store %arg7[%c0_100, %c0_101], %154 {strides = array<i32>} : memref<8x128xf32, #tpu.memory_space<vmem>>, vector<8x128xf32>,
    return
  }
  func.func @transform_1(%arg0: i32, %arg1: memref<16x16xi32, #tpu.memory_space<smem>>) -> (i32, i32) {
    %c0_i32 = arith.constant 0 : i32
    %c0_i32_0 = arith.constant 0 : i32
    %c0_i32_1 = arith.constant 0 : i32
    return %c0_i32, %c0_i32_0 : i32, i32
  }
  func.func @transform_2(%arg0: i32, %arg1: memref<16x16xi32, #tpu.memory_space<smem>>) -> (i32, i32) {
    %c0_i32 = arith.constant 0 : i32
    %c0_i32_0 = arith.constant 0 : i32
    %c0_i32_1 = arith.constant 0 : i32
    return %c0_i32, %c0_i32_0 : i32, i32
  }
  func.func @transform_3(%arg0: i32, %arg1: memref<16x16xi32, #tpu.memory_space<smem>>) -> (i32, i32) {
    %c0_i32 = arith.constant 0 : i32
    %c0_i32_0 = arith.constant 0 : i32
    %c0_i32_1 = arith.constant 0 : i32
    return %c0_i32, %c0_i32_0 : i32, i32
  }
  func.func @transform_4(%arg0: i32, %arg1: memref<16x16xi32, #tpu.memory_space<smem>>) -> (i32, i32) {
    %c0_i32 = arith.constant 0 : i32
    %c0_i32_0 = arith.constant 0 : i32
    %c0_i32_1 = arith.constant 0 : i32
    return %c0_i32, %c0_i32_0 : i32, i32
  }
  func.func @transform_5(%arg0: i32, %arg1: memref<16x16xi32, #tpu.memory_space<smem>>) -> (i32, i32) {
    %c0_i32 = arith.constant 0 : i32
    %c0_i32_0 = arith.constant 0 : i32
    return %arg0, %c0_i32 : i32, i32
  }
  func.func @transform_6(%arg0: i32, %arg1: memref<16x16xi32, #tpu.memory_space<smem>>) -> (i32, i32) {
    %c0_i32 = arith.constant 0 : i32
    %c0_i32_0 = arith.constant 0 : i32
    return %arg0, %c0_i32 : i32, i32
  }
}

</mosaic_0001>

<llo_original>
// kernel: tpu_custom_call.1
$region0: #{tpu_custom_call.1}
  #allocation0 [shape = 'u32[]', space=smem, size = 0x4, offset = 0x4, fixed_abs, tag = 'smem constant byte address 0x4 - core index']
  #allocation1 [shape = 'u32[72,128]{1,0:T(1,128)}', space=vmem, size = 0x9000, scoped, tag = 'internal scratch']
  #allocation2 [shape = 'f32[2,16,384]{2,1,0:T(8,128)}', space=vmem, size = 0xc000, scoped, tag = 'scratch operand']
  #allocation3 [shape = 's32[32]{0}', space=sflag, size = 0x80, scoped, tag = 'scratch operand']
  #allocation4 [shape = 'f32[8,384]{1,0:T(8,128)}', space=vmem, size = 0x3000, scoped, tag = 'scratch operand']
  #allocation5 [shape = 's32[1]{0}', space=sflag, size = 0x4, scoped, tag = 'scoped memory for tpu_custom_call.1']
  #allocation6 [shape = 'u8[8192]{0}', space=smem, size = 0x2000, scoped, tag = 'prefetched SMEM operand 0']
  #allocation18 [shape = 's32[]', space=sflag, size = 0x4, offset = 0, fixed_abs, tag = 'sflag constant byte address 0x0 - dummy sync flag']
  #allocation19 [shape = 's32[]', space=sflag, size = 0x4, offset = 0, fixed_abs, tag = 'sflag constant byte address 0x0 - dummy sync flag']
  #allocation20 [shape = 's32[]', space=sflag, size = 0x4, offset = 0, fixed_abs, tag = 'sflag constant byte address 0x0 - dummy sync flag']
  #allocation21 [shape = 's32[]', space=sflag, size = 0x4, offset = 0, fixed_abs, tag = 'sflag constant byte address 0x0 - dummy sync flag']
  #allocation22 [shape = 's32[]', space=sflag, size = 0x4, offset = 0, fixed_abs, tag = 'sflag constant byte address 0x0 - dummy sync flag']
  #allocation23 [shape = 's32[]', space=sflag, size = 0x4, offset = 0, fixed_abs, tag = 'sflag constant byte address 0x0 - dummy sync flag']
  #allocation24 [shape = 's32[]', space=sflag, size = 0x4, offset = 0, fixed_abs, tag = 'sflag constant byte address 0x0 - dummy sync flag']
  #allocation25 [shape = 's32[]', space=sflag, size = 0x4, offset = 0, fixed_abs, tag = 'sflag constant byte address 0x0 - dummy sync flag']
  #allocation26 [shape = 's32[]', space=sflag, size = 0x4, offset = 0, fixed_abs, tag = 'sflag constant byte address 0x0 - dummy sync flag']
  #allocation27 [shape = 's32[]', space=sflag, size = 0x4, offset = 0, fixed_abs, tag = 'sflag constant byte address 0x0 - dummy sync flag']
  #allocation28 [shape = 's32[]', space=sflag, size = 0x4, offset = 0, fixed_abs, tag = 'sflag constant byte address 0x0 - dummy sync flag']
  #allocation29 [shape = 's32[]', space=sflag, size = 0x4, offset = 0, fixed_abs, tag = 'sflag constant byte address 0x0 - dummy sync flag']
  #allocation30 [shape = 's32[]', space=sflag, size = 0x4, offset = 0, fixed_abs, tag = 'sflag constant byte address 0x0 - dummy sync flag']
  #allocation31 [shape = 's32[]', space=sflag, size = 0x4, offset = 0, fixed_abs, tag = 'sflag constant byte address 0x0 - dummy sync flag']
  #allocation32 [shape = 's32[]', space=sflag, size = 0x4, offset = 0, fixed_abs, tag = 'sflag constant byte address 0x0 - dummy sync flag']
  #allocation33 [shape = 's32[]', space=sflag, size = 0x4, offset = 0, fixed_abs, tag = 'sflag constant byte address 0x0 - dummy sync flag']
  #allocation34 [shape = 's32[]', space=sflag, size = 0x4, offset = 0, fixed_abs, tag = 'sflag constant byte address 0x0 - dummy sync flag']
  #allocation35 [shape = 's32[]', space=sflag, size = 0x4, offset = 0, fixed_abs, tag = 'sflag constant byte address 0x0 - dummy sync flag']
  #allocation36 [shape = 's32[]', space=sflag, size = 0x4, offset = 0, fixed_abs, tag = 'sflag constant byte address 0x0 - dummy sync flag']
  #allocation37 [shape = 's32[]', space=sflag, size = 0x4, offset = 0, fixed_abs, tag = 'sflag constant byte address 0x0 - dummy sync flag']
  #allocation38 [shape = 's32[]', space=sflag, size = 0x4, offset = 0, fixed_abs, tag = 'sflag constant byte address 0x0 - dummy sync flag']
  #allocation39 [shape = 's32[]', space=sflag, size = 0x4, offset = 0, fixed_abs, tag = 'sflag constant byte address 0x0 - dummy sync flag']
  #allocation40 [shape = 's32[]', space=sflag, size = 0x4, offset = 0, fixed_abs, tag = 'sflag constant byte address 0x0 - dummy sync flag']
  #allocation41 [shape = 's32[]', space=sflag, size = 0x4, offset = 0, fixed_abs, tag = 'sflag constant byte address 0x0 - dummy sync flag']
  #allocation42 [shape = 's32[]', space=sflag, size = 0x4, offset = 0, fixed_abs, tag = 'sflag constant byte address 0x0 - dummy sync flag']
  #allocation43 [shape = 's32[]', space=sflag, size = 0x4, offset = 0, fixed_abs, tag = 'sflag constant byte address 0x0 - dummy sync flag']
  #allocation44 [shape = 's32[]', space=sflag, size = 0x4, offset = 0, fixed_abs, tag = 'sflag constant byte address 0x0 - dummy sync flag']
  #allocation45 [shape = 's32[]', space=sflag, size = 0x4, offset = 0, fixed_abs, tag = 'sflag constant byte address 0x0 - dummy sync flag']
  #allocation46 [shape = 's32[]', space=sflag, size = 0x4, offset = 0, fixed_abs, tag = 'sflag constant byte address 0x0 - dummy sync flag']
  #allocation47 [shape = 's32[]', space=sflag, size = 0x4, offset = 0, fixed_abs, tag = 'sflag constant byte address 0x0 - dummy sync flag']
  #allocation48 [shape = 's32[]', space=sflag, size = 0x4, offset = 0, fixed_abs, tag = 'sflag constant byte address 0x0 - dummy sync flag']
  #allocation49 [shape = 's32[]', space=sflag, size = 0x4, offset = 0, fixed_abs, tag = 'sflag constant byte address 0x0 - dummy sync flag']
  %s0 = inlined_call_operand.hbm [shape: s32[16,16], index: 0, kind: input, shape index: {}]
  %s1 = inlined_call_operand.hbm [shape: f32[1000,384], index: 1, kind: input, shape index: {}]
  %s2 = inlined_call_operand.hbm [shape: f32[384,128], index: 2, kind: input, shape index: {}]
  %s3 = inlined_call_operand.hbm [shape: f32[1,128], index: 3, kind: input, shape index: {}]
  %s4 = inlined_call_operand.hbm [shape: f32[128,128], index: 4, kind: input, shape index: {}]
  %s5 = inlined_call_operand.hbm [shape: f32[1,128], index: 5, kind: input, shape index: {}]
  %s6 = inlined_call_operand.hbm [shape: f32[16,128], index: 6, kind: output, shape index: {0}]
  %s7 = inlined_call_operand.hbm [shape: f32[16,16], index: 7, kind: output, shape index: {1}]
  %8 = xla_tuple %s6, %s7
  %s9 = sld [smem:[#allocation0]]
  $region84: #{tpu_custom_call.1} parent=0
    _
  %s11 = ssub.s32 1, %s9
  %s12 = scalar_select 0, %s11, %s9
  %s14 = sshll.u32 %s0, 4
  %s15 = int_to_ptr.hbm [resolvable:$true] %s14
  %17 = dma.hbm_to_smem %s15, 256, [#allocation6], [#allocation5]
  %19 = dma.done [#allocation5], 256
  %20 = sfence
  $region1: #{tpu_custom_call.1} parent=0
    #allocation7 [shape = 'u8[196608]{0}', space=vmem, size = 0x30000, scoped, tag = 'input window, operand 2, single buffered']
    #allocation8 [shape = 's32[2]{0}', space=sflag, size = 0x8, scoped, tag = 'scoped memory for tpu_custom_call.1']
    #allocation9 [shape = 's32[2]{0}', space=sflag, size = 0x8, scoped, tag = 'scoped memory for tpu_custom_call.1']
    #allocation10 [shape = 'u8[512]{0}', space=vmem, size = 0x400, scoped, tag = 'input window, operand 3, single buffered']
    #allocation11 [shape = 's32[1]{0}', space=sflag, size = 0x4, scoped, tag = 'scoped memory for tpu_custom_call.1']
    #allocation12 [shape = 'u8[65536]{0}', space=vmem, size = 0x10000, scoped, tag = 'input window, operand 4, single buffered']
    #allocation13 [shape = 'u8[512]{0}', space=vmem, size = 0x400, scoped, tag = 'input window, operand 5, single buffered']
    #allocation14 [shape = 's32[1]{0}', space=sflag, size = 0x4, scoped, tag = 'scoped memory for tpu_custom_call.1']
    #allocation15 [shape = 'u8[8192]{0}', space=vmem, size = 0x2000, scoped, tag = 'output window, operand 0']
    #allocation16 [shape = 'u8[8192]{0}', space=vmem, size = 0x2000, scoped, tag = 'output window, operand 1']
    #allocation17 [shape = 's32[2]{0}', space=sflag, size = 0x8, scoped, tag = 'scoped memory for tpu_custom_call.1']
    %21 = vsyncpa [#allocation8], 0
    %22 = vsyncpa [#allocation11], 0
    %23 = vsyncpa [#allocation14], 0
    %24 = vsyncpa [#allocation9], 0
    %s25 = scalar_lea.sflag [#allocation9], 1
    %26 = vsyncpa %s25, 0
    %27 = vsyncpa [#allocation17], 0
    %s28 = scalar_lea.sflag [#allocation17], 1
    %29 = vsyncpa %s28, 0
    loop: start=0, step=1, limit=4
    $region2: #{tpu_custom_call.1} parent=1 // loop_pre_header
      _
    $region3: #{tpu_custom_call.1} parent=1 // loop_header
      %s31 = sphi 0, %s35
      %p32 = scmp.ge.s32.totalorder %s31, 4
      %s39 = sphi 0, %s39
      %s41 = sphi 0, %s39
      %s42 = sphi 0, %s41
      %s56 = sphi 0, %s42
      %s60 = sphi 0, %s60
      %s62 = sphi 0, %s60
      %s63 = sphi 0, %s62
      %s77 = sphi 0, %s63
      %s81 = sphi 0, %s81
      %s83 = sphi 0, %s81
      %s84 = sphi 0, %s83
      %s98 = sphi 0, %s84
      %s102 = sphi 0, %s102
      %s104 = sphi 0, %s102
      %s105 = sphi 0, %s104
      %s119 = sphi 0, %s105
      %s125 = sphi 0, %s127
      %s128 = sphi 0, %s125
      %s129 = sphi 0, %s128
      %s145 = sphi 0, %s129
      %s151 = sphi 0, %s153
      %s154 = sphi 0, %s151
      %s155 = sphi 0, %s154
      %s171 = sphi 0, %s155
    $region4: #{tpu_custom_call.1} parent=1 // loop_header_branch
      %34 = sbr.rel (%p32) target = $region8
    $region5: #{tpu_custom_call.1} parent=1 // loop_body
      %s36 = ssub.s32 %s31, 1
      %s37 = ssub.s32 %s31, 2
      %s38 = sadd.s32 %s31, 1
      %s40 = sadd.s32 %s39, 1
      %p43 = scmp.eq.s32.totalorder %s31, 1
      %p44 = scmp.ne.s32.totalorder %s39, %s41
      %p45 = scmp.eq.s32.totalorder %s31, 0
      %p46 = por %p44, %p45
      %p47 = scmp.ne.s32.totalorder %s39, %s41
      %p48 = scmp.eq.s32.totalorder %s36, 1
      %p49 = por %p47, %p48
      %p50 = scmp.ne.s32.totalorder %s41, %s42
      %p51 = scmp.eq.s32.totalorder %s36, 0
      %p52 = por %p50, %p51
      %p53 = scmp.ne.s32.totalorder %s41, %s42
      %p54 = scmp.eq.s32.totalorder %s37, 1
      %p55 = por %p53, %p54
      %p57 = scmp.ne.s32.totalorder %s42, %s56
      %p58 = scmp.eq.s32.totalorder %s37, 0
      %p59 = por %p57, %p58
      %s61 = sadd.s32 %s60, 1
      %p64 = scmp.eq.s32.totalorder %s31, 1
      %p65 = scmp.ne.s32.totalorder %s60, %s62
      %p66 = scmp.eq.s32.totalorder %s31, 0
      %p67 = por %p65, %p66
      %p68 = scmp.ne.s32.totalorder %s60, %s62
      %p69 = scmp.eq.s32.totalorder %s36, 1
      %p70 = por %p68, %p69
      %p71 = scmp.ne.s32.totalorder %s62, %s63
      %p72 = scmp.eq.s32.totalorder %s36, 0
      %p73 = por %p71, %p72
      %p74 = scmp.ne.s32.totalorder %s62, %s63
      %p75 = scmp.eq.s32.totalorder %s37, 1
      %p76 = por %p74, %p75
      %p78 = scmp.ne.s32.totalorder %s63, %s77
      %p79 = scmp.eq.s32.totalorder %s37, 0
      %p80 = por %p78, %p79
      %s82 = sadd.s32 %s81, 1
      %p85 = scmp.eq.s32.totalorder %s31, 1
      %p86 = scmp.ne.s32.totalorder %s81, %s83
      %p87 = scmp.eq.s32.totalorder %s31, 0
      %p88 = por %p86, %p87
      %p89 = scmp.ne.s32.totalorder %s81, %s83
      %p90 = scmp.eq.s32.totalorder %s36, 1
      %p91 = por %p89, %p90
      %p92 = scmp.ne.s32.totalorder %s83, %s84
      %p93 = scmp.eq.s32.totalorder %s36, 0
      %p94 = por %p92, %p93
      %p95 = scmp.ne.s32.totalorder %s83, %s84
      %p96 = scmp.eq.s32.totalorder %s37, 1
      %p97 = por %p95, %p96
      %p99 = scmp.ne.s32.totalorder %s84, %s98
      %p100 = scmp.eq.s32.totalorder %s37, 0
      %p101 = por %p99, %p100
      %s103 = sadd.s32 %s102, 1
      %p106 = scmp.eq.s32.totalorder %s31, 1
      %p107 = scmp.ne.s32.totalorder %s102, %s104
      %p108 = scmp.eq.s32.totalorder %s31, 0
      %p109 = por %p107, %p108
      %p110 = scmp.ne.s32.totalorder %s102, %s104
      %p111 = scmp.eq.s32.totalorder %s36, 1
      %p112 = por %p110, %p111
      %p113 = scmp.ne.s32.totalorder %s104, %s105
      %p114 = scmp.eq.s32.totalorder %s36, 0
      %p115 = por %p113, %p114
      %p116 = scmp.ne.s32.totalorder %s104, %s105
      %p117 = scmp.eq.s32.totalorder %s37, 1
      %p118 = por %p116, %p117
      %p120 = scmp.ne.s32.totalorder %s105, %s119
      %p121 = scmp.eq.s32.totalorder %s37, 0
      %p122 = por %p120, %p121
      %s123 = ssub.s32 %s31, %s38
      %p124 = scmp.eq.s32.totalorder %s123, 0
      %s126 = sadd.s32 %s125, 1
      %s127 = scalar_select %p124, %s125, %s126
      %p130 = pneg %p124
      %p131 = scmp.eq.s32.totalorder %s31, 1
      %p132 = por %p130, %p131
      %p133 = scmp.ne.s32.totalorder %s125, %s128
      %p134 = scmp.eq.s32.totalorder %s31, 0
      %p135 = por %p133, %p134
      %p136 = scmp.ne.s32.totalorder %s125, %s128
      %p137 = scmp.eq.s32.totalorder %s36, 1
      %p138 = por %p136, %p137
      %p139 = scmp.ne.s32.totalorder %s128, %s129
      %p140 = scmp.eq.s32.totalorder %s36, 0
      %p141 = por %p139, %p140
      %p142 = scmp.ne.s32.totalorder %s128, %s129
      %p143 = scmp.eq.s32.totalorder %s37, 1
      %p144 = por %p142, %p143
      %p146 = scmp.ne.s32.totalorder %s129, %s145
      %p147 = scmp.eq.s32.totalorder %s37, 0
      %p148 = por %p146, %p147
      %s149 = ssub.s32 %s31, %s38
      %p150 = scmp.eq.s32.totalorder %s149, 0
      %s152 = sadd.s32 %s151, 1
      %s153 = scalar_select %p150, %s151, %s152
      %p156 = pneg %p150
      %p157 = scmp.eq.s32.totalorder %s31, 1
      %p158 = por %p156, %p157
      %p159 = scmp.ne.s32.totalorder %s151, %s154
      %p160 = scmp.eq.s32.totalorder %s31, 0
      %p161 = por %p159, %p160
      %p162 = scmp.ne.s32.totalorder %s151, %s154
      %p163 = scmp.eq.s32.totalorder %s36, 1
      %p164 = por %p162, %p163
      %p165 = scmp.ne.s32.totalorder %s154, %s155
      %p166 = scmp.eq.s32.totalorder %s36, 0
      %p167 = por %p165, %p166
      %p168 = scmp.ne.s32.totalorder %s154, %s155
      %p169 = scmp.eq.s32.totalorder %s37, 1
      %p170 = por %p168, %p169
      %p172 = scmp.ne.s32.totalorder %s155, %s171
      %p173 = scmp.eq.s32.totalorder %s37, 0
      %p174 = por %p172, %p173
      %p175 = scmp.le.s32.totalorder 1, %s31
      %p176 = scmp.lt.s32.totalorder %s31, 3
      %p177 = pnand %p175, %p176
      %p178 = pneg %p177
      // Predicated region
      $region9: #{tpu_custom_call.1} parent=5 // pred_check
        _
      $region10: #{tpu_custom_call.1} parent=5 // pred_check_branch
        %180 = sbr.rel (%p177) target = $region12
      $region11: #{tpu_custom_call.1} parent=5 // pred_region
        %s181 = ssub.s32 %s31, 1
        // Predicated region
        $region13: #{tpu_custom_call.1} parent=11 // pred_check
          %p182 = pneg %p52
        $region14: #{tpu_custom_call.1} parent=11 // pred_check_branch
          %184 = sbr.rel (%p182) target = $region16
        $region15: #{tpu_custom_call.1} parent=11 // pred_region
          %186 = vsyncadd [#allocation8], 0
          %s187 = sshll.u32 %s2, 4
          %s188 = int_to_ptr.hbm [resolvable:$true] %s187
          %s189 = sshll.u32 [#allocation7], 4
          %s190 = int_to_ptr.vmem [resolvable:$true] %s189
          %195 = dma.hbm_to_vmem [thread:$0]  %s188, 6144, %s190, [#allocation8], 128, 128, 8
        $region16: #{tpu_custom_call.1} parent=11 // pred_fallthru
          _
        // Predicated region
        $region17: #{tpu_custom_call.1} parent=11 // pred_check
          %p196 = pneg %p73
        $region18: #{tpu_custom_call.1} parent=11 // pred_check_branch
          %198 = sbr.rel (%p196) target = $region20
        $region19: #{tpu_custom_call.1} parent=11 // pred_region
          %200 = vsyncadd [#allocation11], 0
          %s202 = sshll.u32 %s3, 4
          %s203 = int_to_ptr.hbm [resolvable:$true] %s202
          %s204 = sshll.u32 [#allocation10], 4
          %s205 = int_to_ptr.vmem [resolvable:$true] %s204
          %207 = dma.hbm_to_vmem [thread:$0]  %s203, 16, %s205, [#allocation11]
        $region20: #{tpu_custom_call.1} parent=11 // pred_fallthru
          _
        // Predicated region
        $region21: #{tpu_custom_call.1} parent=11 // pred_check
          %p208 = pneg %p94
        $region22: #{tpu_custom_call.1} parent=11 // pred_check_branch
          %210 = sbr.rel (%p208) target = $region24
        $region23: #{tpu_custom_call.1} parent=11 // pred_region
          %212 = vsyncadd [#allocation11], 0
          %s213 = sshll.u32 %s4, 4
          %s214 = int_to_ptr.hbm [resolvable:$true] %s213
          %s215 = sshll.u32 [#allocation12], 4
          %s216 = int_to_ptr.vmem [resolvable:$true] %s215
          %221 = dma.hbm_to_vmem [thread:$0]  %s214, 2048, %s216, [#allocation11], 128, 128, 8
        $region24: #{tpu_custom_call.1} parent=11 // pred_fallthru
          _
        // Predicated region
        $region25: #{tpu_custom_call.1} parent=11 // pred_check
          %p222 = pneg %p115
        $region26: #{tpu_custom_call.1} parent=11 // pred_check_branch
          %224 = sbr.rel (%p222) target = $region28
        $region27: #{tpu_custom_call.1} parent=11 // pred_region
          %226 = vsyncadd [#allocation14], 0
          %s228 = sshll.u32 %s5, 4
          %s229 = int_to_ptr.hbm [resolvable:$true] %s228
          %s230 = sshll.u32 [#allocation13], 4
          %s231 = int_to_ptr.vmem [resolvable:$true] %s230
          %233 = dma.hbm_to_vmem [thread:$0]  %s229, 16, %s231, [#allocation14]
        $region28: #{tpu_custom_call.1} parent=11 // pred_fallthru
          _
      $region12: #{tpu_custom_call.1} parent=5 // pred_fallthru
        _
      %p234 = scmp.lt.s32.totalorder %s31, 2
      // Predicated region
      $region29: #{tpu_custom_call.1} parent=5 // pred_check
        %p235 = pneg %p234
      $region30: #{tpu_custom_call.1} parent=5 // pred_check_branch
        %237 = sbr.rel (%p235) target = $region32
      $region31: #{tpu_custom_call.1} parent=5 // pred_region
        _
      $region32: #{tpu_custom_call.1} parent=5 // pred_fallthru
        _
      %p238 = scmp.le.s32.totalorder 1, %s31
      %p239 = scmp.lt.s32.totalorder %s31, 3
      %p240 = pnand %p238, %p239
      %p241 = pneg %p240
      // Predicated region
      $region33: #{tpu_custom_call.1} parent=5 // pred_check
        _
      $region34: #{tpu_custom_call.1} parent=5 // pred_check_branch
        %243 = sbr.rel (%p240) target = $region36
      $region35: #{tpu_custom_call.1} parent=5 // pred_region
        %s244 = ssub.s32 %s31, 1
        // Predicated region
        $region37: #{tpu_custom_call.1} parent=35 // pred_check
          %p245 = pneg %p52
        $region38: #{tpu_custom_call.1} parent=35 // pred_check_branch
          %247 = sbr.rel (%p245) target = $region40
        $region39: #{tpu_custom_call.1} parent=35 // pred_region
          %249 = dma.done [#allocation8], 6144
        $region40: #{tpu_custom_call.1} parent=35 // pred_fallthru
          _
        // Predicated region
        $region41: #{tpu_custom_call.1} parent=35 // pred_check
          %p250 = pneg %p73
        $region42: #{tpu_custom_call.1} parent=35 // pred_check_branch
          %252 = sbr.rel (%p250) target = $region44
        $region43: #{tpu_custom_call.1} parent=35 // pred_region
          %254 = dma.done [#allocation11], 16
        $region44: #{tpu_custom_call.1} parent=35 // pred_fallthru
          _
        // Predicated region
        $region45: #{tpu_custom_call.1} parent=35 // pred_check
          %p255 = pneg %p94
        $region46: #{tpu_custom_call.1} parent=35 // pred_check_branch
          %257 = sbr.rel (%p255) target = $region48
        $region47: #{tpu_custom_call.1} parent=35 // pred_region
          %259 = dma.done [#allocation11], 2048
        $region48: #{tpu_custom_call.1} parent=35 // pred_fallthru
          _
        // Predicated region
        $region49: #{tpu_custom_call.1} parent=35 // pred_check
          %p260 = pneg %p115
        $region50: #{tpu_custom_call.1} parent=35 // pred_check_branch
          %262 = sbr.rel (%p260) target = $region52
        $region51: #{tpu_custom_call.1} parent=35 // pred_region
          %264 = dma.done [#allocation14], 16
        $region52: #{tpu_custom_call.1} parent=35 // pred_fallthru
          _
        %p265 = pneg %p52
        %p266 = pneg %p49
        %p267 = pneg %p73
        %p268 = pneg %p70
        %p269 = pneg %p94
        %p270 = pneg %p91
        %p271 = pneg %p115
        %p272 = pneg %p112
        %p273 = pneg %p141
        %p274 = pneg %p138
        %s275 = sand.u32 %s128, 1
        %s276 = scalar_lea.sflag [#allocation9], %s275
        %s277 = sand.u32 %s128, 1
        %s278 = smul.addr %s277, 8
        %s279 = scalar_lea.vmem [#allocation15], %s278
        %p280 = pneg %p167
        %p281 = pneg %p164
        %s282 = sand.u32 %s154, 1
        %s283 = scalar_lea.sflag [#allocation17], %s282
        %s284 = sand.u32 %s154, 1
        %s285 = smul.addr %s284, 8
        %s286 = scalar_lea.vmem [#allocation16], %s285
        %s287 = smul.u32 %s36, 8
        %s288 = smul.u32 %s287, 128
        %s289 = sld [smem:[#allocation6 + %s288]]
        %s290 = sshrl.u32 %s289, 3
        %s291 = sand.u32 %s289, 7
        %s292 = smul.u32 %s290, 24
        %s293 = sadd.s32 %s291, %s292
        %s294 = scalar_lea.hbm %s1, %s293
        %s295 = sshll.u32 %s294, 4
        %s296 = int_to_ptr.hbm [resolvable:$true] %s295
        %s297 = sshll.u32 [#allocation2], 4
        %s298 = int_to_ptr.vmem [resolvable:$true] %s297
        %302 = dma.hbm_to_vmem [thread:$0]  %s296, 48, %s298, [#allocation3], 128, 128, 1
        %s303 = sadd.s32 %s288, 1
        %s304 = sld [smem:[#allocation6 + %s303]]
        %s305 = sshrl.u32 %s304, 3
        %s306 = sand.u32 %s304, 7
        %s307 = smul.u32 %s305, 24
        %s308 = sadd.s32 %s306, %s307
        %s309 = scalar_lea.hbm %s1, %s308
        %s310 = scalar_lea.vmem [#allocation2], 1
        %s311 = scalar_lea.sflag [#allocation3], 1
        %s312 = sshll.u32 %s309, 4
        %s313 = int_to_ptr.hbm [resolvable:$true] %s312
        %s314 = sshll.u32 %s310, 4
        %s315 = int_to_ptr.vmem [resolvable:$true] %s314
        %319 = dma.hbm_to_vmem [thread:$0]  %s313, 48, %s315, %s311, 128, 128, 1
        %s320 = sadd.s32 %s288, 2
        %s321 = sld [smem:[#allocation6 + %s320]]
        %s322 = sshrl.u32 %s321, 3
        %s323 = sand.u32 %s321, 7
        %s324 = smul.u32 %s322, 24
        %s325 = sadd.s32 %s323, %s324
        %s326 = scalar_lea.hbm %s1, %s325
        %s327 = scalar_lea.vmem [#allocation2], 2
        %s328 = scalar_lea.sflag [#allocation3], 2
        %s329 = sshll.u32 %s326, 4
        %s330 = int_to_ptr.hbm [resolvable:$true] %s329
        %s331 = sshll.u32 %s327, 4
        %s332 = int_to_ptr.vmem [resolvable:$true] %s331
        %336 = dma.hbm_to_vmem [thread:$0]  %s330, 48, %s332, %s328, 128, 128, 1
        %s337 = sadd.s32 %s288, 3
        %s338 = sld [smem:[#allocation6 + %s337]]
        %s339 = sshrl.u32 %s338, 3
        %s340 = sand.u32 %s338, 7
        %s341 = smul.u32 %s339, 24
        %s342 = sadd.s32 %s340, %s341
        %s343 = scalar_lea.hbm %s1, %s342
        %s344 = scalar_lea.vmem [#allocation2], 3
        %s345 = scalar_lea.sflag [#allocation3], 3
        %s346 = sshll.u32 %s343, 4
        %s347 = int_to_ptr.hbm [resolvable:$true] %s346
        %s348 = sshll.u32 %s344, 4
        %s349 = int_to_ptr.vmem [resolvable:$true] %s348
        %353 = dma.hbm_to_vmem [thread:$0]  %s347, 48, %s349, %s345, 128, 128, 1
        %s354 = sadd.s32 %s288, 4
        %s355 = sld [smem:[#allocation6 + %s354]]
        %s356 = sshrl.u32 %s355, 3
        %s357 = sand.u32 %s355, 7
        %s358 = smul.u32 %s356, 24
        %s359 = sadd.s32 %s357, %s358
        %s360 = scalar_lea.hbm %s1, %s359
        %s361 = scalar_lea.vmem [#allocation2], 4
        %s362 = scalar_lea.sflag [#allocation3], 4
        %s363 = sshll.u32 %s360, 4
        %s364 = int_to_ptr.hbm [resolvable:$true] %s363
        %s365 = sshll.u32 %s361, 4
        %s366 = int_to_ptr.vmem [resolvable:$true] %s365
        %370 = dma.hbm_to_vmem [thread:$0]  %s364, 48, %s366, %s362, 128, 128, 1
        %s371 = sadd.s32 %s288, 5
        %s372 = sld [smem:[#allocation6 + %s371]]
        %s373 = sshrl.u32 %s372, 3
        %s374 = sand.u32 %s372, 7
        %s375 = smul.u32 %s373, 24
        %s376 = sadd.s32 %s374, %s375
        %s377 = scalar_lea.hbm %s1, %s376
        %s378 = scalar_lea.vmem [#allocation2], 5
        %s379 = scalar_lea.sflag [#allocation3], 5
        %s380 = sshll.u32 %s377, 4
        %s381 = int_to_ptr.hbm [resolvable:$true] %s380
        %s382 = sshll.u32 %s378, 4
        %s383 = int_to_ptr.vmem [resolvable:$true] %s382
        %387 = dma.hbm_to_vmem [thread:$0]  %s381, 48, %s383, %s379, 128, 128, 1
        %s388 = sadd.s32 %s288, 6
        %s389 = sld [smem:[#allocation6 + %s388]]
        %s390 = sshrl.u32 %s389, 3
        %s391 = sand.u32 %s389, 7
        %s392 = smul.u32 %s390, 24
        %s393 = sadd.s32 %s391, %s392
        %s394 = scalar_lea.hbm %s1, %s393
        %s395 = scalar_lea.vmem [#allocation2], 6
        %s396 = scalar_lea.sflag [#allocation3], 6
        %s397 = sshll.u32 %s394, 4
        %s398 = int_to_ptr.hbm [resolvable:$true] %s397
        %s399 = sshll.u32 %s395, 4
        %s400 = int_to_ptr.vmem [resolvable:$true] %s399
        %404 = dma.hbm_to_vmem [thread:$0]  %s398, 48, %s400, %s396, 128, 128, 1
        %s405 = sadd.s32 %s288, 7
        %s406 = sld [smem:[#allocation6 + %s405]]
        %s407 = sshrl.u32 %s406, 3
        %s408 = sand.u32 %s406, 7
        %s409 = smul.u32 %s407, 24
        %s410 = sadd.s32 %s408, %s409
        %s411 = scalar_lea.hbm %s1, %s410
        %s412 = scalar_lea.vmem [#allocation2], 7
        %s413 = scalar_lea.sflag [#allocation3], 7
        %s414 = sshll.u32 %s411, 4
        %s415 = int_to_ptr.hbm [resolvable:$true] %s414
        %s416 = sshll.u32 %s412, 4
        %s417 = int_to_ptr.vmem [resolvable:$true] %s416
        %421 = dma.hbm_to_vmem [thread:$0]  %s415, 48, %s417, %s413, 128, 128, 1
        %s422 = sadd.s32 %s288, 8
        %s423 = sld [smem:[#allocation6 + %s422]]
        %s424 = sshrl.u32 %s423, 3
        %s425 = sand.u32 %s423, 7
        %s426 = smul.u32 %s424, 24
        %s427 = sadd.s32 %s425, %s426
        %s428 = scalar_lea.hbm %s1, %s427
        %s429 = scalar_lea.vmem [#allocation2], 24
        %s430 = scalar_lea.sflag [#allocation3], 8
        %s431 = sshll.u32 %s428, 4
        %s432 = int_to_ptr.hbm [resolvable:$true] %s431
        %s433 = sshll.u32 %s429, 4
        %s434 = int_to_ptr.vmem [resolvable:$true] %s433
        %438 = dma.hbm_to_vmem [thread:$0]  %s432, 48, %s434, %s430, 128, 128, 1
        %s439 = sadd.s32 %s288, 9
        %s440 = sld [smem:[#allocation6 + %s439]]
        %s441 = sshrl.u32 %s440, 3
        %s442 = sand.u32 %s440, 7
        %s443 = smul.u32 %s441, 24
        %s444 = sadd.s32 %s442, %s443
        %s445 = scalar_lea.hbm %s1, %s444
        %s446 = scalar_lea.vmem [#allocation2], 25
        %s447 = scalar_lea.sflag [#allocation3], 9
        %s448 = sshll.u32 %s445, 4
        %s449 = int_to_ptr.hbm [resolvable:$true] %s448
        %s450 = sshll.u32 %s446, 4
        %s451 = int_to_ptr.vmem [resolvable:$true] %s450
        %455 = dma.hbm_to_vmem [thread:$0]  %s449, 48, %s451, %s447, 128, 128, 1
        %s456 = sadd.s32 %s288, 10
        %s457 = sld [smem:[#allocation6 + %s456]]
        %s458 = sshrl.u32 %s457, 3
        %s459 = sand.u32 %s457, 7
        %s460 = smul.u32 %s458, 24
        %s461 = sadd.s32 %s459, %s460
        %s462 = scalar_lea.hbm %s1, %s461
        %s463 = scalar_lea.vmem [#allocation2], 26
        %s464 = scalar_lea.sflag [#allocation3], 10
        %s465 = sshll.u32 %s462, 4
        %s466 = int_to_ptr.hbm [resolvable:$true] %s465
        %s467 = sshll.u32 %s463, 4
        %s468 = int_to_ptr.vmem [resolvable:$true] %s467
        %472 = dma.hbm_to_vmem [thread:$0]  %s466, 48, %s468, %s464, 128, 128, 1
        %s473 = sadd.s32 %s288, 11
        %s474 = sld [smem:[#allocation6 + %s473]]
        %s475 = sshrl.u32 %s474, 3
        %s476 = sand.u32 %s474, 7
        %s477 = smul.u32 %s475, 24
        %s478 = sadd.s32 %s476, %s477
        %s479 = scalar_lea.hbm %s1, %s478
        %s480 = scalar_lea.vmem [#allocation2], 27
        %s481 = scalar_lea.sflag [#allocation3], 11
        %s482 = sshll.u32 %s479, 4
        %s483 = int_to_ptr.hbm [resolvable:$true] %s482
        %s484 = sshll.u32 %s480, 4
        %s485 = int_to_ptr.vmem [resolvable:$true] %s484
        %489 = dma.hbm_to_vmem [thread:$0]  %s483, 48, %s485, %s481, 128, 128, 1
        %s490 = sadd.s32 %s288, 12
        %s491 = sld [smem:[#allocation6 + %s490]]
        %s492 = sshrl.u32 %s491, 3
        %s493 = sand.u32 %s491, 7
        %s494 = smul.u32 %s492, 24
        %s495 = sadd.s32 %s493, %s494
        %s496 = scalar_lea.hbm %s1, %s495
        %s497 = scalar_lea.vmem [#allocation2], 28
        %s498 = scalar_lea.sflag [#allocation3], 12
        %s499 = sshll.u32 %s496, 4
        %s500 = int_to_ptr.hbm [resolvable:$true] %s499
        %s501 = sshll.u32 %s497, 4
        %s502 = int_to_ptr.vmem [resolvable:$true] %s501
        %506 = dma.hbm_to_vmem [thread:$0]  %s500, 48, %s502, %s498, 128, 128, 1
        %s507 = sadd.s32 %s288, 13
        %s508 = sld [smem:[#allocation6 + %s507]]
        %s509 = sshrl.u32 %s508, 3
        %s510 = sand.u32 %s508, 7
        %s511 = smul.u32 %s509, 24
        %s512 = sadd.s32 %s510, %s511
        %s513 = scalar_lea.hbm %s1, %s512
        %s514 = scalar_lea.vmem [#allocation2], 29
        %s515 = scalar_lea.sflag [#allocation3], 13
        %s516 = sshll.u32 %s513, 4
        %s517 = int_to_ptr.hbm [resolvable:$true] %s516
        %s518 = sshll.u32 %s514, 4
        %s519 = int_to_ptr.vmem [resolvable:$true] %s518
        %523 = dma.hbm_to_vmem [thread:$0]  %s517, 48, %s519, %s515, 128, 128, 1
        %s524 = sadd.s32 %s288, 14
        %s525 = sld [smem:[#allocation6 + %s524]]
        %s526 = sshrl.u32 %s525, 3
        %s527 = sand.u32 %s525, 7
        %s528 = smul.u32 %s526, 24
        %s529 = sadd.s32 %s527, %s528
        %s530 = scalar_lea.hbm %s1, %s529
        %s531 = scalar_lea.vmem [#allocation2], 30
        %s532 = scalar_lea.sflag [#allocation3], 14
        %s533 = sshll.u32 %s530, 4
        %s534 = int_to_ptr.hbm [resolvable:$true] %s533
        %s535 = sshll.u32 %s531, 4
        %s536 = int_to_ptr.vmem [resolvable:$true] %s535
        %540 = dma.hbm_to_vmem [thread:$0]  %s534, 48, %s536, %s532, 128, 128, 1
        %s541 = sadd.s32 %s288, 15
        %s542 = sld [smem:[#allocation6 + %s541]]
        %s543 = sshrl.u32 %s542, 3
        %s544 = sand.u32 %s542, 7
        %s545 = smul.u32 %s543, 24
        %s546 = sadd.s32 %s544, %s545
        %s547 = scalar_lea.hbm %s1, %s546
        %s548 = scalar_lea.vmem [#allocation2], 31
        %s549 = scalar_lea.sflag [#allocation3], 15
        %s550 = sshll.u32 %s547, 4
        %s551 = int_to_ptr.hbm [resolvable:$true] %s550
        %s552 = sshll.u32 %s548, 4
        %s553 = int_to_ptr.vmem [resolvable:$true] %s552
        %557 = dma.hbm_to_vmem [thread:$0]  %s551, 48, %s553, %s549, 128, 128, 1
        loop: start=0, step=1, limit=8
        $region53: #{tpu_custom_call.1} parent=35 // loop_pre_header
          _
        $region54: #{tpu_custom_call.1} parent=35 // loop_header
          %s559 = sphi 0, %s563
          %p560 = scmp.ge.s32.totalorder %s559, 8
        $region55: #{tpu_custom_call.1} parent=35 // loop_header_branch
          %562 = sbr.rel (%p560) target = $region59
        $region56: #{tpu_custom_call.1} parent=35 // loop_body
          %p564 = scmp.lt.s32.totalorder %s559, 0
          %s565 = ssub.s32 0, %s559
          %s566 = scalar_select %p564, %s565, %s559
          %s567 = sand.u32 %s566, 1
          %s568 = ssub.s32 0, %s567
          %s569 = scalar_select %p564, %s568, %s567
          %p570 = scmp.ne.s32.totalorder %s569, 0
          %p571 = scmp.lt.s32.totalorder %s569, 0
          %p572 = pnand %p571, %p570
          %p573 = pneg %p572
          %s574 = sadd.s32 %s569, 2
          %s575 = scalar_select %p573, %s574, %s569
          %s576 = smul.u32 %s575, 16
          %s577 = scalar_lea.sflag [#allocation3], %s576
          %579 = dma.done %s577, 48
          %s580 = sadd.s32 1, %s576
          %s581 = scalar_lea.sflag [#allocation3], %s580
          %583 = dma.done %s581, 48
          %s584 = sadd.s32 2, %s576
          %s585 = scalar_lea.sflag [#allocation3], %s584
          %587 = dma.done %s585, 48
          %s588 = sadd.s32 3, %s576
          %s589 = scalar_lea.sflag [#allocation3], %s588
          %591 = dma.done %s589, 48
          %s592 = sadd.s32 4, %s576
          %s593 = scalar_lea.sflag [#allocation3], %s592
          %595 = dma.done %s593, 48
          %s596 = sadd.s32 5, %s576
          %s597 = scalar_lea.sflag [#allocation3], %s596
          %599 = dma.done %s597, 48
          %s600 = sadd.s32 6, %s576
          %s601 = scalar_lea.sflag [#allocation3], %s600
          %603 = dma.done %s601, 48
          %s604 = sadd.s32 7, %s576
          %s605 = scalar_lea.sflag [#allocation3], %s604
          %607 = dma.done %s605, 48
          %s608 = sadd.s32 8, %s576
          %s609 = scalar_lea.sflag [#allocation3], %s608
          %611 = dma.done %s609, 48
          %s612 = sadd.s32 9, %s576
          %s613 = scalar_lea.sflag [#allocation3], %s612
          %615 = dma.done %s613, 48
          %s616 = sadd.s32 10, %s576
          %s617 = scalar_lea.sflag [#allocation3], %s616
          %619 = dma.done %s617, 48
          %s620 = sadd.s32 11, %s576
          %s621 = scalar_lea.sflag [#allocation3], %s620
          %623 = dma.done %s621, 48
          %s624 = sadd.s32 12, %s576
          %s625 = scalar_lea.sflag [#allocation3], %s624
          %627 = dma.done %s625, 48
          %s628 = sadd.s32 13, %s576
          %s629 = scalar_lea.sflag [#allocation3], %s628
          %631 = dma.done %s629, 48
          %s632 = sadd.s32 14, %s576
          %s633 = scalar_lea.sflag [#allocation3], %s632
          %635 = dma.done %s633, 48
          %s636 = sadd.s32 15, %s576
          %s637 = scalar_lea.sflag [#allocation3], %s636
          %639 = dma.done %s637, 48
          %s640 = sadd.s32 %s559, 1
          %p641 = scmp.lt.s32.totalorder %s640, 8
          // Predicated region
          $region60: #{tpu_custom_call.1} parent=56 // pred_check
            %p642 = pneg %p641
          $region61: #{tpu_custom_call.1} parent=56 // pred_check_branch
            %644 = sbr.rel (%p642) target = $region63
          $region62: #{tpu_custom_call.1} parent=56 // pred_region
            %s645 = sadd.s32 %s287, %s559
            %s646 = sadd.s32 %s645, 1
            %s647 = ssub.s32 1, %s575
            %s648 = smul.u32 %s646, 128
            %s649 = sld [smem:[#allocation6 + %s648]]
            %s650 = sshrl.u32 %s649, 3
            %s651 = sand.u32 %s649, 7
            %s652 = smul.u32 %s650, 24
            %s653 = sadd.s32 %s651, %s652
            %s654 = scalar_lea.hbm %s1, %s653
            %s655 = smul.u32 %s647, 48
            %s656 = scalar_lea.vmem [#allocation2], %s655
            %s657 = smul.u32 %s647, 16
            %s658 = scalar_lea.sflag [#allocation3], %s657
            %s659 = sshll.u32 %s654, 4
            %s660 = int_to_ptr.hbm [resolvable:$true] %s659
            %s661 = sshll.u32 %s656, 4
            %s662 = int_to_ptr.vmem [resolvable:$true] %s661
            %666 = dma.hbm_to_vmem [thread:$0]  %s660, 48, %s662, %s658, 128, 128, 1
            %s667 = sadd.s32 %s648, 1
            %s668 = sld [smem:[#allocation6 + %s667]]
            %s669 = sshrl.u32 %s668, 3
            %s670 = sand.u32 %s668, 7
            %s671 = smul.u32 %s669, 24
            %s672 = sadd.s32 %s670, %s671
            %s673 = scalar_lea.hbm %s1, %s672
            %s674 = sadd.s32 1, %s655
            %s675 = scalar_lea.vmem [#allocation2], %s674
            %s676 = sadd.s32 1, %s657
            %s677 = scalar_lea.sflag [#allocation3], %s676
            %s678 = sshll.u32 %s673, 4
            %s679 = int_to_ptr.hbm [resolvable:$true] %s678
            %s680 = sshll.u32 %s675, 4
            %s681 = int_to_ptr.vmem [resolvable:$true] %s680
            %685 = dma.hbm_to_vmem [thread:$0]  %s679, 48, %s681, %s677, 128, 128, 1
            %s686 = sadd.s32 %s648, 2
            %s687 = sld [smem:[#allocation6 + %s686]]
            %s688 = sshrl.u32 %s687, 3
            %s689 = sand.u32 %s687, 7
            %s690 = smul.u32 %s688, 24
            %s691 = sadd.s32 %s689, %s690
            %s692 = scalar_lea.hbm %s1, %s691
            %s693 = sadd.s32 2, %s655
            %s694 = scalar_lea.vmem [#allocation2], %s693
            %s695 = sadd.s32 2, %s657
            %s696 = scalar_lea.sflag [#allocation3], %s695
            %s697 = sshll.u32 %s692, 4
            %s698 = int_to_ptr.hbm [resolvable:$true] %s697
            %s699 = sshll.u32 %s694, 4
            %s700 = int_to_ptr.vmem [resolvable:$true] %s699
            %704 = dma.hbm_to_vmem [thread:$0]  %s698, 48, %s700, %s696, 128, 128, 1
            %s705 = sadd.s32 %s648, 3
            %s706 = sld [smem:[#allocation6 + %s705]]
            %s707 = sshrl.u32 %s706, 3
            %s708 = sand.u32 %s706, 7
            %s709 = smul.u32 %s707, 24
            %s710 = sadd.s32 %s708, %s709
            %s711 = scalar_lea.hbm %s1, %s710
            %s712 = sadd.s32 3, %s655
            %s713 = scalar_lea.vmem [#allocation2], %s712
            %s714 = sadd.s32 3, %s657
            %s715 = scalar_lea.sflag [#allocation3], %s714
            %s716 = sshll.u32 %s711, 4
            %s717 = int_to_ptr.hbm [resolvable:$true] %s716
            %s718 = sshll.u32 %s713, 4
            %s719 = int_to_ptr.vmem [resolvable:$true] %s718
            %723 = dma.hbm_to_vmem [thread:$0]  %s717, 48, %s719, %s715, 128, 128, 1
            %s724 = sadd.s32 %s648, 4
            %s725 = sld [smem:[#allocation6 + %s724]]
            %s726 = sshrl.u32 %s725, 3
            %s727 = sand.u32 %s725, 7
            %s728 = smul.u32 %s726, 24
            %s729 = sadd.s32 %s727, %s728
            %s730 = scalar_lea.hbm %s1, %s729
            %s731 = sadd.s32 4, %s655
            %s732 = scalar_lea.vmem [#allocation2], %s731
            %s733 = sadd.s32 4, %s657
            %s734 = scalar_lea.sflag [#allocation3], %s733
            %s735 = sshll.u32 %s730, 4
            %s736 = int_to_ptr.hbm [resolvable:$true] %s735
            %s737 = sshll.u32 %s732, 4
            %s738 = int_to_ptr.vmem [resolvable:$true] %s737
            %742 = dma.hbm_to_vmem [thread:$0]  %s736, 48, %s738, %s734, 128, 128, 1
            %s743 = sadd.s32 %s648, 5
            %s744 = sld [smem:[#allocation6 + %s743]]
            %s745 = sshrl.u32 %s744, 3
            %s746 = sand.u32 %s744, 7
            %s747 = smul.u32 %s745, 24
            %s748 = sadd.s32 %s746, %s747
            %s749 = scalar_lea.hbm %s1, %s748
            %s750 = sadd.s32 5, %s655
            %s751 = scalar_lea.vmem [#allocation2], %s750
            %s752 = sadd.s32 5, %s657
            %s753 = scalar_lea.sflag [#allocation3], %s752
            %s754 = sshll.u32 %s749, 4
            %s755 = int_to_ptr.hbm [resolvable:$true] %s754
            %s756 = sshll.u32 %s751, 4
            %s757 = int_to_ptr.vmem [resolvable:$true] %s756
            %761 = dma.hbm_to_vmem [thread:$0]  %s755, 48, %s757, %s753, 128, 128, 1
            %s762 = sadd.s32 %s648, 6
            %s763 = sld [smem:[#allocation6 + %s762]]
            %s764 = sshrl.u32 %s763, 3
            %s765 = sand.u32 %s763, 7
            %s766 = smul.u32 %s764, 24
            %s767 = sadd.s32 %s765, %s766
            %s768 = scalar_lea.hbm %s1, %s767
            %s769 = sadd.s32 6, %s655
            %s770 = scalar_lea.vmem [#allocation2], %s769
            %s771 = sadd.s32 6, %s657
            %s772 = scalar_lea.sflag [#allocation3], %s771
            %s773 = sshll.u32 %s768, 4
            %s774 = int_to_ptr.hbm [resolvable:$true] %s773
            %s775 = sshll.u32 %s770, 4
            %s776 = int_to_ptr.vmem [resolvable:$true] %s775
            %780 = dma.hbm_to_vmem [thread:$0]  %s774, 48, %s776, %s772, 128, 128, 1
            %s781 = sadd.s32 %s648, 7
            %s782 = sld [smem:[#allocation6 + %s781]]
            %s783 = sshrl.u32 %s782, 3
            %s784 = sand.u32 %s782, 7
            %s785 = smul.u32 %s783, 24
            %s786 = sadd.s32 %s784, %s785
            %s787 = scalar_lea.hbm %s1, %s786
            %s788 = sadd.s32 7, %s655
            %s789 = scalar_lea.vmem [#allocation2], %s788
            %s790 = sadd.s32 7, %s657
            %s791 = scalar_lea.sflag [#allocation3], %s790
            %s792 = sshll.u32 %s787, 4
            %s793 = int_to_ptr.hbm [resolvable:$true] %s792
            %s794 = sshll.u32 %s789, 4
            %s795 = int_to_ptr.vmem [resolvable:$true] %s794
            %799 = dma.hbm_to_vmem [thread:$0]  %s793, 48, %s795, %s791, 128, 128, 1
            %s800 = sadd.s32 %s648, 8
            %s801 = sld [smem:[#allocation6 + %s800]]
            %s802 = sshrl.u32 %s801, 3
            %s803 = sand.u32 %s801, 7
            %s804 = smul.u32 %s802, 24
            %s805 = sadd.s32 %s803, %s804
            %s806 = scalar_lea.hbm %s1, %s805
            %s807 = sadd.s32 24, %s655
            %s808 = scalar_lea.vmem [#allocation2], %s807
            %s809 = sadd.s32 8, %s657
            %s810 = scalar_lea.sflag [#allocation3], %s809
            %s811 = sshll.u32 %s806, 4
            %s812 = int_to_ptr.hbm [resolvable:$true] %s811
            %s813 = sshll.u32 %s808, 4
            %s814 = int_to_ptr.vmem [resolvable:$true] %s813
            %818 = dma.hbm_to_vmem [thread:$0]  %s812, 48, %s814, %s810, 128, 128, 1
            %s819 = sadd.s32 %s648, 9
            %s820 = sld [smem:[#allocation6 + %s819]]
            %s821 = sshrl.u32 %s820, 3
            %s822 = sand.u32 %s820, 7
            %s823 = smul.u32 %s821, 24
            %s824 = sadd.s32 %s822, %s823
            %s825 = scalar_lea.hbm %s1, %s824
            %s826 = sadd.s32 25, %s655
            %s827 = scalar_lea.vmem [#allocation2], %s826
            %s828 = sadd.s32 9, %s657
            %s829 = scalar_lea.sflag [#allocation3], %s828
            %s830 = sshll.u32 %s825, 4
            %s831 = int_to_ptr.hbm [resolvable:$true] %s830
            %s832 = sshll.u32 %s827, 4
            %s833 = int_to_ptr.vmem [resolvable:$true] %s832
            %837 = dma.hbm_to_vmem [thread:$0]  %s831, 48, %s833, %s829, 128, 128, 1
            %s838 = sadd.s32 %s648, 10
            %s839 = sld [smem:[#allocation6 + %s838]]
            %s840 = sshrl.u32 %s839, 3
            %s841 = sand.u32 %s839, 7
            %s842 = smul.u32 %s840, 24
            %s843 = sadd.s32 %s841, %s842
            %s844 = scalar_lea.hbm %s1, %s843
            %s845 = sadd.s32 26, %s655
            %s846 = scalar_lea.vmem [#allocation2], %s845
            %s847 = sadd.s32 10, %s657
            %s848 = scalar_lea.sflag [#allocation3], %s847
            %s849 = sshll.u32 %s844, 4
            %s850 = int_to_ptr.hbm [resolvable:$true] %s849
            %s851 = sshll.u32 %s846, 4
            %s852 = int_to_ptr.vmem [resolvable:$true] %s851
            %856 = dma.hbm_to_vmem [thread:$0]  %s850, 48, %s852, %s848, 128, 128, 1
            %s857 = sadd.s32 %s648, 11
            %s858 = sld [smem:[#allocation6 + %s857]]
            %s859 = sshrl.u32 %s858, 3
            %s860 = sand.u32 %s858, 7
            %s861 = smul.u32 %s859, 24
            %s862 = sadd.s32 %s860, %s861
            %s863 = scalar_lea.hbm %s1, %s862
            %s864 = sadd.s32 27, %s655
            %s865 = scalar_lea.vmem [#allocation2], %s864
            %s866 = sadd.s32 11, %s657
            %s867 = scalar_lea.sflag [#allocation3], %s866
            %s868 = sshll.u32 %s863, 4
            %s869 = int_to_ptr.hbm [resolvable:$true] %s868
            %s870 = sshll.u32 %s865, 4
            %s871 = int_to_ptr.vmem [resolvable:$true] %s870
            %875 = dma.hbm_to_vmem [thread:$0]  %s869, 48, %s871, %s867, 128, 128, 1
            %s876 = sadd.s32 %s648, 12
            %s877 = sld [smem:[#allocation6 + %s876]]
            %s878 = sshrl.u32 %s877, 3
            %s879 = sand.u32 %s877, 7
            %s880 = smul.u32 %s878, 24
            %s881 = sadd.s32 %s879, %s880
            %s882 = scalar_lea.hbm %s1, %s881
            %s883 = sadd.s32 28, %s655
            %s884 = scalar_lea.vmem [#allocation2], %s883
            %s885 = sadd.s32 12, %s657
            %s886 = scalar_lea.sflag [#allocation3], %s885
            %s887 = sshll.u32 %s882, 4
            %s888 = int_to_ptr.hbm [resolvable:$true] %s887
            %s889 = sshll.u32 %s884, 4
            %s890 = int_to_ptr.vmem [resolvable:$true] %s889
            %894 = dma.hbm_to_vmem [thread:$0]  %s888, 48, %s890, %s886, 128, 128, 1
            %s895 = sadd.s32 %s648, 13
            %s896 = sld [smem:[#allocation6 + %s895]]
            %s897 = sshrl.u32 %s896, 3
            %s898 = sand.u32 %s896, 7
            %s899 = smul.u32 %s897, 24
            %s900 = sadd.s32 %s898, %s899
            %s901 = scalar_lea.hbm %s1, %s900
            %s902 = sadd.s32 29, %s655
            %s903 = scalar_lea.vmem [#allocation2], %s902
            %s904 = sadd.s32 13, %s657
            %s905 = scalar_lea.sflag [#allocation3], %s904
            %s906 = sshll.u32 %s901, 4
            %s907 = int_to_ptr.hbm [resolvable:$true] %s906
            %s908 = sshll.u32 %s903, 4
            %s909 = int_to_ptr.vmem [resolvable:$true] %s908
            %913 = dma.hbm_to_vmem [thread:$0]  %s907, 48, %s909, %s905, 128, 128, 1
            %s914 = sadd.s32 %s648, 14
            %s915 = sld [smem:[#allocation6 + %s914]]
            %s916 = sshrl.u32 %s915, 3
            %s917 = sand.u32 %s915, 7
            %s918 = smul.u32 %s916, 24
            %s919 = sadd.s32 %s917, %s918
            %s920 = scalar_lea.hbm %s1, %s919
            %s921 = sadd.s32 30, %s655
            %s922 = scalar_lea.vmem [#allocation2], %s921
            %s923 = sadd.s32 14, %s657
            %s924 = scalar_lea.sflag [#allocation3], %s923
            %s925 = sshll.u32 %s920, 4
            %s926 = int_to_ptr.hbm [resolvable:$true] %s925
            %s927 = sshll.u32 %s922, 4
            %s928 = int_to_ptr.vmem [resolvable:$true] %s927
            %932 = dma.hbm_to_vmem [thread:$0]  %s926, 48, %s928, %s924, 128, 128, 1
            %s933 = sadd.s32 %s648, 15
            %s934 = sld [smem:[#allocation6 + %s933]]
            %s935 = sshrl.u32 %s934, 3
            %s936 = sand.u32 %s934, 7
            %s937 = smul.u32 %s935, 24
            %s938 = sadd.s32 %s936, %s937
            %s939 = scalar_lea.hbm %s1, %s938
            %s940 = sadd.s32 31, %s655
            %s941 = scalar_lea.vmem [#allocation2], %s940
            %s942 = sadd.s32 15, %s657
            %s943 = scalar_lea.sflag [#allocation3], %s942
            %s944 = sshll.u32 %s939, 4
            %s945 = int_to_ptr.hbm [resolvable:$true] %s944
            %s946 = sshll.u32 %s941, 4
            %s947 = int_to_ptr.vmem [resolvable:$true] %s946
            %951 = dma.hbm_to_vmem [thread:$0]  %s945, 48, %s947, %s943, 128, 128, 1
          $region63: #{tpu_custom_call.1} parent=56 // pred_fallthru
            _
          %s952 = smul.u32 %s575, 6
          %s953 = smul.addr %s952, 8
          %s954 = scalar_lea.vmem [#allocation2], %s953
          %v955 = vld [vmem:[%s954] sm:$0xff]
          %v956 = vld [vmem:[%s954 + $0x8] sm:$0xff]
          %v957 = vld [vmem:[%s954 + $0x10] sm:$0xff]
          %v958 = vld [vmem:[%s954 + $0x18] sm:$0xff]
          %v959 = vld [vmem:[%s954 + $0x20] sm:$0xff]
          %v960 = vld [vmem:[%s954 + $0x28] sm:$0xff]
          %v961 = vxor.u32 %v955, 2147483648
          %v962 = vxor.u32 %v956, 2147483648
          %v963 = vxor.u32 %v957, 2147483648
          %v964 = vxor.u32 %v958, 2147483648
          %v965 = vxor.u32 %v959, 2147483648
          %v966 = vxor.u32 %v960, 2147483648
          %v967 = vmul.f32 %v961, 1.442695
          %v968 = vpow.pop %v967
          %v969 = vmul.f32 %v962, 1.442695
          %v970 = vpow.pop %v969
          %v971 = vmul.f32 %v963, 1.442695
          %v972 = vpow.pop %v971
          %v973 = vmul.f32 %v964, 1.442695
          %v974 = vpow.pop %v973
          %v975 = vmul.f32 %v965, 1.442695
          %v976 = vpow.pop %v975
          %v977 = vmul.f32 %v966, 1.442695
          %v978 = vpow.pop %v977
          %v979 = vadd.f32 %v968, 1.0
          %v980 = vadd.f32 %v970, 1.0
          %v981 = vadd.f32 %v972, 1.0
          %v982 = vadd.f32 %v974, 1.0
          %v983 = vadd.f32 %v976, 1.0
          %v984 = vadd.f32 %v978, 1.0
          %v985 = vrcp.pop %v979
          %v986 = vmul.f32 %v979, %v985
          %v987 = vsub.f32 1.0, %v986
          %v988 = vmul.f32 %v985, %v987
          %v989 = vadd.f32 %v985, %v988
          %vm990 = vweird.f32 %v979
          %vm991 = vweird.f32 %v985
          %vm992 = vmor %vm990, %vm991
          %v993 = vsel %vm992, %v985, %v989
          %v994 = vand.u32 2147483647, %v979
          %vm995 = vcmp.eq.f32.partialorder %v994, 8.507059e+37
          %v996 = vand.u32 %v979, 2147483648
          %v997 = vor.u32 1.1754944e-38, %v996
          %v998 = vsel %vm995, %v997, %v993
          %v999 = vmul.f32 1.0, %v998
          %v1000 = vrcp.pop %v980
          %v1001 = vmul.f32 %v980, %v1000
          %v1002 = vsub.f32 1.0, %v1001
          %v1003 = vmul.f32 %v1000, %v1002
          %v1004 = vadd.f32 %v1000, %v1003
          %vm1005 = vweird.f32 %v980
          %vm1006 = vweird.f32 %v1000
          %vm1007 = vmor %vm1005, %vm1006
          %v1008 = vsel %vm1007, %v1000, %v1004
          %v1009 = vand.u32 2147483647, %v980
          %vm1010 = vcmp.eq.f32.partialorder %v1009, 8.507059e+37
          %v1011 = vand.u32 %v980, 2147483648
          %v1012 = vor.u32 1.1754944e-38, %v1011
          %v1013 = vsel %vm1010, %v1012, %v1008
          %v1014 = vmul.f32 1.0, %v1013
          %v1015 = vrcp.pop %v981
          %v1016 = vmul.f32 %v981, %v1015
          %v1017 = vsub.f32 1.0, %v1016
          %v1018 = vmul.f32 %v1015, %v1017
          %v1019 = vadd.f32 %v1015, %v1018
          %vm1020 = vweird.f32 %v981
          %vm1021 = vweird.f32 %v1015
          %vm1022 = vmor %vm1020, %vm1021
          %v1023 = vsel %vm1022, %v1015, %v1019
          %v1024 = vand.u32 2147483647, %v981
          %vm1025 = vcmp.eq.f32.partialorder %v1024, 8.507059e+37
          %v1026 = vand.u32 %v981, 2147483648
          %v1027 = vor.u32 1.1754944e-38, %v1026
          %v1028 = vsel %vm1025, %v1027, %v1023
          %v1029 = vmul.f32 1.0, %v1028
          %v1030 = vrcp.pop %v982
          %v1031 = vmul.f32 %v982, %v1030
          %v1032 = vsub.f32 1.0, %v1031
          %v1033 = vmul.f32 %v1030, %v1032
          %v1034 = vadd.f32 %v1030, %v1033
          %vm1035 = vweird.f32 %v982
          %vm1036 = vweird.f32 %v1030
          %vm1037 = vmor %vm1035, %vm1036
          %v1038 = vsel %vm1037, %v1030, %v1034
          %v1039 = vand.u32 2147483647, %v982
          %vm1040 = vcmp.eq.f32.partialorder %v1039, 8.507059e+37
          %v1041 = vand.u32 %v982, 2147483648
          %v1042 = vor.u32 1.1754944e-38, %v1041
          %v1043 = vsel %vm1040, %v1042, %v1038
          %v1044 = vmul.f32 1.0, %v1043
          %v1045 = vrcp.pop %v983
          %v1046 = vmul.f32 %v983, %v1045
          %v1047 = vsub.f32 1.0, %v1046
          %v1048 = vmul.f32 %v1045, %v1047
          %v1049 = vadd.f32 %v1045, %v1048
          %vm1050 = vweird.f32 %v983
          %vm1051 = vweird.f32 %v1045
          %vm1052 = vmor %vm1050, %vm1051
          %v1053 = vsel %vm1052, %v1045, %v1049
          %v1054 = vand.u32 2147483647, %v983
          %vm1055 = vcmp.eq.f32.partialorder %v1054, 8.507059e+37
          %v1056 = vand.u32 %v983, 2147483648
          %v1057 = vor.u32 1.1754944e-38, %v1056
          %v1058 = vsel %vm1055, %v1057, %v1053
          %v1059 = vmul.f32 1.0, %v1058
          %v1060 = vrcp.pop %v984
          %v1061 = vmul.f32 %v984, %v1060
          %v1062 = vsub.f32 1.0, %v1061
          %v1063 = vmul.f32 %v1060, %v1062
          %v1064 = vadd.f32 %v1060, %v1063
          %vm1065 = vweird.f32 %v984
          %vm1066 = vweird.f32 %v1060
          %vm1067 = vmor %vm1065, %vm1066
          %v1068 = vsel %vm1067, %v1060, %v1064
          %v1069 = vand.u32 2147483647, %v984
          %vm1070 = vcmp.eq.f32.partialorder %v1069, 8.507059e+37
          %v1071 = vand.u32 %v984, 2147483648
          %v1072 = vor.u32 1.1754944e-38, %v1071
          %v1073 = vsel %vm1070, %v1072, %v1068
          %v1074 = vmul.f32 1.0, %v1073
          %v1075 = vadd.f32 %v999, %v1014
          %v1076 = vadd.f32 %v1075, %v1029
          %1077 = vadd.xlane.f32.xlu0 %v1076
          %v1078 = vpop.xlane.xlu0 %1077
          %v1079 = vadd.f32 %v1044, %v1059
          %v1080 = vadd.f32 %v1079, %v1074
          %1081 = vadd.xlane.f32.xlu0 %v1080
          %v1082 = vpop.xlane.xlu0 %1081
          %v1083 = vsub.f32 %v1078, 42.0
          %v1084 = vsub.f32 %v1082, 42.0
          %v1085 = vmul.f32 %v1083, 0.0033333334
          %v1086 = vmul.f32 %v1084, 0.0033333334
          %v1089 = vlaneseq
          %v1090 = vand.u32 %v1089, 127
          %v1091 = vperm.slane %v1085, %v1090
          %v1092 = vadd.s32 %v1090, 4294967288
          %v1093 = vperm.slane %v1086, %v1092
          %vm1094 = vcmask 130112
          %v1095 = vsel %vm1094, %v1093, %v1091
          %s1097 = scalar_lea.vmem %s286, %s559 [#allocation16]
          %vm1098 = vcmask 122880
          %1099 = vst.msk [vmem:[%s1097] sm:$0x1] %vm1098, %v1095
          %v1100 = vmul.f32 %v955, %v999
          %v1101 = vmul.f32 %v956, %v1014
          %v1102 = vmul.f32 %v957, %v1029
          %v1103 = vmul.f32 %v958, %v1044
          %v1104 = vmul.f32 %v959, %v1059
          %v1105 = vmul.f32 %v960, %v1074
          %v1106 = vadd.f32 %v1100, %v1103
          %v1107 = vrot.slane %v1106, 4
          %v1108 = vadd.f32 %v1106, %v1107
          %v1109 = vrot.slane %v1108, 2
          %v1110 = vadd.f32 %v1108, %v1109
          %v1111 = vrot.slane %v1110, 1
          %v1112 = vadd.f32 %v1110, %v1111
          %v1113 = vadd.f32 %v1101, %v1104
          %v1114 = vrot.slane %v1113, 4
          %v1115 = vadd.f32 %v1113, %v1114
          %v1116 = vrot.slane %v1115, 2
          %v1117 = vadd.f32 %v1115, %v1116
          %v1118 = vrot.slane %v1117, 1
          %v1119 = vadd.f32 %v1117, %v1118
          %v1120 = vadd.f32 %v1102, %v1105
          %v1121 = vrot.slane %v1120, 4
          %v1122 = vadd.f32 %v1120, %v1121
          %v1123 = vrot.slane %v1122, 2
          %v1124 = vadd.f32 %v1122, %v1123
          %v1125 = vrot.slane %v1124, 1
          %v1126 = vadd.f32 %v1124, %v1125
          %v1127 = vmul.f32 %v1112, 0.0625
          %v1128 = vmul.f32 %v1119, 0.0625
          %v1129 = vmul.f32 %v1126, 0.0625
          %v1133 = vrot.slane %v1128, 7
          %v1134 = vrot.slane %v1129, 6
          %vm1135 = vcmask 1040384
          %v1136 = vsel %vm1135, %v1127, %v1133
          %vm1137 = vcmask 1041408
          %v1138 = vsel %vm1137, %v1136, %v1134
          %v1140 = vlaneseq
          %vm1141 = vcmp.ge.s32.totalorder %v1140, 0
          %vm1142 = vcmp.lt.s32.totalorder %v1140, 384
          %vm1143 = vmand %vm1141, %vm1142
          %s1144 = sshra.s32 %s559, 3
          %s1145 = sand.u32 %s559, 7
          %s1146 = sshra.s32 %s559, 3
          %s1147 = sand.u32 %s559, 7
          %s1148 = smul.u32 %s1144, 3
          %s1149 = smul.u32 %s1148, 8
          %s1150 = sadd.s32 %s1149, %s1147
          %s1151 = scalar_lea.vmem [#allocation4], %s1150
          %1152 = vst.msk [vmem:[%s1151] ss:$8 sm:$0x7] %vm1143, %v1138
          %1153 = vst.msk [vmem:[%s1151] ss:$8 sm:$0x0] %vm1143, %v1138
        $region57: #{tpu_custom_call.1} parent=35 // loop_footer
          %s563 = sadd.s32 1, %s559
        $region58: #{tpu_custom_call.1} parent=35 // loop_footer_branch
          %558 = sbr.rel target = $region54
        $region59: #{tpu_custom_call.1} parent=35 // loop_exit
          _
        %v1154 = vld [vmem:[#allocation4] sm:$0xff]
        %v1155 = vld [vmem:[#allocation4 + $0x8] sm:$0xff]
        %v1156 = vld [vmem:[#allocation4 + $0x10] sm:$0xff]
        %v1157 = vld [vmem:[#allocation7] sm:$0xff]
        %v1158 = vld [vmem:[#allocation7 + $0x8] sm:$0xff]
        %v1159 = vld [vmem:[#allocation7 + $0x10] sm:$0xff]
        %v1160 = vld [vmem:[#allocation7 + $0x18] sm:$0xff]
        %v1161 = vld [vmem:[#allocation7 + $0x20] sm:$0xff]
        %v1162 = vld [vmem:[#allocation7 + $0x28] sm:$0xff]
        %v1163 = vld [vmem:[#allocation7 + $0x30] sm:$0xff]
        %v1164 = vld [vmem:[#allocation7 + $0x38] sm:$0xff]
        %v1165 = vld [vmem:[#allocation7 + $0x40] sm:$0xff]
        %v1166 = vld [vmem:[#allocation7 + $0x48] sm:$0xff]
        %v1167 = vld [vmem:[#allocation7 + $0x50] sm:$0xff]
        %v1168 = vld [vmem:[#allocation7 + $0x58] sm:$0xff]
        %v1169 = vld [vmem:[#allocation7 + $0x60] sm:$0xff]
        %v1170 = vld [vmem:[#allocation7 + $0x68] sm:$0xff]
        %v1171 = vld [vmem:[#allocation7 + $0x70] sm:$0xff]
        %v1172 = vld [vmem:[#allocation7 + $0x78] sm:$0xff]
        %v1173 = vld [vmem:[#allocation7 + $0x80] sm:$0xff]
        %v1174 = vld [vmem:[#allocation7 + $0x88] sm:$0xff]
        %v1175 = vld [vmem:[#allocation7 + $0x90] sm:$0xff]
        %v1176 = vld [vmem:[#allocation7 + $0x98] sm:$0xff]
        %v1177 = vld [vmem:[#allocation7 + $0xa0] sm:$0xff]
        %v1178 = vld [vmem:[#allocation7 + $0xa8] sm:$0xff]
        %v1179 = vld [vmem:[#allocation7 + $0xb0] sm:$0xff]
        %v1180 = vld [vmem:[#allocation7 + $0xb8] sm:$0xff]
        %v1181 = vld [vmem:[#allocation7 + $0xc0] sm:$0xff]
        %v1182 = vld [vmem:[#allocation7 + $0xc8] sm:$0xff]
        %v1183 = vld [vmem:[#allocation7 + $0xd0] sm:$0xff]
        %v1184 = vld [vmem:[#allocation7 + $0xd8] sm:$0xff]
        %v1185 = vld [vmem:[#allocation7 + $0xe0] sm:$0xff]
        %v1186 = vld [vmem:[#allocation7 + $0xe8] sm:$0xff]
        %v1187 = vld [vmem:[#allocation7 + $0xf0] sm:$0xff]
        %v1188 = vld [vmem:[#allocation7 + $0xf8] sm:$0xff]
        %v1189 = vld [vmem:[#allocation7 + $0x100] sm:$0xff]
        %v1190 = vld [vmem:[#allocation7 + $0x108] sm:$0xff]
        %v1191 = vld [vmem:[#allocation7 + $0x110] sm:$0xff]
        %v1192 = vld [vmem:[#allocation7 + $0x118] sm:$0xff]
        %v1193 = vld [vmem:[#allocation7 + $0x120] sm:$0xff]
        %v1194 = vld [vmem:[#allocation7 + $0x128] sm:$0xff]
        %v1195 = vld [vmem:[#allocation7 + $0x130] sm:$0xff]
        %v1196 = vld [vmem:[#allocation7 + $0x138] sm:$0xff]
        %v1197 = vld [vmem:[#allocation7 + $0x140] sm:$0xff]
        %v1198 = vld [vmem:[#allocation7 + $0x148] sm:$0xff]
        %v1199 = vld [vmem:[#allocation7 + $0x150] sm:$0xff]
        %v1200 = vld [vmem:[#allocation7 + $0x158] sm:$0xff]
        %v1201 = vld [vmem:[#allocation7 + $0x160] sm:$0xff]
        %v1202 = vld [vmem:[#allocation7 + $0x168] sm:$0xff]
        %v1203 = vld [vmem:[#allocation7 + $0x170] sm:$0xff]
        %v1204 = vld [vmem:[#allocation7 + $0x178] sm:$0xff]
        %v1205 = vld [vmem:[#allocation10] sm:$0x1]
        %v1207 = vperm.slane %v1205, 0
        %1209 = vmatpush.msra.mxu0 %v1172
        %1210 = vmatpush.msra.mxu0 %v1171
        %1211 = vmatpush.msra.mxu0 %v1170
        %1212 = vmatpush.msra.mxu0 %v1169
        %1213 = vmatpush.msra.mxu0 %v1168
        %1214 = vmatpush.msra.mxu0 %v1167
        %1215 = vmatpush.msra.mxu0 %v1166
        %1216 = vmatpush.msra.mxu0 %v1165
        %1217 = vmatpush.msra.mxu0 %v1164
        %1218 = vmatpush.msra.mxu0 %v1163
        %1219 = vmatpush.msra.mxu0 %v1162
        %1220 = vmatpush.msra.mxu0 %v1161
        %1221 = vmatpush.msra.mxu0 %v1160
        %1222 = vmatpush.msra.mxu0 %v1159
        %1223 = vmatpush.msra.mxu0 %v1158
        %1224 = vmatpush.msra.mxu0 %v1157
        %1225 = vmatmul.f32.gmra.mxu0 %v1154
        %v1226 = vpop.f32.mrf.mxu0
        %v1227 = vadd.f32 %v1207, %v1226
        %1228 = vdwg.mxu0
        %1229 = vmatpush.msra.mxu0 %v1188
        %1230 = vmatpush.msra.mxu0 %v1187
        %1231 = vmatpush.msra.mxu0 %v1186
        %1232 = vmatpush.msra.mxu0 %v1185
        %1233 = vmatpush.msra.mxu0 %v1184
        %1234 = vmatpush.msra.mxu0 %v1183
        %1235 = vmatpush.msra.mxu0 %v1182
        %1236 = vmatpush.msra.mxu0 %v1181
        %1237 = vmatpush.msra.mxu0 %v1180
        %1238 = vmatpush.msra.mxu0 %v1179
        %1239 = vmatpush.msra.mxu0 %v1178
        %1240 = vmatpush.msra.mxu0 %v1177
        %1241 = vmatpush.msra.mxu0 %v1176
        %1242 = vmatpush.msra.mxu0 %v1175
        %1243 = vmatpush.msra.mxu0 %v1174
        %1244 = vmatpush.msra.mxu0 %v1173
        %1245 = vmatmul.f32.gmra.mxu0 %v1155
        %v1246 = vpop.f32.mrf.mxu0
        %v1247 = vadd.f32 %v1227, %v1246
        %1248 = vdwg.mxu0
        %1249 = vmatpush.msra.mxu0 %v1204
        %1250 = vmatpush.msra.mxu0 %v1203
        %1251 = vmatpush.msra.mxu0 %v1202
        %1252 = vmatpush.msra.mxu0 %v1201
        %1253 = vmatpush.msra.mxu0 %v1200
        %1254 = vmatpush.msra.mxu0 %v1199
        %1255 = vmatpush.msra.mxu0 %v1198
        %1256 = vmatpush.msra.mxu0 %v1197
        %1257 = vmatpush.msra.mxu0 %v1196
        %1258 = vmatpush.msra.mxu0 %v1195
        %1259 = vmatpush.msra.mxu0 %v1194
        %1260 = vmatpush.msra.mxu0 %v1193
        %1261 = vmatpush.msra.mxu0 %v1192
        %1262 = vmatpush.msra.mxu0 %v1191
        %1263 = vmatpush.msra.mxu0 %v1190
        %1264 = vmatpush.msra.mxu0 %v1189
        %1265 = vmatmul.f32.gmra.mxu0 %v1156
        %v1266 = vpop.f32.mrf.mxu0
        %v1267 = vadd.f32 %v1247, %v1266
        %1268 = vdwg.mxu0
        %v1269 = vld [vmem:[#allocation12] sm:$0xff]
        %v1270 = vld [vmem:[#allocation12 + $0x8] sm:$0xff]
        %v1271 = vld [vmem:[#allocation12 + $0x10] sm:$0xff]
        %v1272 = vld [vmem:[#allocation12 + $0x18] sm:$0xff]
        %v1273 = vld [vmem:[#allocation12 + $0x20] sm:$0xff]
        %v1274 = vld [vmem:[#allocation12 + $0x28] sm:$0xff]
        %v1275 = vld [vmem:[#allocation12 + $0x30] sm:$0xff]
        %v1276 = vld [vmem:[#allocation12 + $0x38] sm:$0xff]
        %v1277 = vld [vmem:[#allocation12 + $0x40] sm:$0xff]
        %v1278 = vld [vmem:[#allocation12 + $0x48] sm:$0xff]
        %v1279 = vld [vmem:[#allocation12 + $0x50] sm:$0xff]
        %v1280 = vld [vmem:[#allocation12 + $0x58] sm:$0xff]
        %v1281 = vld [vmem:[#allocation12 + $0x60] sm:$0xff]
        %v1282 = vld [vmem:[#allocation12 + $0x68] sm:$0xff]
        %v1283 = vld [vmem:[#allocation12 + $0x70] sm:$0xff]
        %v1284 = vld [vmem:[#allocation12 + $0x78] sm:$0xff]
        %v1285 = vld [vmem:[#allocation13] sm:$0x1]
        %v1287 = vperm.slane %v1285, 0
        %1289 = vmatpush.msra.mxu0 %v1284
        %1290 = vmatpush.msra.mxu0 %v1283
        %1291 = vmatpush.msra.mxu0 %v1282
        %1292 = vmatpush.msra.mxu0 %v1281
        %1293 = vmatpush.msra.mxu0 %v1280
        %1294 = vmatpush.msra.mxu0 %v1279
        %1295 = vmatpush.msra.mxu0 %v1278
        %1296 = vmatpush.msra.mxu0 %v1277
        %1297 = vmatpush.msra.mxu0 %v1276
        %1298 = vmatpush.msra.mxu0 %v1275
        %1299 = vmatpush.msra.mxu0 %v1274
        %1300 = vmatpush.msra.mxu0 %v1273
        %1301 = vmatpush.msra.mxu0 %v1272
        %1302 = vmatpush.msra.mxu0 %v1271
        %1303 = vmatpush.msra.mxu0 %v1270
        %1304 = vmatpush.msra.mxu0 %v1269
        %1305 = vmatmul.f32.gmra.mxu0 %v1267
        %v1306 = vpop.f32.mrf.mxu0
        %v1307 = vadd.f32 %v1287, %v1306
        %1308 = vdwg.mxu0
        %v1309 = vlaneseq
        %v1310 = vand.u32 %v1309, 127
        %vm1311 = vcmp.lt.s32.totalorder %v1310, 4
        %v1312 = vsel %vm1311, %v1307, -1e+30
        %1313 = vmax.xlane.f32.xlu0 %v1312
        %v1314 = vpop.xlane.xlu0 %1313
        %v1315 = vsub.f32 %v1312, %v1314
        %v1316 = vmul.f32 %v1315, 1.442695
        %v1317 = vpow.pop %v1316
        %1318 = vadd.xlane.f32.xlu0 %v1317
        %v1319 = vpop.xlane.xlu0 %1318
        %v1320 = vrcp.pop %v1319
        %v1321 = vmul.f32 %v1319, %v1320
        %v1322 = vsub.f32 1.0, %v1321
        %v1323 = vmul.f32 %v1320, %v1322
        %v1324 = vadd.f32 %v1320, %v1323
        %vm1325 = vweird.f32 %v1319
        %vm1326 = vweird.f32 %v1320
        %vm1327 = vmor %vm1325, %vm1326
        %v1328 = vsel %vm1327, %v1320, %v1324
        %v1329 = vand.u32 2147483647, %v1319
        %vm1330 = vcmp.eq.f32.partialorder %v1329, 8.507059e+37
        %v1331 = vand.u32 %v1319, 2147483648
        %v1332 = vor.u32 1.1754944e-38, %v1331
        %v1333 = vsel %vm1330, %v1332, %v1328
        %v1334 = vmul.f32 %v1317, %v1333
        %1335 = vst [vmem:[%s279] sm:$0xff] %v1334
        %s1336 = sand.u32 %s128, 1
        %s1337 = scalar_lea.sflag [#allocation9], %s1336
        %s1338 = sand.u32 %s128, 1
        %s1339 = smul.addr %s1338, 8
        %s1340 = scalar_lea.vmem [#allocation15], %s1339
        %s1341 = sand.u32 %s154, 1
        %s1342 = scalar_lea.sflag [#allocation17], %s1341
        %s1343 = sand.u32 %s154, 1
        %s1344 = smul.addr %s1343, 8
        %s1345 = scalar_lea.vmem [#allocation16], %s1344
        // Predicated region
        $region64: #{tpu_custom_call.1} parent=35 // pred_check
          %p1346 = pneg %p138
        $region65: #{tpu_custom_call.1} parent=35 // pred_check_branch
          %1348 = sbr.rel (%p1346) target = $region67
        $region66: #{tpu_custom_call.1} parent=35 // pred_region
          %1350 = vsyncadd %s1337, 0
          %s1351 = smul.addr %s36, 8
          %s1352 = scalar_lea.hbm %s6, %s1351
          %s1354 = sshll.u32 %s1340, 4
          %s1355 = int_to_ptr.vmem [resolvable:$true] %s1354
          %s1356 = sshll.u32 %s1352, 4
          %s1357 = int_to_ptr.hbm [resolvable:$true] %s1356
          %1359 = dma.vmem_to_hbm [thread:$0]  %s1355, 128, %s1357, %s1337
        $region67: #{tpu_custom_call.1} parent=35 // pred_fallthru
          _
        // Predicated region
        $region68: #{tpu_custom_call.1} parent=35 // pred_check
          %p1360 = pneg %p164
        $region69: #{tpu_custom_call.1} parent=35 // pred_check_branch
          %1362 = sbr.rel (%p1360) target = $region71
        $region70: #{tpu_custom_call.1} parent=35 // pred_region
          %1364 = vsyncadd %s1342, 0
          %s1365 = smul.addr %s36, 8
          %s1366 = scalar_lea.hbm %s7, %s1365
          %s1368 = sshll.u32 %s1345, 4
          %s1369 = int_to_ptr.vmem [resolvable:$true] %s1368
          %s1370 = sshll.u32 %s1366, 4
          %s1371 = int_to_ptr.hbm [resolvable:$true] %s1370
          %1373 = dma.vmem_to_hbm [thread:$0]  %s1369, 128, %s1371, %s1342
        $region71: #{tpu_custom_call.1} parent=35 // pred_fallthru
          _
      $region36: #{tpu_custom_call.1} parent=5 // pred_fallthru
        _
      %p1374 = scmp.le.s32.totalorder 2, %s31
      // Predicated region
      $region72: #{tpu_custom_call.1} parent=5 // pred_check
        %p1375 = pneg %p1374
      $region73: #{tpu_custom_call.1} parent=5 // pred_check_branch
        %1377 = sbr.rel (%p1375) target = $region75
      $region74: #{tpu_custom_call.1} parent=5 // pred_region
        %s1378 = ssub.s32 %s31, 2
        // Predicated region
        $region76: #{tpu_custom_call.1} parent=74 // pred_check
          %p1379 = pneg %p144
        $region77: #{tpu_custom_call.1} parent=74 // pred_check_branch
          %1381 = sbr.rel (%p1379) target = $region79
        $region78: #{tpu_custom_call.1} parent=74 // pred_region
          %s1382 = sand.u32 %s129, 1
          %s1383 = scalar_lea.sflag [#allocation9], %s1382
          %s1384 = sand.u32 %s129, 1
          %s1385 = smul.addr %s1384, 8
          %s1386 = scalar_lea.vmem [#allocation15], %s1385
          %1388 = dma.done %s1383, 128
        $region79: #{tpu_custom_call.1} parent=74 // pred_fallthru
          _
        // Predicated region
        $region80: #{tpu_custom_call.1} parent=74 // pred_check
          %p1389 = pneg %p170
        $region81: #{tpu_custom_call.1} parent=74 // pred_check_branch
          %1391 = sbr.rel (%p1389) target = $region83
        $region82: #{tpu_custom_call.1} parent=74 // pred_region
          %s1392 = sand.u32 %s155, 1
          %s1393 = scalar_lea.sflag [#allocation17], %s1392
          %s1394 = sand.u32 %s155, 1
          %s1395 = smul.addr %s1394, 8
          %s1396 = scalar_lea.vmem [#allocation16], %s1395
          %1398 = dma.done %s1393, 128
        $region83: #{tpu_custom_call.1} parent=74 // pred_fallthru
          _
      $region75: #{tpu_custom_call.1} parent=5 // pred_fallthru
        _
    $region6: #{tpu_custom_call.1} parent=1 // loop_footer
      %s35 = sadd.s32 1, %s31
    $region7: #{tpu_custom_call.1} parent=1 // loop_footer_branch
      %30 = sbr.rel target = $region3
    $region8: #{tpu_custom_call.1} parent=1 // loop_exit
      _
    %1399 = vsyncpa [#allocation8], 1
    %s1400 = scalar_lea.sflag [#allocation8], 1
    %1401 = vsyncpa %s1400, 1
    %1402 = vsyncpa [#allocation11], 1
    %1403 = vsyncpa [#allocation14], 1
    %1404 = vsyncpa [#allocation9], 1
    %s1405 = scalar_lea.sflag [#allocation9], 1
    %1406 = vsyncpa %s1405, 1
    %1407 = vsyncpa [#allocation17], 1
    %s1408 = scalar_lea.sflag [#allocation17], 1
    %1409 = vsyncpa %s1408, 1
  %1410 = vsyncmov [#allocation3]
  %s1411 = vpop.sfrf %1410
  %p1412 = scmp.eq.s32.totalorder %s1411, 0
  %p1413 = pneg %p1412
  %1415 = shalt.err (%p1413)
  %s1416 = scalar_lea.sflag [#allocation3], 1
  %1417 = vsyncmov %s1416
  %s1418 = vpop.sfrf %1417
  %p1419 = scmp.eq.s32.totalorder %s1418, 0
  %p1420 = pneg %p1419
  %1422 = shalt.err (%p1420)
  %s1423 = scalar_lea.sflag [#allocation3], 2
  %1424 = vsyncmov %s1423
  %s1425 = vpop.sfrf %1424
  %p1426 = scmp.eq.s32.totalorder %s1425, 0
  %p1427 = pneg %p1426
  %1429 = shalt.err (%p1427)
  %s1430 = scalar_lea.sflag [#allocation3], 3
  %1431 = vsyncmov %s1430
  %s1432 = vpop.sfrf %1431
  %p1433 = scmp.eq.s32.totalorder %s1432, 0
  %p1434 = pneg %p1433
  %1436 = shalt.err (%p1434)
  %s1437 = scalar_lea.sflag [#allocation3], 4
  %1438 = vsyncmov %s1437
  %s1439 = vpop.sfrf %1438
  %p1440 = scmp.eq.s32.totalorder %s1439, 0
  %p1441 = pneg %p1440
  %1443 = shalt.err (%p1441)
  %s1444 = scalar_lea.sflag [#allocation3], 5
  %1445 = vsyncmov %s1444
  %s1446 = vpop.sfrf %1445
  %p1447 = scmp.eq.s32.totalorder %s1446, 0
  %p1448 = pneg %p1447
  %1450 = shalt.err (%p1448)
  %s1451 = scalar_lea.sflag [#allocation3], 6
  %1452 = vsyncmov %s1451
  %s1453 = vpop.sfrf %1452
  %p1454 = scmp.eq.s32.totalorder %s1453, 0
  %p1455 = pneg %p1454
  %1457 = shalt.err (%p1455)
  %s1458 = scalar_lea.sflag [#allocation3], 7
  %1459 = vsyncmov %s1458
  %s1460 = vpop.sfrf %1459
  %p1461 = scmp.eq.s32.totalorder %s1460, 0
  %p1462 = pneg %p1461
  %1464 = shalt.err (%p1462)
  %s1465 = scalar_lea.sflag [#allocation3], 8
  %1466 = vsyncmov %s1465
  %s1467 = vpop.sfrf %1466
  %p1468 = scmp.eq.s32.totalorder %s1467, 0
  %p1469 = pneg %p1468
  %1471 = shalt.err (%p1469)
  %s1472 = scalar_lea.sflag [#allocation3], 9
  %1473 = vsyncmov %s1472
  %s1474 = vpop.sfrf %1473
  %p1475 = scmp.eq.s32.totalorder %s1474, 0
  %p1476 = pneg %p1475
  %1478 = shalt.err (%p1476)
  %s1479 = scalar_lea.sflag [#allocation3], 10
  %1480 = vsyncmov %s1479
  %s1481 = vpop.sfrf %1480
  %p1482 = scmp.eq.s32.totalorder %s1481, 0
  %p1483 = pneg %p1482
  %1485 = shalt.err (%p1483)
  %s1486 = scalar_lea.sflag [#allocation3], 11
  %1487 = vsyncmov %s1486
  %s1488 = vpop.sfrf %1487
  %p1489 = scmp.eq.s32.totalorder %s1488, 0
  %p1490 = pneg %p1489
  %1492 = shalt.err (%p1490)
  %s1493 = scalar_lea.sflag [#allocation3], 12
  %1494 = vsyncmov %s1493
  %s1495 = vpop.sfrf %1494
  %p1496 = scmp.eq.s32.totalorder %s1495, 0
  %p1497 = pneg %p1496
  %1499 = shalt.err (%p1497)
  %s1500 = scalar_lea.sflag [#allocation3], 13
  %1501 = vsyncmov %s1500
  %s1502 = vpop.sfrf %1501
  %p1503 = scmp.eq.s32.totalorder %s1502, 0
  %p1504 = pneg %p1503
  %1506 = shalt.err (%p1504)
  %s1507 = scalar_lea.sflag [#allocation3], 14
  %1508 = vsyncmov %s1507
  %s1509 = vpop.sfrf %1508
  %p1510 = scmp.eq.s32.totalorder %s1509, 0
  %p1511 = pneg %p1510
  %1513 = shalt.err (%p1511)
  %s1514 = scalar_lea.sflag [#allocation3], 15
  %1515 = vsyncmov %s1514
  %s1516 = vpop.sfrf %1515
  %p1517 = scmp.eq.s32.totalorder %s1516, 0
  %p1518 = pneg %p1517
  %1520 = shalt.err (%p1518)
  %s1521 = scalar_lea.sflag [#allocation3], 16
  %1522 = vsyncmov %s1521
  %s1523 = vpop.sfrf %1522
  %p1524 = scmp.eq.s32.totalorder %s1523, 0
  %p1525 = pneg %p1524
  %1527 = shalt.err (%p1525)
  %s1528 = scalar_lea.sflag [#allocation3], 17
  %1529 = vsyncmov %s1528
  %s1530 = vpop.sfrf %1529
  %p1531 = scmp.eq.s32.totalorder %s1530, 0
  %p1532 = pneg %p1531
  %1534 = shalt.err (%p1532)
  %s1535 = scalar_lea.sflag [#allocation3], 18
  %1536 = vsyncmov %s1535
  %s1537 = vpop.sfrf %1536
  %p1538 = scmp.eq.s32.totalorder %s1537, 0
  %p1539 = pneg %p1538
  %1541 = shalt.err (%p1539)
  %s1542 = scalar_lea.sflag [#allocation3], 19
  %1543 = vsyncmov %s1542
  %s1544 = vpop.sfrf %1543
  %p1545 = scmp.eq.s32.totalorder %s1544, 0
  %p1546 = pneg %p1545
  %1548 = shalt.err (%p1546)
  %s1549 = scalar_lea.sflag [#allocation3], 20
  %1550 = vsyncmov %s1549
  %s1551 = vpop.sfrf %1550
  %p1552 = scmp.eq.s32.totalorder %s1551, 0
  %p1553 = pneg %p1552
  %1555 = shalt.err (%p1553)
  %s1556 = scalar_lea.sflag [#allocation3], 21
  %1557 = vsyncmov %s1556
  %s1558 = vpop.sfrf %1557
  %p1559 = scmp.eq.s32.totalorder %s1558, 0
  %p1560 = pneg %p1559
  %1562 = shalt.err (%p1560)
  %s1563 = scalar_lea.sflag [#allocation3], 22
  %1564 = vsyncmov %s1563
  %s1565 = vpop.sfrf %1564
  %p1566 = scmp.eq.s32.totalorder %s1565, 0
  %p1567 = pneg %p1566
  %1569 = shalt.err (%p1567)
  %s1570 = scalar_lea.sflag [#allocation3], 23
  %1571 = vsyncmov %s1570
  %s1572 = vpop.sfrf %1571
  %p1573 = scmp.eq.s32.totalorder %s1572, 0
  %p1574 = pneg %p1573
  %1576 = shalt.err (%p1574)
  %s1577 = scalar_lea.sflag [#allocation3], 24
  %1578 = vsyncmov %s1577
  %s1579 = vpop.sfrf %1578
  %p1580 = scmp.eq.s32.totalorder %s1579, 0
  %p1581 = pneg %p1580
  %1583 = shalt.err (%p1581)
  %s1584 = scalar_lea.sflag [#allocation3], 25
  %1585 = vsyncmov %s1584
  %s1586 = vpop.sfrf %1585
  %p1587 = scmp.eq.s32.totalorder %s1586, 0
  %p1588 = pneg %p1587
  %1590 = shalt.err (%p1588)
  %s1591 = scalar_lea.sflag [#allocation3], 26
  %1592 = vsyncmov %s1591
  %s1593 = vpop.sfrf %1592
  %p1594 = scmp.eq.s32.totalorder %s1593, 0
  %p1595 = pneg %p1594
  %1597 = shalt.err (%p1595)
  %s1598 = scalar_lea.sflag [#allocation3], 27
  %1599 = vsyncmov %s1598
  %s1600 = vpop.sfrf %1599
  %p1601 = scmp.eq.s32.totalorder %s1600, 0
  %p1602 = pneg %p1601
  %1604 = shalt.err (%p1602)
  %s1605 = scalar_lea.sflag [#allocation3], 28
  %1606 = vsyncmov %s1605
  %s1607 = vpop.sfrf %1606
  %p1608 = scmp.eq.s32.totalorder %s1607, 0
  %p1609 = pneg %p1608
  %1611 = shalt.err (%p1609)
  %s1612 = scalar_lea.sflag [#allocation3], 29
  %1613 = vsyncmov %s1612
  %s1614 = vpop.sfrf %1613
  %p1615 = scmp.eq.s32.totalorder %s1614, 0
  %p1616 = pneg %p1615
  %1618 = shalt.err (%p1616)
  %s1619 = scalar_lea.sflag [#allocation3], 30
  %1620 = vsyncmov %s1619
  %s1621 = vpop.sfrf %1620
  %p1622 = scmp.eq.s32.totalorder %s1621, 0
  %p1623 = pneg %p1622
  %1625 = shalt.err (%p1623)
  %s1626 = scalar_lea.sflag [#allocation3], 31
  %1627 = vsyncmov %s1626
  %s1628 = vpop.sfrf %1627
  %p1629 = scmp.eq.s32.totalorder %s1628, 0
  %p1630 = pneg %p1629
  %1632 = shalt.err (%p1630)

</llo_original>
